<compile_context>
chip_gen: v7x
topology: tpu7x:2x2x1
jax: 0.10.0
libtpu: 0.0.40
codegen_flags: <defaults>
</compile_context>

<pallas_src>
import functools

import jax
import jax.numpy as jnp
from jax.experimental import pallas as pl
from jax.experimental.pallas import tpu as pltpu

IN_DIM = 4096
HIDDEN = 128


def _ae_kernel(x_ref, w1_ref, b1_ref, w2_ref, b2_ref, o_ref):
    # Encoder: Linear(4096 -> 128) + ReLU (dropout = identity, eval mode).
    # bf16 operands, f32 accumulation on the MXU.
    x = x_ref[...].astype(jnp.bfloat16)
    h = jnp.dot(x, w1_ref[...], preferred_element_type=jnp.float32)
    h = jnp.maximum(h + b1_ref[...], 0.0)     # b1_ref is (1, 128), broadcasts; f32 VPU
    # Decoder: Linear(128 -> 4096)
    y = jnp.dot(h.astype(jnp.bfloat16), w2_ref[...],
                preferred_element_type=jnp.float32)
    o_ref[...] = (y + b2_ref[...]).astype(o_ref.dtype)


def _round_up(v, m):
    return ((v + m - 1) // m) * m


def _pick_target_and_vmem():
    """Generation-aware batch-tile target and scoped-VMEM limit."""
    tb_target, vmem_limit = 512, 56 << 20            # v7x: 64 MiB VMEM per TC
    try:
        info = pltpu.get_tpu_info()
        if getattr(info, "vmem_capacity_bytes", 0) >= (100 << 20):
            tb_target, vmem_limit = 1024, 112 << 20  # v5e / v6e: 128 MiB VMEM
    except Exception:
        pass
    return tb_target, vmem_limit


def _choose_tb(batch, tb_target):
    """Batch tile: multiple of 8, <= target, and (when B >= 16) small enough that
    the grid has >= 2 steps — pipeline overlap + both v7x TensorCores."""
    b8 = _round_up(max(batch, 1), 8)
    cap = _round_up((b8 + 1) // 2, 8) if b8 >= 16 else b8
    return min(tb_target, cap)


def _resident_spec(shape):
    """VMEM-resident operand (constant index_map); single-buffered — there is
    nothing to prefetch, so skip the default double buffer."""
    idx = lambda i: (0, 0)
    try:
        return pl.BlockSpec(shape, idx, pipeline_mode=pl.Buffered(1))
    except TypeError:  # older jax without pipeline_mode on BlockSpec
        return pl.BlockSpec(shape, idx)


@functools.partial(jax.jit, static_argnames=("out_dtype",))
def autoencoder_forward(x, w1, b1, w2, b2, out_dtype=None):
    """x: [B, 4096] -> [B, 4096].

    out_dtype defaults to x.dtype.  Pass jnp.bfloat16 (and/or feed x already in
    bf16) only if the surrounding model tolerates bf16 activations — it cuts the
    dominant HBM traffic of this bandwidth-bound kernel.
    """
    B = x.shape[0]
    out_dtype = x.dtype if out_dtype is None else out_dtype

    tb_target, vmem_limit = _pick_target_and_vmem()
    TB = _choose_tb(B, tb_target)
    grid = (pl.cdiv(B, TB),)   # no pad / slice: tail rows masked at the boundary block

    # bf16 weights: halves HBM weight bytes; MXU accumulates in f32.
    w1_bf = w1.astype(jnp.bfloat16)
    w2_bf = w2.astype(jnp.bfloat16)
    b1_2d = b1.reshape(1, HIDDEN).astype(jnp.float32)
    b2_2d = b2.reshape(1, IN_DIM).astype(jnp.float32)

    x_bytes = jnp.dtype(x.dtype).itemsize
    o_bytes = jnp.dtype(out_dtype).itemsize
    flops = 2 * B * IN_DIM * HIDDEN * 2                     # two matmuls
    bytes_accessed = (B * IN_DIM * (x_bytes + o_bytes)      # x in + out
                      + 2 * IN_DIM * HIDDEN * 2             # W1 + W2 (bf16)
                      + (HIDDEN + IN_DIM) * 4)              # biases (f32)

    out = pl.pallas_call(
        _ae_kernel,
        out_shape=jax.ShapeDtypeStruct((B, IN_DIM), out_dtype),
        grid_spec=pl.GridSpec(
            grid=grid,
            in_specs=[
                pl.BlockSpec((TB, IN_DIM), lambda i: (i, 0)),   # x (batch-streamed)
                _resident_spec((IN_DIM, HIDDEN)),               # W1 (resident)
                _resident_spec((1, HIDDEN)),                    # b1 (resident)
                _resident_spec((HIDDEN, IN_DIM)),               # W2 (resident)
                _resident_spec((1, IN_DIM)),                    # b2 (resident)
            ],
            out_specs=pl.BlockSpec((TB, IN_DIM), lambda i: (i, 0)),
        ),
        compiler_params=pltpu.CompilerParams(
            dimension_semantics=("parallel",),   # row-independent tiles; v7x 2-TC split
            vmem_limit_bytes=vmem_limit,
        ),
        cost_estimate=pl.CostEstimate(
            flops=flops, transcendentals=0, bytes_accessed=bytes_accessed),
    )(x, w1_bf, b1_2d, w2_bf, b2_2d)

    return out


def init_params(key):
    """Deterministic init mimicking PyTorch nn.Linear default (U(-k, k), k=1/sqrt(fan_in))."""
    k1, k2, k3, k4 = jax.random.split(key, 4)
    bound1 = 1.0 / (IN_DIM ** 0.5)
    bound2 = 1.0 / (HIDDEN ** 0.5)
    # Stored as [in_features, out_features] (transpose of PyTorch's weight layout).
    w1 = jax.random.uniform(k1, (IN_DIM, HIDDEN), jnp.float32, -bound1, bound1)
    b1 = jax.random.uniform(k2, (HIDDEN,), jnp.float32, -bound1, bound1)
    w2 = jax.random.uniform(k3, (HIDDEN, IN_DIM), jnp.float32, -bound2, bound2)
    b2 = jax.random.uniform(k4, (IN_DIM,), jnp.float32, -bound2, bound2)
    return w1, b1, w2, b2


def reference_forward(x, w1, b1, w2, b2):
    """Pure-JAX reference using the same bf16 operand rounding as the kernel."""
    xb = x.astype(jnp.bfloat16).astype(jnp.float32)
    w1b = w1.astype(jnp.bfloat16).astype(jnp.float32)
    w2b = w2.astype(jnp.bfloat16).astype(jnp.float32)
    h = jnp.maximum(xb @ w1b + b1, 0.0)
    hb = h.astype(jnp.bfloat16).astype(jnp.float32)
    return hb @ w2b + b2


if __name__ == "__main__":
    key = jax.random.PRNGKey(0)
    pkey, xkey = jax.random.split(key)
    w1, b1, w2, b2 = init_params(pkey)

    B = 2   # not a multiple of the 8-row sublane tile: exercises boundary masking
    x = jax.random.normal(xkey, (B, IN_DIM), jnp.float32)

    out = autoencoder_forward(x, w1, b1, w2, b2)
    out = jax.block_until_ready(out)

    ref = reference_forward(x, w1, b1, w2, b2)
    assert out.shape == (B, IN_DIM)
    assert out.dtype == x.dtype
    assert jnp.allclose(out, ref, atol=2e-2, rtol=2e-2), "mismatch vs reference"

    print("KERNEL_OK")
</pallas_src>

<mosaic_0001>
module attributes {stable_mosaic.version = 11 : i64} {
  func.func @_ae_kernel(%arg0: i32, %arg1: memref<8x4096xf32, #tpu.memory_space<vmem>>, %arg2: memref<4096x128xbf16, #tpu.memory_space<vmem>>, %arg3: memref<1x128xf32, #tpu.memory_space<vmem>>, %arg4: memref<128x4096xbf16, #tpu.memory_space<vmem>>, %arg5: memref<1x4096xf32, #tpu.memory_space<vmem>>, %arg6: memref<8x4096xf32, #tpu.memory_space<vmem>>) attributes {dimension_semantics = [#tpu.dimension_semantics<parallel>], iteration_bounds = array<i64: 1>, scalar_prefetch = 0 : i64, scratch_operands = 0 : i64, tpu.core_type = #tpu.core_type<tc>, window_params = [{transform_indices = @transform_0, window_bounds = array<i64: 8, 4096>}, {pipeline_mode = #tpu.pipeline_mode<synchronous>, transform_indices = @transform_1, window_bounds = array<i64: 4096, 128>}, {pipeline_mode = #tpu.pipeline_mode<synchronous>, transform_indices = @transform_2, window_bounds = array<i64: 1, 128>}, {pipeline_mode = #tpu.pipeline_mode<synchronous>, transform_indices = @transform_3, window_bounds = array<i64: 128, 4096>}, {pipeline_mode = #tpu.pipeline_mode<synchronous>, transform_indices = @transform_4, window_bounds = array<i64: 1, 4096>}, {transform_indices = @transform_5, window_bounds = array<i64: 8, 4096>}]} {
    %c0 = arith.constant 0 : index
    %c0_0 = arith.constant 0 : index
    %0 = vector.load %arg1[%c0, %c0_0] : memref<8x4096xf32, #tpu.memory_space<vmem>>, vector<8x4096xf32>
    %1 = arith.truncf %0 : vector<8x4096xf32> to vector<8x4096xbf16>
    %c0_1 = arith.constant 0 : index
    %c0_2 = arith.constant 0 : index
    %2 = vector.load %arg2[%c0_1, %c0_2] : memref<4096x128xbf16, #tpu.memory_space<vmem>>, vector<4096x128xbf16>
    %cst = arith.constant dense<0.000000e+00> : vector<8x128xf32>
    %3 = tpu.matmul %1, %2, %cst {dimension_numbers = #tpu.dot_dimension_numbers<[1], [0], [0], [1], [0, 0, 1, 1], [], []>} : vector<8x4096xbf16>, vector<4096x128xbf16>, vector<8x128xf32> -> vector<8x128xf32>
    %c0_3 = arith.constant 0 : index
    %c0_4 = arith.constant 0 : index
    %4 = vector.load %arg3[%c0_3, %c0_4] : memref<1x128xf32, #tpu.memory_space<vmem>>, vector<1x128xf32>
    %5 = vector.broadcast %4 : vector<1x128xf32> to vector<8x128xf32>
    %6 = arith.addf %3, %5 : vector<8x128xf32>
    %cst_5 = arith.constant 0.000000e+00 : f32
    %7 = vector.broadcast %cst_5 : f32 to vector<8x128xf32>
    %8 = arith.maximumf %6, %7 : vector<8x128xf32>
    %9 = arith.truncf %8 : vector<8x128xf32> to vector<8x128xbf16>
    %c0_6 = arith.constant 0 : index
    %c0_7 = arith.constant 0 : index
    %10 = vector.load %arg4[%c0_6, %c0_7] : memref<128x4096xbf16, #tpu.memory_space<vmem>>, vector<128x4096xbf16>
    %cst_8 = arith.constant dense<0.000000e+00> : vector<8x4096xf32>
    %11 = tpu.matmul %9, %10, %cst_8 {dimension_numbers = #tpu.dot_dimension_numbers<[1], [0], [0], [1], [0, 0, 1, 1], [], []>} : vector<8x128xbf16>, vector<128x4096xbf16>, vector<8x4096xf32> -> vector<8x4096xf32>
    %c0_9 = arith.constant 0 : index
    %c0_10 = arith.constant 0 : index
    %12 = vector.load %arg5[%c0_9, %c0_10] : memref<1x4096xf32, #tpu.memory_space<vmem>>, vector<1x4096xf32>
    %13 = vector.broadcast %12 : vector<1x4096xf32> to vector<8x4096xf32>
    %14 = arith.addf %11, %13 : vector<8x4096xf32>
    %c0_11 = arith.constant 0 : index
    %c0_12 = arith.constant 0 : index
    %15 = vector.load %arg6[%c0_11, %c0_12] : memref<8x4096xf32, #tpu.memory_space<vmem>>, vector<8x4096xf32>
    tpu.vector_store %arg6[%c0_11, %c0_12], %14 {strides = array<i32>} : memref<8x4096xf32, #tpu.memory_space<vmem>>, vector<8x4096xf32>,
    return
  }
  func.func @transform_0(%arg0: i32) -> (i32, i32) {
    %c0_i32 = arith.constant 0 : i32
    %c0_i32_0 = arith.constant 0 : i32
    return %arg0, %c0_i32 : i32, i32
  }
  func.func @transform_1(%arg0: i32) -> (i32, i32) {
    %c0_i32 = arith.constant 0 : i32
    %c0_i32_0 = arith.constant 0 : i32
    %c0_i32_1 = arith.constant 0 : i32
    return %c0_i32, %c0_i32_0 : i32, i32
  }
  func.func @transform_2(%arg0: i32) -> (i32, i32) {
    %c0_i32 = arith.constant 0 : i32
    %c0_i32_0 = arith.constant 0 : i32
    %c0_i32_1 = arith.constant 0 : i32
    return %c0_i32, %c0_i32_0 : i32, i32
  }
  func.func @transform_3(%arg0: i32) -> (i32, i32) {
    %c0_i32 = arith.constant 0 : i32
    %c0_i32_0 = arith.constant 0 : i32
    %c0_i32_1 = arith.constant 0 : i32
    return %c0_i32, %c0_i32_0 : i32, i32
  }
  func.func @transform_4(%arg0: i32) -> (i32, i32) {
    %c0_i32 = arith.constant 0 : i32
    %c0_i32_0 = arith.constant 0 : i32
    %c0_i32_1 = arith.constant 0 : i32
    return %c0_i32, %c0_i32_0 : i32, i32
  }
  func.func @transform_5(%arg0: i32) -> (i32, i32) {
    %c0_i32 = arith.constant 0 : i32
    %c0_i32_0 = arith.constant 0 : i32
    return %arg0, %c0_i32 : i32, i32
  }
}

</mosaic_0001>

<llo_original>
// kernel: autoencoder_forward.1
$region0: #{autoencoder_forward.1}
  #allocation0 [shape = 'u32[]', space=smem, size = 0x4, offset = 0x4, fixed_abs, tag = 'smem constant byte address 0x4 - core index']
  #allocation1 [shape = 'u32[144,128]{1,0:T(1,128)}', space=vmem, size = 0x12000, scoped, tag = 'internal scratch']
  %s0 = inlined_call_operand.vmem [shape: f32[2,4096], index: 0, kind: input, shape index: {}]
  %s1 = inlined_call_operand.vmem [shape: bf16[4096,128], index: 1, kind: input, shape index: {}]
  %s2 = inlined_call_operand.vmem [shape: f32[1,128], index: 2, kind: input, shape index: {}]
  %s3 = inlined_call_operand.vmem [shape: bf16[128,4096], index: 3, kind: input, shape index: {}]
  %s4 = inlined_call_operand.vmem [shape: f32[1,4096], index: 4, kind: input, shape index: {}]
  %s5 = inlined_call_operand.hbm [shape: f32[2,4096], index: 5, kind: output, shape index: {}]
  %s6 = sld [smem:[#allocation0]]
  $region30: #{autoencoder_forward.1} parent=0
    _
  %s8 = ssub.s32 1, %s6
  %s9 = scalar_select 0, %s8, %s6
  $region1: #{autoencoder_forward.1} parent=0
    #allocation2 [shape = 'u8[131072]{0}', space=vmem, size = 0x20000, scoped, tag = 'output window, operand 0, single buffered']
    #allocation3 [shape = 's32[1]{0}', space=sflag, size = 0x4, scoped, tag = 'scoped memory for autoencoder_forward.1']
    %10 = vsyncpa [#allocation3], 0
    // Predicated region
    $region2: #{autoencoder_forward.1} parent=1 // pred_check
      _
    $region3: #{autoencoder_forward.1} parent=1 // pred_check_branch
      %12 = sbr.rel (0) target = $region5
    $region4: #{autoencoder_forward.1} parent=1 // pred_region
      _
    $region5: #{autoencoder_forward.1} parent=1 // pred_fallthru
      _
    // Predicated region
    $region6: #{autoencoder_forward.1} parent=1 // pred_check
      _
    $region7: #{autoencoder_forward.1} parent=1 // pred_check_branch
      %14 = sbr.rel (0) target = $region9
    $region8: #{autoencoder_forward.1} parent=1 // pred_region
      _
    $region9: #{autoencoder_forward.1} parent=1 // pred_fallthru
      _
    // Predicated region
    $region10: #{autoencoder_forward.1} parent=1 // pred_check
      _
    $region11: #{autoencoder_forward.1} parent=1 // pred_check_branch
      %16 = sbr.rel (0) target = $region13
    $region12: #{autoencoder_forward.1} parent=1 // pred_region
      _
    $region13: #{autoencoder_forward.1} parent=1 // pred_fallthru
      _
    // Predicated region
    $region14: #{autoencoder_forward.1} parent=1 // pred_check
      _
    $region15: #{autoencoder_forward.1} parent=1 // pred_check_branch
      %18 = sbr.rel (0) target = $region17
    $region16: #{autoencoder_forward.1} parent=1 // pred_region
      _
    $region17: #{autoencoder_forward.1} parent=1 // pred_fallthru
      _
    // Predicated region
    $region18: #{autoencoder_forward.1} parent=1 // pred_check
      _
    $region19: #{autoencoder_forward.1} parent=1 // pred_check_branch
      %20 = sbr.rel (0) target = $region21
    $region20: #{autoencoder_forward.1} parent=1 // pred_region
      _
    $region21: #{autoencoder_forward.1} parent=1 // pred_fallthru
      _
    %v22 = vld [vmem:[%s0] sm:$0xff]
    %v23 = vld [vmem:[%s0 + $0x8] sm:$0xff]
    %v24 = vld [vmem:[%s0 + $0x10] sm:$0xff]
    %v25 = vld [vmem:[%s0 + $0x18] sm:$0xff]
    %v26 = vld [vmem:[%s0 + $0x20] sm:$0xff]
    %v27 = vld [vmem:[%s0 + $0x28] sm:$0xff]
    %v28 = vld [vmem:[%s0 + $0x30] sm:$0xff]
    %v29 = vld [vmem:[%s0 + $0x38] sm:$0xff]
    %v30 = vld [vmem:[%s0 + $0x40] sm:$0xff]
    %v31 = vld [vmem:[%s0 + $0x48] sm:$0xff]
    %v32 = vld [vmem:[%s0 + $0x50] sm:$0xff]
    %v33 = vld [vmem:[%s0 + $0x58] sm:$0xff]
    %v34 = vld [vmem:[%s0 + $0x60] sm:$0xff]
    %v35 = vld [vmem:[%s0 + $0x68] sm:$0xff]
    %v36 = vld [vmem:[%s0 + $0x70] sm:$0xff]
    %v37 = vld [vmem:[%s0 + $0x78] sm:$0xff]
    %v38 = vld [vmem:[%s0 + $0x80] sm:$0xff]
    %v39 = vld [vmem:[%s0 + $0x88] sm:$0xff]
    %v40 = vld [vmem:[%s0 + $0x90] sm:$0xff]
    %v41 = vld [vmem:[%s0 + $0x98] sm:$0xff]
    %v42 = vld [vmem:[%s0 + $0xa0] sm:$0xff]
    %v43 = vld [vmem:[%s0 + $0xa8] sm:$0xff]
    %v44 = vld [vmem:[%s0 + $0xb0] sm:$0xff]
    %v45 = vld [vmem:[%s0 + $0xb8] sm:$0xff]
    %v46 = vld [vmem:[%s0 + $0xc0] sm:$0xff]
    %v47 = vld [vmem:[%s0 + $0xc8] sm:$0xff]
    %v48 = vld [vmem:[%s0 + $0xd0] sm:$0xff]
    %v49 = vld [vmem:[%s0 + $0xd8] sm:$0xff]
    %v50 = vld [vmem:[%s0 + $0xe0] sm:$0xff]
    %v51 = vld [vmem:[%s0 + $0xe8] sm:$0xff]
    %v52 = vld [vmem:[%s0 + $0xf0] sm:$0xff]
    %v53 = vld [vmem:[%s0 + $0xf8] sm:$0xff]
    %v86 = vcombine.low %v22, %v30
    %v87 = vcombine.high %v22, %v30
    %v88 = vcombine.low %v38, %v46
    %v89 = vcombine.high %v38, %v46
    %v91 = vunpack.c.l.s4 1983009808
    %v92 = vunpack.c.0.s8 %v91
    %v93 = vlaneseq
    %v94 = vshrl.u32 %v93, 7
    %v95 = vsub.s32 %v92, %v94
    %v96 = vrot.slane %v86, %v95
    %v98 = vunpack.c.l.s4 1983009808
    %v99 = vunpack.c.0.s8 %v98
    %v100 = vlaneseq
    %v101 = vshrl.u32 %v100, 7
    %v102 = vsub.s32 %v99, %v101
    %v103 = vrot.slane %v87, %v102
    %v105 = vunpack.c.l.s4 1983009808
    %v106 = vunpack.c.0.s8 %v105
    %v107 = vlaneseq
    %v108 = vshrl.u32 %v107, 7
    %v109 = vsub.s32 %v106, %v108
    %v110 = vrot.slane %v88, %v109
    %v112 = vunpack.c.l.s4 1983009808
    %v113 = vunpack.c.0.s8 %v112
    %v114 = vlaneseq
    %v115 = vshrl.u32 %v114, 7
    %v116 = vsub.s32 %v113, %v115
    %v117 = vrot.slane %v89, %v116
    %v118 = vcombine.low %v96, %v110
    %v119 = vcombine.high %v96, %v110
    %v120 = vcombine.low %v103, %v117
    %v121 = vcombine.high %v103, %v117
    %v122 = vcombine.low %v23, %v31
    %v123 = vcombine.high %v23, %v31
    %v124 = vcombine.low %v39, %v47
    %v125 = vcombine.high %v39, %v47
    %v127 = vunpack.c.l.s4 1983009808
    %v128 = vunpack.c.0.s8 %v127
    %v129 = vlaneseq
    %v130 = vshrl.u32 %v129, 7
    %v131 = vsub.s32 %v128, %v130
    %v132 = vrot.slane %v122, %v131
    %v134 = vunpack.c.l.s4 1983009808
    %v135 = vunpack.c.0.s8 %v134
    %v136 = vlaneseq
    %v137 = vshrl.u32 %v136, 7
    %v138 = vsub.s32 %v135, %v137
    %v139 = vrot.slane %v123, %v138
    %v141 = vunpack.c.l.s4 1983009808
    %v142 = vunpack.c.0.s8 %v141
    %v143 = vlaneseq
    %v144 = vshrl.u32 %v143, 7
    %v145 = vsub.s32 %v142, %v144
    %v146 = vrot.slane %v124, %v145
    %v148 = vunpack.c.l.s4 1983009808
    %v149 = vunpack.c.0.s8 %v148
    %v150 = vlaneseq
    %v151 = vshrl.u32 %v150, 7
    %v152 = vsub.s32 %v149, %v151
    %v153 = vrot.slane %v125, %v152
    %v154 = vcombine.low %v132, %v146
    %v155 = vcombine.high %v132, %v146
    %v156 = vcombine.low %v139, %v153
    %v157 = vcombine.high %v139, %v153
    %v158 = vcombine.low %v24, %v32
    %v159 = vcombine.high %v24, %v32
    %v160 = vcombine.low %v40, %v48
    %v161 = vcombine.high %v40, %v48
    %v163 = vunpack.c.l.s4 1983009808
    %v164 = vunpack.c.0.s8 %v163
    %v165 = vlaneseq
    %v166 = vshrl.u32 %v165, 7
    %v167 = vsub.s32 %v164, %v166
    %v168 = vrot.slane %v158, %v167
    %v170 = vunpack.c.l.s4 1983009808
    %v171 = vunpack.c.0.s8 %v170
    %v172 = vlaneseq
    %v173 = vshrl.u32 %v172, 7
    %v174 = vsub.s32 %v171, %v173
    %v175 = vrot.slane %v159, %v174
    %v177 = vunpack.c.l.s4 1983009808
    %v178 = vunpack.c.0.s8 %v177
    %v179 = vlaneseq
    %v180 = vshrl.u32 %v179, 7
    %v181 = vsub.s32 %v178, %v180
    %v182 = vrot.slane %v160, %v181
    %v184 = vunpack.c.l.s4 1983009808
    %v185 = vunpack.c.0.s8 %v184
    %v186 = vlaneseq
    %v187 = vshrl.u32 %v186, 7
    %v188 = vsub.s32 %v185, %v187
    %v189 = vrot.slane %v161, %v188
    %v190 = vcombine.low %v168, %v182
    %v191 = vcombine.high %v168, %v182
    %v192 = vcombine.low %v175, %v189
    %v193 = vcombine.high %v175, %v189
    %v194 = vcombine.low %v25, %v33
    %v195 = vcombine.high %v25, %v33
    %v196 = vcombine.low %v41, %v49
    %v197 = vcombine.high %v41, %v49
    %v199 = vunpack.c.l.s4 1983009808
    %v200 = vunpack.c.0.s8 %v199
    %v201 = vlaneseq
    %v202 = vshrl.u32 %v201, 7
    %v203 = vsub.s32 %v200, %v202
    %v204 = vrot.slane %v194, %v203
    %v206 = vunpack.c.l.s4 1983009808
    %v207 = vunpack.c.0.s8 %v206
    %v208 = vlaneseq
    %v209 = vshrl.u32 %v208, 7
    %v210 = vsub.s32 %v207, %v209
    %v211 = vrot.slane %v195, %v210
    %v213 = vunpack.c.l.s4 1983009808
    %v214 = vunpack.c.0.s8 %v213
    %v215 = vlaneseq
    %v216 = vshrl.u32 %v215, 7
    %v217 = vsub.s32 %v214, %v216
    %v218 = vrot.slane %v196, %v217
    %v220 = vunpack.c.l.s4 1983009808
    %v221 = vunpack.c.0.s8 %v220
    %v222 = vlaneseq
    %v223 = vshrl.u32 %v222, 7
    %v224 = vsub.s32 %v221, %v223
    %v225 = vrot.slane %v197, %v224
    %v226 = vcombine.low %v204, %v218
    %v227 = vcombine.high %v204, %v218
    %v228 = vcombine.low %v211, %v225
    %v229 = vcombine.high %v211, %v225
    %v230 = vcombine.low %v26, %v34
    %v231 = vcombine.high %v26, %v34
    %v232 = vcombine.low %v42, %v50
    %v233 = vcombine.high %v42, %v50
    %v235 = vunpack.c.l.s4 1983009808
    %v236 = vunpack.c.0.s8 %v235
    %v237 = vlaneseq
    %v238 = vshrl.u32 %v237, 7
    %v239 = vsub.s32 %v236, %v238
    %v240 = vrot.slane %v230, %v239
    %v242 = vunpack.c.l.s4 1983009808
    %v243 = vunpack.c.0.s8 %v242
    %v244 = vlaneseq
    %v245 = vshrl.u32 %v244, 7
    %v246 = vsub.s32 %v243, %v245
    %v247 = vrot.slane %v231, %v246
    %v249 = vunpack.c.l.s4 1983009808
    %v250 = vunpack.c.0.s8 %v249
    %v251 = vlaneseq
    %v252 = vshrl.u32 %v251, 7
    %v253 = vsub.s32 %v250, %v252
    %v254 = vrot.slane %v232, %v253
    %v256 = vunpack.c.l.s4 1983009808
    %v257 = vunpack.c.0.s8 %v256
    %v258 = vlaneseq
    %v259 = vshrl.u32 %v258, 7
    %v260 = vsub.s32 %v257, %v259
    %v261 = vrot.slane %v233, %v260
    %v262 = vcombine.low %v240, %v254
    %v263 = vcombine.high %v240, %v254
    %v264 = vcombine.low %v247, %v261
    %v265 = vcombine.high %v247, %v261
    %v266 = vcombine.low %v27, %v35
    %v267 = vcombine.high %v27, %v35
    %v268 = vcombine.low %v43, %v51
    %v269 = vcombine.high %v43, %v51
    %v271 = vunpack.c.l.s4 1983009808
    %v272 = vunpack.c.0.s8 %v271
    %v273 = vlaneseq
    %v274 = vshrl.u32 %v273, 7
    %v275 = vsub.s32 %v272, %v274
    %v276 = vrot.slane %v266, %v275
    %v278 = vunpack.c.l.s4 1983009808
    %v279 = vunpack.c.0.s8 %v278
    %v280 = vlaneseq
    %v281 = vshrl.u32 %v280, 7
    %v282 = vsub.s32 %v279, %v281
    %v283 = vrot.slane %v267, %v282
    %v285 = vunpack.c.l.s4 1983009808
    %v286 = vunpack.c.0.s8 %v285
    %v287 = vlaneseq
    %v288 = vshrl.u32 %v287, 7
    %v289 = vsub.s32 %v286, %v288
    %v290 = vrot.slane %v268, %v289
    %v292 = vunpack.c.l.s4 1983009808
    %v293 = vunpack.c.0.s8 %v292
    %v294 = vlaneseq
    %v295 = vshrl.u32 %v294, 7
    %v296 = vsub.s32 %v293, %v295
    %v297 = vrot.slane %v269, %v296
    %v298 = vcombine.low %v276, %v290
    %v299 = vcombine.high %v276, %v290
    %v300 = vcombine.low %v283, %v297
    %v301 = vcombine.high %v283, %v297
    %v302 = vcombine.low %v28, %v36
    %v303 = vcombine.high %v28, %v36
    %v304 = vcombine.low %v44, %v52
    %v305 = vcombine.high %v44, %v52
    %v307 = vunpack.c.l.s4 1983009808
    %v308 = vunpack.c.0.s8 %v307
    %v309 = vlaneseq
    %v310 = vshrl.u32 %v309, 7
    %v311 = vsub.s32 %v308, %v310
    %v312 = vrot.slane %v302, %v311
    %v314 = vunpack.c.l.s4 1983009808
    %v315 = vunpack.c.0.s8 %v314
    %v316 = vlaneseq
    %v317 = vshrl.u32 %v316, 7
    %v318 = vsub.s32 %v315, %v317
    %v319 = vrot.slane %v303, %v318
    %v321 = vunpack.c.l.s4 1983009808
    %v322 = vunpack.c.0.s8 %v321
    %v323 = vlaneseq
    %v324 = vshrl.u32 %v323, 7
    %v325 = vsub.s32 %v322, %v324
    %v326 = vrot.slane %v304, %v325
    %v328 = vunpack.c.l.s4 1983009808
    %v329 = vunpack.c.0.s8 %v328
    %v330 = vlaneseq
    %v331 = vshrl.u32 %v330, 7
    %v332 = vsub.s32 %v329, %v331
    %v333 = vrot.slane %v305, %v332
    %v334 = vcombine.low %v312, %v326
    %v335 = vcombine.high %v312, %v326
    %v336 = vcombine.low %v319, %v333
    %v337 = vcombine.high %v319, %v333
    %v338 = vcombine.low %v29, %v37
    %v339 = vcombine.high %v29, %v37
    %v340 = vcombine.low %v45, %v53
    %v341 = vcombine.high %v45, %v53
    %v343 = vunpack.c.l.s4 1983009808
    %v344 = vunpack.c.0.s8 %v343
    %v345 = vlaneseq
    %v346 = vshrl.u32 %v345, 7
    %v347 = vsub.s32 %v344, %v346
    %v348 = vrot.slane %v338, %v347
    %v350 = vunpack.c.l.s4 1983009808
    %v351 = vunpack.c.0.s8 %v350
    %v352 = vlaneseq
    %v353 = vshrl.u32 %v352, 7
    %v354 = vsub.s32 %v351, %v353
    %v355 = vrot.slane %v339, %v354
    %v357 = vunpack.c.l.s4 1983009808
    %v358 = vunpack.c.0.s8 %v357
    %v359 = vlaneseq
    %v360 = vshrl.u32 %v359, 7
    %v361 = vsub.s32 %v358, %v360
    %v362 = vrot.slane %v340, %v361
    %v364 = vunpack.c.l.s4 1983009808
    %v365 = vunpack.c.0.s8 %v364
    %v366 = vlaneseq
    %v367 = vshrl.u32 %v366, 7
    %v368 = vsub.s32 %v365, %v367
    %v369 = vrot.slane %v341, %v368
    %v370 = vcombine.low %v348, %v362
    %v371 = vcombine.high %v348, %v362
    %v372 = vcombine.low %v355, %v369
    %v373 = vcombine.high %v355, %v369
    %v406 = vpack.c.bf16 %v118, %v118
    %v407 = vpack.c.bf16 %v119, %v119
    %v408 = vpack.c.bf16 %v120, %v120
    %v409 = vpack.c.bf16 %v121, %v121
    %v410 = vpack.c.bf16 %v154, %v154
    %v411 = vpack.c.bf16 %v155, %v155
    %v412 = vpack.c.bf16 %v156, %v156
    %v413 = vpack.c.bf16 %v157, %v157
    %v414 = vpack.c.bf16 %v190, %v190
    %v415 = vpack.c.bf16 %v191, %v191
    %v416 = vpack.c.bf16 %v192, %v192
    %v417 = vpack.c.bf16 %v193, %v193
    %v418 = vpack.c.bf16 %v226, %v226
    %v419 = vpack.c.bf16 %v227, %v227
    %v420 = vpack.c.bf16 %v228, %v228
    %v421 = vpack.c.bf16 %v229, %v229
    %v422 = vpack.c.bf16 %v262, %v262
    %v423 = vpack.c.bf16 %v263, %v263
    %v424 = vpack.c.bf16 %v264, %v264
    %v425 = vpack.c.bf16 %v265, %v265
    %v426 = vpack.c.bf16 %v298, %v298
    %v427 = vpack.c.bf16 %v299, %v299
    %v428 = vpack.c.bf16 %v300, %v300
    %v429 = vpack.c.bf16 %v301, %v301
    %v430 = vpack.c.bf16 %v334, %v334
    %v431 = vpack.c.bf16 %v335, %v335
    %v432 = vpack.c.bf16 %v336, %v336
    %v433 = vpack.c.bf16 %v337, %v337
    %v434 = vpack.c.bf16 %v370, %v370
    %v435 = vpack.c.bf16 %v371, %v371
    %v436 = vpack.c.bf16 %v372, %v372
    %v437 = vpack.c.bf16 %v373, %v373
    %v438 = vld [vmem:[%s1] sm:$0xf]
    %v439 = vld [vmem:[%s1 + $0x4] sm:$0xf]
    %v440 = vld [vmem:[%s1 + $0x8] sm:$0xf]
    %v441 = vld [vmem:[%s1 + $0xc] sm:$0xf]
    %v442 = vld [vmem:[%s1 + $0x10] sm:$0xf]
    %v443 = vld [vmem:[%s1 + $0x14] sm:$0xf]
    %v444 = vld [vmem:[%s1 + $0x18] sm:$0xf]
    %v445 = vld [vmem:[%s1 + $0x1c] sm:$0xf]
    %v446 = vld [vmem:[%s1 + $0x20] sm:$0xf]
    %v447 = vld [vmem:[%s1 + $0x24] sm:$0xf]
    %v448 = vld [vmem:[%s1 + $0x28] sm:$0xf]
    %v449 = vld [vmem:[%s1 + $0x2c] sm:$0xf]
    %v450 = vld [vmem:[%s1 + $0x30] sm:$0xf]
    %v451 = vld [vmem:[%s1 + $0x34] sm:$0xf]
    %v452 = vld [vmem:[%s1 + $0x38] sm:$0xf]
    %v453 = vld [vmem:[%s1 + $0x3c] sm:$0xf]
    %v454 = vld [vmem:[%s1 + $0x40] sm:$0xf]
    %v455 = vld [vmem:[%s1 + $0x44] sm:$0xf]
    %v456 = vld [vmem:[%s1 + $0x48] sm:$0xf]
    %v457 = vld [vmem:[%s1 + $0x4c] sm:$0xf]
    %v458 = vld [vmem:[%s1 + $0x50] sm:$0xf]
    %v459 = vld [vmem:[%s1 + $0x54] sm:$0xf]
    %v460 = vld [vmem:[%s1 + $0x58] sm:$0xf]
    %v461 = vld [vmem:[%s1 + $0x5c] sm:$0xf]
    %v462 = vld [vmem:[%s1 + $0x60] sm:$0xf]
    %v463 = vld [vmem:[%s1 + $0x64] sm:$0xf]
    %v464 = vld [vmem:[%s1 + $0x68] sm:$0xf]
    %v465 = vld [vmem:[%s1 + $0x6c] sm:$0xf]
    %v466 = vld [vmem:[%s1 + $0x70] sm:$0xf]
    %v467 = vld [vmem:[%s1 + $0x74] sm:$0xf]
    %v468 = vld [vmem:[%s1 + $0x78] sm:$0xf]
    %v469 = vld [vmem:[%s1 + $0x7c] sm:$0xf]
    %v470 = vld [vmem:[%s1 + $0x80] sm:$0xf]
    %v471 = vld [vmem:[%s1 + $0x84] sm:$0xf]
    %v472 = vld [vmem:[%s1 + $0x88] sm:$0xf]
    %v473 = vld [vmem:[%s1 + $0x8c] sm:$0xf]
    %v474 = vld [vmem:[%s1 + $0x90] sm:$0xf]
    %v475 = vld [vmem:[%s1 + $0x94] sm:$0xf]
    %v476 = vld [vmem:[%s1 + $0x98] sm:$0xf]
    %v477 = vld [vmem:[%s1 + $0x9c] sm:$0xf]
    %v478 = vld [vmem:[%s1 + $0xa0] sm:$0xf]
    %v479 = vld [vmem:[%s1 + $0xa4] sm:$0xf]
    %v480 = vld [vmem:[%s1 + $0xa8] sm:$0xf]
    %v481 = vld [vmem:[%s1 + $0xac] sm:$0xf]
    %v482 = vld [vmem:[%s1 + $0xb0] sm:$0xf]
    %v483 = vld [vmem:[%s1 + $0xb4] sm:$0xf]
    %v484 = vld [vmem:[%s1 + $0xb8] sm:$0xf]
    %v485 = vld [vmem:[%s1 + $0xbc] sm:$0xf]
    %v486 = vld [vmem:[%s1 + $0xc0] sm:$0xf]
    %v487 = vld [vmem:[%s1 + $0xc4] sm:$0xf]
    %v488 = vld [vmem:[%s1 + $0xc8] sm:$0xf]
    %v489 = vld [vmem:[%s1 + $0xcc] sm:$0xf]
    %v490 = vld [vmem:[%s1 + $0xd0] sm:$0xf]
    %v491 = vld [vmem:[%s1 + $0xd4] sm:$0xf]
    %v492 = vld [vmem:[%s1 + $0xd8] sm:$0xf]
    %v493 = vld [vmem:[%s1 + $0xdc] sm:$0xf]
    %v494 = vld [vmem:[%s1 + $0xe0] sm:$0xf]
    %v495 = vld [vmem:[%s1 + $0xe4] sm:$0xf]
    %v496 = vld [vmem:[%s1 + $0xe8] sm:$0xf]
    %v497 = vld [vmem:[%s1 + $0xec] sm:$0xf]
    %v498 = vld [vmem:[%s1 + $0xf0] sm:$0xf]
    %v499 = vld [vmem:[%s1 + $0xf4] sm:$0xf]
    %v500 = vld [vmem:[%s1 + $0xf8] sm:$0xf]
    %v501 = vld [vmem:[%s1 + $0xfc] sm:$0xf]
    %v502 = vld [vmem:[%s1 + $0x100] sm:$0xf]
    %v503 = vld [vmem:[%s1 + $0x104] sm:$0xf]
    %v504 = vld [vmem:[%s1 + $0x108] sm:$0xf]
    %v505 = vld [vmem:[%s1 + $0x10c] sm:$0xf]
    %v506 = vld [vmem:[%s1 + $0x110] sm:$0xf]
    %v507 = vld [vmem:[%s1 + $0x114] sm:$0xf]
    %v508 = vld [vmem:[%s1 + $0x118] sm:$0xf]
    %v509 = vld [vmem:[%s1 + $0x11c] sm:$0xf]
    %v510 = vld [vmem:[%s1 + $0x120] sm:$0xf]
    %v511 = vld [vmem:[%s1 + $0x124] sm:$0xf]
    %v512 = vld [vmem:[%s1 + $0x128] sm:$0xf]
    %v513 = vld [vmem:[%s1 + $0x12c] sm:$0xf]
    %v514 = vld [vmem:[%s1 + $0x130] sm:$0xf]
    %v515 = vld [vmem:[%s1 + $0x134] sm:$0xf]
    %v516 = vld [vmem:[%s1 + $0x138] sm:$0xf]
    %v517 = vld [vmem:[%s1 + $0x13c] sm:$0xf]
    %v518 = vld [vmem:[%s1 + $0x140] sm:$0xf]
    %v519 = vld [vmem:[%s1 + $0x144] sm:$0xf]
    %v520 = vld [vmem:[%s1 + $0x148] sm:$0xf]
    %v521 = vld [vmem:[%s1 + $0x14c] sm:$0xf]
    %v522 = vld [vmem:[%s1 + $0x150] sm:$0xf]
    %v523 = vld [vmem:[%s1 + $0x154] sm:$0xf]
    %v524 = vld [vmem:[%s1 + $0x158] sm:$0xf]
    %v525 = vld [vmem:[%s1 + $0x15c] sm:$0xf]
    %v526 = vld [vmem:[%s1 + $0x160] sm:$0xf]
    %v527 = vld [vmem:[%s1 + $0x164] sm:$0xf]
    %v528 = vld [vmem:[%s1 + $0x168] sm:$0xf]
    %v529 = vld [vmem:[%s1 + $0x16c] sm:$0xf]
    %v530 = vld [vmem:[%s1 + $0x170] sm:$0xf]
    %v531 = vld [vmem:[%s1 + $0x174] sm:$0xf]
    %v532 = vld [vmem:[%s1 + $0x178] sm:$0xf]
    %v533 = vld [vmem:[%s1 + $0x17c] sm:$0xf]
    %v534 = vld [vmem:[%s1 + $0x180] sm:$0xf]
    %v535 = vld [vmem:[%s1 + $0x184] sm:$0xf]
    %v536 = vld [vmem:[%s1 + $0x188] sm:$0xf]
    %v537 = vld [vmem:[%s1 + $0x18c] sm:$0xf]
    %v538 = vld [vmem:[%s1 + $0x190] sm:$0xf]
    %v539 = vld [vmem:[%s1 + $0x194] sm:$0xf]
    %v540 = vld [vmem:[%s1 + $0x198] sm:$0xf]
    %v541 = vld [vmem:[%s1 + $0x19c] sm:$0xf]
    %v542 = vld [vmem:[%s1 + $0x1a0] sm:$0xf]
    %v543 = vld [vmem:[%s1 + $0x1a4] sm:$0xf]
    %v544 = vld [vmem:[%s1 + $0x1a8] sm:$0xf]
    %v545 = vld [vmem:[%s1 + $0x1ac] sm:$0xf]
    %v546 = vld [vmem:[%s1 + $0x1b0] sm:$0xf]
    %v547 = vld [vmem:[%s1 + $0x1b4] sm:$0xf]
    %v548 = vld [vmem:[%s1 + $0x1b8] sm:$0xf]
    %v549 = vld [vmem:[%s1 + $0x1bc] sm:$0xf]
    %v550 = vld [vmem:[%s1 + $0x1c0] sm:$0xf]
    %v551 = vld [vmem:[%s1 + $0x1c4] sm:$0xf]
    %v552 = vld [vmem:[%s1 + $0x1c8] sm:$0xf]
    %v553 = vld [vmem:[%s1 + $0x1cc] sm:$0xf]
    %v554 = vld [vmem:[%s1 + $0x1d0] sm:$0xf]
    %v555 = vld [vmem:[%s1 + $0x1d4] sm:$0xf]
    %v556 = vld [vmem:[%s1 + $0x1d8] sm:$0xf]
    %v557 = vld [vmem:[%s1 + $0x1dc] sm:$0xf]
    %v558 = vld [vmem:[%s1 + $0x1e0] sm:$0xf]
    %v559 = vld [vmem:[%s1 + $0x1e4] sm:$0xf]
    %v560 = vld [vmem:[%s1 + $0x1e8] sm:$0xf]
    %v561 = vld [vmem:[%s1 + $0x1ec] sm:$0xf]
    %v562 = vld [vmem:[%s1 + $0x1f0] sm:$0xf]
    %v563 = vld [vmem:[%s1 + $0x1f4] sm:$0xf]
    %v564 = vld [vmem:[%s1 + $0x1f8] sm:$0xf]
    %v565 = vld [vmem:[%s1 + $0x1fc] sm:$0xf]
    %v566 = vld [vmem:[%s1 + $0x200] sm:$0xf]
    %v567 = vld [vmem:[%s1 + $0x204] sm:$0xf]
    %v568 = vld [vmem:[%s1 + $0x208] sm:$0xf]
    %v569 = vld [vmem:[%s1 + $0x20c] sm:$0xf]
    %v570 = vld [vmem:[%s1 + $0x210] sm:$0xf]
    %v571 = vld [vmem:[%s1 + $0x214] sm:$0xf]
    %v572 = vld [vmem:[%s1 + $0x218] sm:$0xf]
    %v573 = vld [vmem:[%s1 + $0x21c] sm:$0xf]
    %v574 = vld [vmem:[%s1 + $0x220] sm:$0xf]
    %v575 = vld [vmem:[%s1 + $0x224] sm:$0xf]
    %v576 = vld [vmem:[%s1 + $0x228] sm:$0xf]
    %v577 = vld [vmem:[%s1 + $0x22c] sm:$0xf]
    %v578 = vld [vmem:[%s1 + $0x230] sm:$0xf]
    %v579 = vld [vmem:[%s1 + $0x234] sm:$0xf]
    %v580 = vld [vmem:[%s1 + $0x238] sm:$0xf]
    %v581 = vld [vmem:[%s1 + $0x23c] sm:$0xf]
    %v582 = vld [vmem:[%s1 + $0x240] sm:$0xf]
    %v583 = vld [vmem:[%s1 + $0x244] sm:$0xf]
    %v584 = vld [vmem:[%s1 + $0x248] sm:$0xf]
    %v585 = vld [vmem:[%s1 + $0x24c] sm:$0xf]
    %v586 = vld [vmem:[%s1 + $0x250] sm:$0xf]
    %v587 = vld [vmem:[%s1 + $0x254] sm:$0xf]
    %v588 = vld [vmem:[%s1 + $0x258] sm:$0xf]
    %v589 = vld [vmem:[%s1 + $0x25c] sm:$0xf]
    %v590 = vld [vmem:[%s1 + $0x260] sm:$0xf]
    %v591 = vld [vmem:[%s1 + $0x264] sm:$0xf]
    %v592 = vld [vmem:[%s1 + $0x268] sm:$0xf]
    %v593 = vld [vmem:[%s1 + $0x26c] sm:$0xf]
    %v594 = vld [vmem:[%s1 + $0x270] sm:$0xf]
    %v595 = vld [vmem:[%s1 + $0x274] sm:$0xf]
    %v596 = vld [vmem:[%s1 + $0x278] sm:$0xf]
    %v597 = vld [vmem:[%s1 + $0x27c] sm:$0xf]
    %v598 = vld [vmem:[%s1 + $0x280] sm:$0xf]
    %v599 = vld [vmem:[%s1 + $0x284] sm:$0xf]
    %v600 = vld [vmem:[%s1 + $0x288] sm:$0xf]
    %v601 = vld [vmem:[%s1 + $0x28c] sm:$0xf]
    %v602 = vld [vmem:[%s1 + $0x290] sm:$0xf]
    %v603 = vld [vmem:[%s1 + $0x294] sm:$0xf]
    %v604 = vld [vmem:[%s1 + $0x298] sm:$0xf]
    %v605 = vld [vmem:[%s1 + $0x29c] sm:$0xf]
    %v606 = vld [vmem:[%s1 + $0x2a0] sm:$0xf]
    %v607 = vld [vmem:[%s1 + $0x2a4] sm:$0xf]
    %v608 = vld [vmem:[%s1 + $0x2a8] sm:$0xf]
    %v609 = vld [vmem:[%s1 + $0x2ac] sm:$0xf]
    %v610 = vld [vmem:[%s1 + $0x2b0] sm:$0xf]
    %v611 = vld [vmem:[%s1 + $0x2b4] sm:$0xf]
    %v612 = vld [vmem:[%s1 + $0x2b8] sm:$0xf]
    %v613 = vld [vmem:[%s1 + $0x2bc] sm:$0xf]
    %v614 = vld [vmem:[%s1 + $0x2c0] sm:$0xf]
    %v615 = vld [vmem:[%s1 + $0x2c4] sm:$0xf]
    %v616 = vld [vmem:[%s1 + $0x2c8] sm:$0xf]
    %v617 = vld [vmem:[%s1 + $0x2cc] sm:$0xf]
    %v618 = vld [vmem:[%s1 + $0x2d0] sm:$0xf]
    %v619 = vld [vmem:[%s1 + $0x2d4] sm:$0xf]
    %v620 = vld [vmem:[%s1 + $0x2d8] sm:$0xf]
    %v621 = vld [vmem:[%s1 + $0x2dc] sm:$0xf]
    %v622 = vld [vmem:[%s1 + $0x2e0] sm:$0xf]
    %v623 = vld [vmem:[%s1 + $0x2e4] sm:$0xf]
    %v624 = vld [vmem:[%s1 + $0x2e8] sm:$0xf]
    %v625 = vld [vmem:[%s1 + $0x2ec] sm:$0xf]
    %v626 = vld [vmem:[%s1 + $0x2f0] sm:$0xf]
    %v627 = vld [vmem:[%s1 + $0x2f4] sm:$0xf]
    %v628 = vld [vmem:[%s1 + $0x2f8] sm:$0xf]
    %v629 = vld [vmem:[%s1 + $0x2fc] sm:$0xf]
    %v630 = vld [vmem:[%s1 + $0x300] sm:$0xf]
    %v631 = vld [vmem:[%s1 + $0x304] sm:$0xf]
    %v632 = vld [vmem:[%s1 + $0x308] sm:$0xf]
    %v633 = vld [vmem:[%s1 + $0x30c] sm:$0xf]
    %v634 = vld [vmem:[%s1 + $0x310] sm:$0xf]
    %v635 = vld [vmem:[%s1 + $0x314] sm:$0xf]
    %v636 = vld [vmem:[%s1 + $0x318] sm:$0xf]
    %v637 = vld [vmem:[%s1 + $0x31c] sm:$0xf]
    %v638 = vld [vmem:[%s1 + $0x320] sm:$0xf]
    %v639 = vld [vmem:[%s1 + $0x324] sm:$0xf]
    %v640 = vld [vmem:[%s1 + $0x328] sm:$0xf]
    %v641 = vld [vmem:[%s1 + $0x32c] sm:$0xf]
    %v642 = vld [vmem:[%s1 + $0x330] sm:$0xf]
    %v643 = vld [vmem:[%s1 + $0x334] sm:$0xf]
    %v644 = vld [vmem:[%s1 + $0x338] sm:$0xf]
    %v645 = vld [vmem:[%s1 + $0x33c] sm:$0xf]
    %v646 = vld [vmem:[%s1 + $0x340] sm:$0xf]
    %v647 = vld [vmem:[%s1 + $0x344] sm:$0xf]
    %v648 = vld [vmem:[%s1 + $0x348] sm:$0xf]
    %v649 = vld [vmem:[%s1 + $0x34c] sm:$0xf]
    %v650 = vld [vmem:[%s1 + $0x350] sm:$0xf]
    %v651 = vld [vmem:[%s1 + $0x354] sm:$0xf]
    %v652 = vld [vmem:[%s1 + $0x358] sm:$0xf]
    %v653 = vld [vmem:[%s1 + $0x35c] sm:$0xf]
    %v654 = vld [vmem:[%s1 + $0x360] sm:$0xf]
    %v655 = vld [vmem:[%s1 + $0x364] sm:$0xf]
    %v656 = vld [vmem:[%s1 + $0x368] sm:$0xf]
    %v657 = vld [vmem:[%s1 + $0x36c] sm:$0xf]
    %v658 = vld [vmem:[%s1 + $0x370] sm:$0xf]
    %v659 = vld [vmem:[%s1 + $0x374] sm:$0xf]
    %v660 = vld [vmem:[%s1 + $0x378] sm:$0xf]
    %v661 = vld [vmem:[%s1 + $0x37c] sm:$0xf]
    %v662 = vld [vmem:[%s1 + $0x380] sm:$0xf]
    %v663 = vld [vmem:[%s1 + $0x384] sm:$0xf]
    %v664 = vld [vmem:[%s1 + $0x388] sm:$0xf]
    %v665 = vld [vmem:[%s1 + $0x38c] sm:$0xf]
    %v666 = vld [vmem:[%s1 + $0x390] sm:$0xf]
    %v667 = vld [vmem:[%s1 + $0x394] sm:$0xf]
    %v668 = vld [vmem:[%s1 + $0x398] sm:$0xf]
    %v669 = vld [vmem:[%s1 + $0x39c] sm:$0xf]
    %v670 = vld [vmem:[%s1 + $0x3a0] sm:$0xf]
    %v671 = vld [vmem:[%s1 + $0x3a4] sm:$0xf]
    %v672 = vld [vmem:[%s1 + $0x3a8] sm:$0xf]
    %v673 = vld [vmem:[%s1 + $0x3ac] sm:$0xf]
    %v674 = vld [vmem:[%s1 + $0x3b0] sm:$0xf]
    %v675 = vld [vmem:[%s1 + $0x3b4] sm:$0xf]
    %v676 = vld [vmem:[%s1 + $0x3b8] sm:$0xf]
    %v677 = vld [vmem:[%s1 + $0x3bc] sm:$0xf]
    %v678 = vld [vmem:[%s1 + $0x3c0] sm:$0xf]
    %v679 = vld [vmem:[%s1 + $0x3c4] sm:$0xf]
    %v680 = vld [vmem:[%s1 + $0x3c8] sm:$0xf]
    %v681 = vld [vmem:[%s1 + $0x3cc] sm:$0xf]
    %v682 = vld [vmem:[%s1 + $0x3d0] sm:$0xf]
    %v683 = vld [vmem:[%s1 + $0x3d4] sm:$0xf]
    %v684 = vld [vmem:[%s1 + $0x3d8] sm:$0xf]
    %v685 = vld [vmem:[%s1 + $0x3dc] sm:$0xf]
    %v686 = vld [vmem:[%s1 + $0x3e0] sm:$0xf]
    %v687 = vld [vmem:[%s1 + $0x3e4] sm:$0xf]
    %v688 = vld [vmem:[%s1 + $0x3e8] sm:$0xf]
    %v689 = vld [vmem:[%s1 + $0x3ec] sm:$0xf]
    %v690 = vld [vmem:[%s1 + $0x3f0] sm:$0xf]
    %v691 = vld [vmem:[%s1 + $0x3f4] sm:$0xf]
    %v692 = vld [vmem:[%s1 + $0x3f8] sm:$0xf]
    %v693 = vld [vmem:[%s1 + $0x3fc] sm:$0xf]
    %v694 = vld [vmem:[%s1 + $0x400] sm:$0xf]
    %v695 = vld [vmem:[%s1 + $0x404] sm:$0xf]
    %v696 = vld [vmem:[%s1 + $0x408] sm:$0xf]
    %v697 = vld [vmem:[%s1 + $0x40c] sm:$0xf]
    %v698 = vld [vmem:[%s1 + $0x410] sm:$0xf]
    %v699 = vld [vmem:[%s1 + $0x414] sm:$0xf]
    %v700 = vld [vmem:[%s1 + $0x418] sm:$0xf]
    %v701 = vld [vmem:[%s1 + $0x41c] sm:$0xf]
    %v702 = vld [vmem:[%s1 + $0x420] sm:$0xf]
    %v703 = vld [vmem:[%s1 + $0x424] sm:$0xf]
    %v704 = vld [vmem:[%s1 + $0x428] sm:$0xf]
    %v705 = vld [vmem:[%s1 + $0x42c] sm:$0xf]
    %v706 = vld [vmem:[%s1 + $0x430] sm:$0xf]
    %v707 = vld [vmem:[%s1 + $0x434] sm:$0xf]
    %v708 = vld [vmem:[%s1 + $0x438] sm:$0xf]
    %v709 = vld [vmem:[%s1 + $0x43c] sm:$0xf]
    %v710 = vld [vmem:[%s1 + $0x440] sm:$0xf]
    %v711 = vld [vmem:[%s1 + $0x444] sm:$0xf]
    %v712 = vld [vmem:[%s1 + $0x448] sm:$0xf]
    %v713 = vld [vmem:[%s1 + $0x44c] sm:$0xf]
    %v714 = vld [vmem:[%s1 + $0x450] sm:$0xf]
    %v715 = vld [vmem:[%s1 + $0x454] sm:$0xf]
    %v716 = vld [vmem:[%s1 + $0x458] sm:$0xf]
    %v717 = vld [vmem:[%s1 + $0x45c] sm:$0xf]
    %v718 = vld [vmem:[%s1 + $0x460] sm:$0xf]
    %v719 = vld [vmem:[%s1 + $0x464] sm:$0xf]
    %v720 = vld [vmem:[%s1 + $0x468] sm:$0xf]
    %v721 = vld [vmem:[%s1 + $0x46c] sm:$0xf]
    %v722 = vld [vmem:[%s1 + $0x470] sm:$0xf]
    %v723 = vld [vmem:[%s1 + $0x474] sm:$0xf]
    %v724 = vld [vmem:[%s1 + $0x478] sm:$0xf]
    %v725 = vld [vmem:[%s1 + $0x47c] sm:$0xf]
    %v726 = vld [vmem:[%s1 + $0x480] sm:$0xf]
    %v727 = vld [vmem:[%s1 + $0x484] sm:$0xf]
    %v728 = vld [vmem:[%s1 + $0x488] sm:$0xf]
    %v729 = vld [vmem:[%s1 + $0x48c] sm:$0xf]
    %v730 = vld [vmem:[%s1 + $0x490] sm:$0xf]
    %v731 = vld [vmem:[%s1 + $0x494] sm:$0xf]
    %v732 = vld [vmem:[%s1 + $0x498] sm:$0xf]
    %v733 = vld [vmem:[%s1 + $0x49c] sm:$0xf]
    %v734 = vld [vmem:[%s1 + $0x4a0] sm:$0xf]
    %v735 = vld [vmem:[%s1 + $0x4a4] sm:$0xf]
    %v736 = vld [vmem:[%s1 + $0x4a8] sm:$0xf]
    %v737 = vld [vmem:[%s1 + $0x4ac] sm:$0xf]
    %v738 = vld [vmem:[%s1 + $0x4b0] sm:$0xf]
    %v739 = vld [vmem:[%s1 + $0x4b4] sm:$0xf]
    %v740 = vld [vmem:[%s1 + $0x4b8] sm:$0xf]
    %v741 = vld [vmem:[%s1 + $0x4bc] sm:$0xf]
    %v742 = vld [vmem:[%s1 + $0x4c0] sm:$0xf]
    %v743 = vld [vmem:[%s1 + $0x4c4] sm:$0xf]
    %v744 = vld [vmem:[%s1 + $0x4c8] sm:$0xf]
    %v745 = vld [vmem:[%s1 + $0x4cc] sm:$0xf]
    %v746 = vld [vmem:[%s1 + $0x4d0] sm:$0xf]
    %v747 = vld [vmem:[%s1 + $0x4d4] sm:$0xf]
    %v748 = vld [vmem:[%s1 + $0x4d8] sm:$0xf]
    %v749 = vld [vmem:[%s1 + $0x4dc] sm:$0xf]
    %v750 = vld [vmem:[%s1 + $0x4e0] sm:$0xf]
    %v751 = vld [vmem:[%s1 + $0x4e4] sm:$0xf]
    %v752 = vld [vmem:[%s1 + $0x4e8] sm:$0xf]
    %v753 = vld [vmem:[%s1 + $0x4ec] sm:$0xf]
    %v754 = vld [vmem:[%s1 + $0x4f0] sm:$0xf]
    %v755 = vld [vmem:[%s1 + $0x4f4] sm:$0xf]
    %v756 = vld [vmem:[%s1 + $0x4f8] sm:$0xf]
    %v757 = vld [vmem:[%s1 + $0x4fc] sm:$0xf]
    %v758 = vld [vmem:[%s1 + $0x500] sm:$0xf]
    %v759 = vld [vmem:[%s1 + $0x504] sm:$0xf]
    %v760 = vld [vmem:[%s1 + $0x508] sm:$0xf]
    %v761 = vld [vmem:[%s1 + $0x50c] sm:$0xf]
    %v762 = vld [vmem:[%s1 + $0x510] sm:$0xf]
    %v763 = vld [vmem:[%s1 + $0x514] sm:$0xf]
    %v764 = vld [vmem:[%s1 + $0x518] sm:$0xf]
    %v765 = vld [vmem:[%s1 + $0x51c] sm:$0xf]
    %v766 = vld [vmem:[%s1 + $0x520] sm:$0xf]
    %v767 = vld [vmem:[%s1 + $0x524] sm:$0xf]
    %v768 = vld [vmem:[%s1 + $0x528] sm:$0xf]
    %v769 = vld [vmem:[%s1 + $0x52c] sm:$0xf]
    %v770 = vld [vmem:[%s1 + $0x530] sm:$0xf]
    %v771 = vld [vmem:[%s1 + $0x534] sm:$0xf]
    %v772 = vld [vmem:[%s1 + $0x538] sm:$0xf]
    %v773 = vld [vmem:[%s1 + $0x53c] sm:$0xf]
    %v774 = vld [vmem:[%s1 + $0x540] sm:$0xf]
    %v775 = vld [vmem:[%s1 + $0x544] sm:$0xf]
    %v776 = vld [vmem:[%s1 + $0x548] sm:$0xf]
    %v777 = vld [vmem:[%s1 + $0x54c] sm:$0xf]
    %v778 = vld [vmem:[%s1 + $0x550] sm:$0xf]
    %v779 = vld [vmem:[%s1 + $0x554] sm:$0xf]
    %v780 = vld [vmem:[%s1 + $0x558] sm:$0xf]
    %v781 = vld [vmem:[%s1 + $0x55c] sm:$0xf]
    %v782 = vld [vmem:[%s1 + $0x560] sm:$0xf]
    %v783 = vld [vmem:[%s1 + $0x564] sm:$0xf]
    %v784 = vld [vmem:[%s1 + $0x568] sm:$0xf]
    %v785 = vld [vmem:[%s1 + $0x56c] sm:$0xf]
    %v786 = vld [vmem:[%s1 + $0x570] sm:$0xf]
    %v787 = vld [vmem:[%s1 + $0x574] sm:$0xf]
    %v788 = vld [vmem:[%s1 + $0x578] sm:$0xf]
    %v789 = vld [vmem:[%s1 + $0x57c] sm:$0xf]
    %v790 = vld [vmem:[%s1 + $0x580] sm:$0xf]
    %v791 = vld [vmem:[%s1 + $0x584] sm:$0xf]
    %v792 = vld [vmem:[%s1 + $0x588] sm:$0xf]
    %v793 = vld [vmem:[%s1 + $0x58c] sm:$0xf]
    %v794 = vld [vmem:[%s1 + $0x590] sm:$0xf]
    %v795 = vld [vmem:[%s1 + $0x594] sm:$0xf]
    %v796 = vld [vmem:[%s1 + $0x598] sm:$0xf]
    %v797 = vld [vmem:[%s1 + $0x59c] sm:$0xf]
    %v798 = vld [vmem:[%s1 + $0x5a0] sm:$0xf]
    %v799 = vld [vmem:[%s1 + $0x5a4] sm:$0xf]
    %v800 = vld [vmem:[%s1 + $0x5a8] sm:$0xf]
    %v801 = vld [vmem:[%s1 + $0x5ac] sm:$0xf]
    %v802 = vld [vmem:[%s1 + $0x5b0] sm:$0xf]
    %v803 = vld [vmem:[%s1 + $0x5b4] sm:$0xf]
    %v804 = vld [vmem:[%s1 + $0x5b8] sm:$0xf]
    %v805 = vld [vmem:[%s1 + $0x5bc] sm:$0xf]
    %v806 = vld [vmem:[%s1 + $0x5c0] sm:$0xf]
    %v807 = vld [vmem:[%s1 + $0x5c4] sm:$0xf]
    %v808 = vld [vmem:[%s1 + $0x5c8] sm:$0xf]
    %v809 = vld [vmem:[%s1 + $0x5cc] sm:$0xf]
    %v810 = vld [vmem:[%s1 + $0x5d0] sm:$0xf]
    %v811 = vld [vmem:[%s1 + $0x5d4] sm:$0xf]
    %v812 = vld [vmem:[%s1 + $0x5d8] sm:$0xf]
    %v813 = vld [vmem:[%s1 + $0x5dc] sm:$0xf]
    %v814 = vld [vmem:[%s1 + $0x5e0] sm:$0xf]
    %v815 = vld [vmem:[%s1 + $0x5e4] sm:$0xf]
    %v816 = vld [vmem:[%s1 + $0x5e8] sm:$0xf]
    %v817 = vld [vmem:[%s1 + $0x5ec] sm:$0xf]
    %v818 = vld [vmem:[%s1 + $0x5f0] sm:$0xf]
    %v819 = vld [vmem:[%s1 + $0x5f4] sm:$0xf]
    %v820 = vld [vmem:[%s1 + $0x5f8] sm:$0xf]
    %v821 = vld [vmem:[%s1 + $0x5fc] sm:$0xf]
    %v822 = vld [vmem:[%s1 + $0x600] sm:$0xf]
    %v823 = vld [vmem:[%s1 + $0x604] sm:$0xf]
    %v824 = vld [vmem:[%s1 + $0x608] sm:$0xf]
    %v825 = vld [vmem:[%s1 + $0x60c] sm:$0xf]
    %v826 = vld [vmem:[%s1 + $0x610] sm:$0xf]
    %v827 = vld [vmem:[%s1 + $0x614] sm:$0xf]
    %v828 = vld [vmem:[%s1 + $0x618] sm:$0xf]
    %v829 = vld [vmem:[%s1 + $0x61c] sm:$0xf]
    %v830 = vld [vmem:[%s1 + $0x620] sm:$0xf]
    %v831 = vld [vmem:[%s1 + $0x624] sm:$0xf]
    %v832 = vld [vmem:[%s1 + $0x628] sm:$0xf]
    %v833 = vld [vmem:[%s1 + $0x62c] sm:$0xf]
    %v834 = vld [vmem:[%s1 + $0x630] sm:$0xf]
    %v835 = vld [vmem:[%s1 + $0x634] sm:$0xf]
    %v836 = vld [vmem:[%s1 + $0x638] sm:$0xf]
    %v837 = vld [vmem:[%s1 + $0x63c] sm:$0xf]
    %v838 = vld [vmem:[%s1 + $0x640] sm:$0xf]
    %v839 = vld [vmem:[%s1 + $0x644] sm:$0xf]
    %v840 = vld [vmem:[%s1 + $0x648] sm:$0xf]
    %v841 = vld [vmem:[%s1 + $0x64c] sm:$0xf]
    %v842 = vld [vmem:[%s1 + $0x650] sm:$0xf]
    %v843 = vld [vmem:[%s1 + $0x654] sm:$0xf]
    %v844 = vld [vmem:[%s1 + $0x658] sm:$0xf]
    %v845 = vld [vmem:[%s1 + $0x65c] sm:$0xf]
    %v846 = vld [vmem:[%s1 + $0x660] sm:$0xf]
    %v847 = vld [vmem:[%s1 + $0x664] sm:$0xf]
    %v848 = vld [vmem:[%s1 + $0x668] sm:$0xf]
    %v849 = vld [vmem:[%s1 + $0x66c] sm:$0xf]
    %v850 = vld [vmem:[%s1 + $0x670] sm:$0xf]
    %v851 = vld [vmem:[%s1 + $0x674] sm:$0xf]
    %v852 = vld [vmem:[%s1 + $0x678] sm:$0xf]
    %v853 = vld [vmem:[%s1 + $0x67c] sm:$0xf]
    %v854 = vld [vmem:[%s1 + $0x680] sm:$0xf]
    %v855 = vld [vmem:[%s1 + $0x684] sm:$0xf]
    %v856 = vld [vmem:[%s1 + $0x688] sm:$0xf]
    %v857 = vld [vmem:[%s1 + $0x68c] sm:$0xf]
    %v858 = vld [vmem:[%s1 + $0x690] sm:$0xf]
    %v859 = vld [vmem:[%s1 + $0x694] sm:$0xf]
    %v860 = vld [vmem:[%s1 + $0x698] sm:$0xf]
    %v861 = vld [vmem:[%s1 + $0x69c] sm:$0xf]
    %v862 = vld [vmem:[%s1 + $0x6a0] sm:$0xf]
    %v863 = vld [vmem:[%s1 + $0x6a4] sm:$0xf]
    %v864 = vld [vmem:[%s1 + $0x6a8] sm:$0xf]
    %v865 = vld [vmem:[%s1 + $0x6ac] sm:$0xf]
    %v866 = vld [vmem:[%s1 + $0x6b0] sm:$0xf]
    %v867 = vld [vmem:[%s1 + $0x6b4] sm:$0xf]
    %v868 = vld [vmem:[%s1 + $0x6b8] sm:$0xf]
    %v869 = vld [vmem:[%s1 + $0x6bc] sm:$0xf]
    %v870 = vld [vmem:[%s1 + $0x6c0] sm:$0xf]
    %v871 = vld [vmem:[%s1 + $0x6c4] sm:$0xf]
    %v872 = vld [vmem:[%s1 + $0x6c8] sm:$0xf]
    %v873 = vld [vmem:[%s1 + $0x6cc] sm:$0xf]
    %v874 = vld [vmem:[%s1 + $0x6d0] sm:$0xf]
    %v875 = vld [vmem:[%s1 + $0x6d4] sm:$0xf]
    %v876 = vld [vmem:[%s1 + $0x6d8] sm:$0xf]
    %v877 = vld [vmem:[%s1 + $0x6dc] sm:$0xf]
    %v878 = vld [vmem:[%s1 + $0x6e0] sm:$0xf]
    %v879 = vld [vmem:[%s1 + $0x6e4] sm:$0xf]
    %v880 = vld [vmem:[%s1 + $0x6e8] sm:$0xf]
    %v881 = vld [vmem:[%s1 + $0x6ec] sm:$0xf]
    %v882 = vld [vmem:[%s1 + $0x6f0] sm:$0xf]
    %v883 = vld [vmem:[%s1 + $0x6f4] sm:$0xf]
    %v884 = vld [vmem:[%s1 + $0x6f8] sm:$0xf]
    %v885 = vld [vmem:[%s1 + $0x6fc] sm:$0xf]
    %v886 = vld [vmem:[%s1 + $0x700] sm:$0xf]
    %v887 = vld [vmem:[%s1 + $0x704] sm:$0xf]
    %v888 = vld [vmem:[%s1 + $0x708] sm:$0xf]
    %v889 = vld [vmem:[%s1 + $0x70c] sm:$0xf]
    %v890 = vld [vmem:[%s1 + $0x710] sm:$0xf]
    %v891 = vld [vmem:[%s1 + $0x714] sm:$0xf]
    %v892 = vld [vmem:[%s1 + $0x718] sm:$0xf]
    %v893 = vld [vmem:[%s1 + $0x71c] sm:$0xf]
    %v894 = vld [vmem:[%s1 + $0x720] sm:$0xf]
    %v895 = vld [vmem:[%s1 + $0x724] sm:$0xf]
    %v896 = vld [vmem:[%s1 + $0x728] sm:$0xf]
    %v897 = vld [vmem:[%s1 + $0x72c] sm:$0xf]
    %v898 = vld [vmem:[%s1 + $0x730] sm:$0xf]
    %v899 = vld [vmem:[%s1 + $0x734] sm:$0xf]
    %v900 = vld [vmem:[%s1 + $0x738] sm:$0xf]
    %v901 = vld [vmem:[%s1 + $0x73c] sm:$0xf]
    %v902 = vld [vmem:[%s1 + $0x740] sm:$0xf]
    %v903 = vld [vmem:[%s1 + $0x744] sm:$0xf]
    %v904 = vld [vmem:[%s1 + $0x748] sm:$0xf]
    %v905 = vld [vmem:[%s1 + $0x74c] sm:$0xf]
    %v906 = vld [vmem:[%s1 + $0x750] sm:$0xf]
    %v907 = vld [vmem:[%s1 + $0x754] sm:$0xf]
    %v908 = vld [vmem:[%s1 + $0x758] sm:$0xf]
    %v909 = vld [vmem:[%s1 + $0x75c] sm:$0xf]
    %v910 = vld [vmem:[%s1 + $0x760] sm:$0xf]
    %v911 = vld [vmem:[%s1 + $0x764] sm:$0xf]
    %v912 = vld [vmem:[%s1 + $0x768] sm:$0xf]
    %v913 = vld [vmem:[%s1 + $0x76c] sm:$0xf]
    %v914 = vld [vmem:[%s1 + $0x770] sm:$0xf]
    %v915 = vld [vmem:[%s1 + $0x774] sm:$0xf]
    %v916 = vld [vmem:[%s1 + $0x778] sm:$0xf]
    %v917 = vld [vmem:[%s1 + $0x77c] sm:$0xf]
    %v918 = vld [vmem:[%s1 + $0x780] sm:$0xf]
    %v919 = vld [vmem:[%s1 + $0x784] sm:$0xf]
    %v920 = vld [vmem:[%s1 + $0x788] sm:$0xf]
    %v921 = vld [vmem:[%s1 + $0x78c] sm:$0xf]
    %v922 = vld [vmem:[%s1 + $0x790] sm:$0xf]
    %v923 = vld [vmem:[%s1 + $0x794] sm:$0xf]
    %v924 = vld [vmem:[%s1 + $0x798] sm:$0xf]
    %v925 = vld [vmem:[%s1 + $0x79c] sm:$0xf]
    %v926 = vld [vmem:[%s1 + $0x7a0] sm:$0xf]
    %v927 = vld [vmem:[%s1 + $0x7a4] sm:$0xf]
    %v928 = vld [vmem:[%s1 + $0x7a8] sm:$0xf]
    %v929 = vld [vmem:[%s1 + $0x7ac] sm:$0xf]
    %v930 = vld [vmem:[%s1 + $0x7b0] sm:$0xf]
    %v931 = vld [vmem:[%s1 + $0x7b4] sm:$0xf]
    %v932 = vld [vmem:[%s1 + $0x7b8] sm:$0xf]
    %v933 = vld [vmem:[%s1 + $0x7bc] sm:$0xf]
    %v934 = vld [vmem:[%s1 + $0x7c0] sm:$0xf]
    %v935 = vld [vmem:[%s1 + $0x7c4] sm:$0xf]
    %v936 = vld [vmem:[%s1 + $0x7c8] sm:$0xf]
    %v937 = vld [vmem:[%s1 + $0x7cc] sm:$0xf]
    %v938 = vld [vmem:[%s1 + $0x7d0] sm:$0xf]
    %v939 = vld [vmem:[%s1 + $0x7d4] sm:$0xf]
    %v940 = vld [vmem:[%s1 + $0x7d8] sm:$0xf]
    %v941 = vld [vmem:[%s1 + $0x7dc] sm:$0xf]
    %v942 = vld [vmem:[%s1 + $0x7e0] sm:$0xf]
    %v943 = vld [vmem:[%s1 + $0x7e4] sm:$0xf]
    %v944 = vld [vmem:[%s1 + $0x7e8] sm:$0xf]
    %v945 = vld [vmem:[%s1 + $0x7ec] sm:$0xf]
    %v946 = vld [vmem:[%s1 + $0x7f0] sm:$0xf]
    %v947 = vld [vmem:[%s1 + $0x7f4] sm:$0xf]
    %v948 = vld [vmem:[%s1 + $0x7f8] sm:$0xf]
    %v949 = vld [vmem:[%s1 + $0x7fc] sm:$0xf]
    %v950 = vld [vmem:[%s2] sm:$0x1]
    %v952 = vlaneseq
    %v953 = vshrl.u32 %v952, 7
    %v954 = vsub.s32 0, %v953
    %v955 = vrot.slane %v950, %v954
    %v1469 = vunpack.c.l.b16 %v438
    %v1470 = vunpack.c.l.b16 %v439
    %v1471 = vunpack.c.l.b16 %v440
    %v1472 = vunpack.c.l.b16 %v441
    %v1473 = vunpack.c.l.b16 %v442
    %v1474 = vunpack.c.l.b16 %v443
    %v1475 = vunpack.c.l.b16 %v444
    %v1476 = vunpack.c.l.b16 %v445
    %v1477 = vunpack.c.l.b16 %v446
    %v1478 = vunpack.c.l.b16 %v447
    %v1479 = vunpack.c.l.b16 %v448
    %v1480 = vunpack.c.l.b16 %v449
    %v1481 = vunpack.c.l.b16 %v450
    %v1482 = vunpack.c.l.b16 %v451
    %v1483 = vunpack.c.l.b16 %v452
    %v1484 = vunpack.c.l.b16 %v453
    %v1485 = vunpack.c.l.b16 %v454
    %v1486 = vunpack.c.l.b16 %v455
    %v1487 = vunpack.c.l.b16 %v456
    %v1488 = vunpack.c.l.b16 %v457
    %v1489 = vunpack.c.l.b16 %v458
    %v1490 = vunpack.c.l.b16 %v459
    %v1491 = vunpack.c.l.b16 %v460
    %v1492 = vunpack.c.l.b16 %v461
    %v1493 = vunpack.c.l.b16 %v462
    %v1494 = vunpack.c.l.b16 %v463
    %v1495 = vunpack.c.l.b16 %v464
    %v1496 = vunpack.c.l.b16 %v465
    %v1497 = vunpack.c.l.b16 %v466
    %v1498 = vunpack.c.l.b16 %v467
    %v1499 = vunpack.c.l.b16 %v468
    %v1500 = vunpack.c.l.b16 %v469
    %v1501 = vunpack.c.l.b16 %v470
    %v1502 = vunpack.c.l.b16 %v471
    %v1503 = vunpack.c.l.b16 %v472
    %v1504 = vunpack.c.l.b16 %v473
    %v1505 = vunpack.c.l.b16 %v474
    %v1506 = vunpack.c.l.b16 %v475
    %v1507 = vunpack.c.l.b16 %v476
    %v1508 = vunpack.c.l.b16 %v477
    %v1509 = vunpack.c.l.b16 %v478
    %v1510 = vunpack.c.l.b16 %v479
    %v1511 = vunpack.c.l.b16 %v480
    %v1512 = vunpack.c.l.b16 %v481
    %v1513 = vunpack.c.l.b16 %v482
    %v1514 = vunpack.c.l.b16 %v483
    %v1515 = vunpack.c.l.b16 %v484
    %v1516 = vunpack.c.l.b16 %v485
    %v1517 = vunpack.c.l.b16 %v486
    %v1518 = vunpack.c.l.b16 %v487
    %v1519 = vunpack.c.l.b16 %v488
    %v1520 = vunpack.c.l.b16 %v489
    %v1521 = vunpack.c.l.b16 %v490
    %v1522 = vunpack.c.l.b16 %v491
    %v1523 = vunpack.c.l.b16 %v492
    %v1524 = vunpack.c.l.b16 %v493
    %v1525 = vunpack.c.l.b16 %v494
    %v1526 = vunpack.c.l.b16 %v495
    %v1527 = vunpack.c.l.b16 %v496
    %v1528 = vunpack.c.l.b16 %v497
    %v1529 = vunpack.c.l.b16 %v498
    %v1530 = vunpack.c.l.b16 %v499
    %v1531 = vunpack.c.l.b16 %v500
    %v1532 = vunpack.c.l.b16 %v501
    %v1533 = vunpack.c.l.b16 %v502
    %v1534 = vunpack.c.l.b16 %v503
    %v1535 = vunpack.c.l.b16 %v504
    %v1536 = vunpack.c.l.b16 %v505
    %v1537 = vunpack.c.l.b16 %v506
    %v1538 = vunpack.c.l.b16 %v507
    %v1539 = vunpack.c.l.b16 %v508
    %v1540 = vunpack.c.l.b16 %v509
    %v1541 = vunpack.c.l.b16 %v510
    %v1542 = vunpack.c.l.b16 %v511
    %v1543 = vunpack.c.l.b16 %v512
    %v1544 = vunpack.c.l.b16 %v513
    %v1545 = vunpack.c.l.b16 %v514
    %v1546 = vunpack.c.l.b16 %v515
    %v1547 = vunpack.c.l.b16 %v516
    %v1548 = vunpack.c.l.b16 %v517
    %v1549 = vunpack.c.l.b16 %v518
    %v1550 = vunpack.c.l.b16 %v519
    %v1551 = vunpack.c.l.b16 %v520
    %v1552 = vunpack.c.l.b16 %v521
    %v1553 = vunpack.c.l.b16 %v522
    %v1554 = vunpack.c.l.b16 %v523
    %v1555 = vunpack.c.l.b16 %v524
    %v1556 = vunpack.c.l.b16 %v525
    %v1557 = vunpack.c.l.b16 %v526
    %v1558 = vunpack.c.l.b16 %v527
    %v1559 = vunpack.c.l.b16 %v528
    %v1560 = vunpack.c.l.b16 %v529
    %v1561 = vunpack.c.l.b16 %v530
    %v1562 = vunpack.c.l.b16 %v531
    %v1563 = vunpack.c.l.b16 %v532
    %v1564 = vunpack.c.l.b16 %v533
    %v1565 = vunpack.c.l.b16 %v534
    %v1566 = vunpack.c.l.b16 %v535
    %v1567 = vunpack.c.l.b16 %v536
    %v1568 = vunpack.c.l.b16 %v537
    %v1569 = vunpack.c.l.b16 %v538
    %v1570 = vunpack.c.l.b16 %v539
    %v1571 = vunpack.c.l.b16 %v540
    %v1572 = vunpack.c.l.b16 %v541
    %v1573 = vunpack.c.l.b16 %v542
    %v1574 = vunpack.c.l.b16 %v543
    %v1575 = vunpack.c.l.b16 %v544
    %v1576 = vunpack.c.l.b16 %v545
    %v1577 = vunpack.c.l.b16 %v546
    %v1578 = vunpack.c.l.b16 %v547
    %v1579 = vunpack.c.l.b16 %v548
    %v1580 = vunpack.c.l.b16 %v549
    %v1581 = vunpack.c.l.b16 %v550
    %v1582 = vunpack.c.l.b16 %v551
    %v1583 = vunpack.c.l.b16 %v552
    %v1584 = vunpack.c.l.b16 %v553
    %v1585 = vunpack.c.l.b16 %v554
    %v1586 = vunpack.c.l.b16 %v555
    %v1587 = vunpack.c.l.b16 %v556
    %v1588 = vunpack.c.l.b16 %v557
    %v1589 = vunpack.c.l.b16 %v558
    %v1590 = vunpack.c.l.b16 %v559
    %v1591 = vunpack.c.l.b16 %v560
    %v1592 = vunpack.c.l.b16 %v561
    %v1593 = vunpack.c.l.b16 %v562
    %v1594 = vunpack.c.l.b16 %v563
    %v1595 = vunpack.c.l.b16 %v564
    %v1596 = vunpack.c.l.b16 %v565
    %v1597 = vunpack.c.l.b16 %v566
    %v1598 = vunpack.c.l.b16 %v567
    %v1599 = vunpack.c.l.b16 %v568
    %v1600 = vunpack.c.l.b16 %v569
    %v1601 = vunpack.c.l.b16 %v570
    %v1602 = vunpack.c.l.b16 %v571
    %v1603 = vunpack.c.l.b16 %v572
    %v1604 = vunpack.c.l.b16 %v573
    %v1605 = vunpack.c.l.b16 %v574
    %v1606 = vunpack.c.l.b16 %v575
    %v1607 = vunpack.c.l.b16 %v576
    %v1608 = vunpack.c.l.b16 %v577
    %v1609 = vunpack.c.l.b16 %v578
    %v1610 = vunpack.c.l.b16 %v579
    %v1611 = vunpack.c.l.b16 %v580
    %v1612 = vunpack.c.l.b16 %v581
    %v1613 = vunpack.c.l.b16 %v582
    %v1614 = vunpack.c.l.b16 %v583
    %v1615 = vunpack.c.l.b16 %v584
    %v1616 = vunpack.c.l.b16 %v585
    %v1617 = vunpack.c.l.b16 %v586
    %v1618 = vunpack.c.l.b16 %v587
    %v1619 = vunpack.c.l.b16 %v588
    %v1620 = vunpack.c.l.b16 %v589
    %v1621 = vunpack.c.l.b16 %v590
    %v1622 = vunpack.c.l.b16 %v591
    %v1623 = vunpack.c.l.b16 %v592
    %v1624 = vunpack.c.l.b16 %v593
    %v1625 = vunpack.c.l.b16 %v594
    %v1626 = vunpack.c.l.b16 %v595
    %v1627 = vunpack.c.l.b16 %v596
    %v1628 = vunpack.c.l.b16 %v597
    %v1629 = vunpack.c.l.b16 %v598
    %v1630 = vunpack.c.l.b16 %v599
    %v1631 = vunpack.c.l.b16 %v600
    %v1632 = vunpack.c.l.b16 %v601
    %v1633 = vunpack.c.l.b16 %v602
    %v1634 = vunpack.c.l.b16 %v603
    %v1635 = vunpack.c.l.b16 %v604
    %v1636 = vunpack.c.l.b16 %v605
    %v1637 = vunpack.c.l.b16 %v606
    %v1638 = vunpack.c.l.b16 %v607
    %v1639 = vunpack.c.l.b16 %v608
    %v1640 = vunpack.c.l.b16 %v609
    %v1641 = vunpack.c.l.b16 %v610
    %v1642 = vunpack.c.l.b16 %v611
    %v1643 = vunpack.c.l.b16 %v612
    %v1644 = vunpack.c.l.b16 %v613
    %v1645 = vunpack.c.l.b16 %v614
    %v1646 = vunpack.c.l.b16 %v615
    %v1647 = vunpack.c.l.b16 %v616
    %v1648 = vunpack.c.l.b16 %v617
    %v1649 = vunpack.c.l.b16 %v618
    %v1650 = vunpack.c.l.b16 %v619
    %v1651 = vunpack.c.l.b16 %v620
    %v1652 = vunpack.c.l.b16 %v621
    %v1653 = vunpack.c.l.b16 %v622
    %v1654 = vunpack.c.l.b16 %v623
    %v1655 = vunpack.c.l.b16 %v624
    %v1656 = vunpack.c.l.b16 %v625
    %v1657 = vunpack.c.l.b16 %v626
    %v1658 = vunpack.c.l.b16 %v627
    %v1659 = vunpack.c.l.b16 %v628
    %v1660 = vunpack.c.l.b16 %v629
    %v1661 = vunpack.c.l.b16 %v630
    %v1662 = vunpack.c.l.b16 %v631
    %v1663 = vunpack.c.l.b16 %v632
    %v1664 = vunpack.c.l.b16 %v633
    %v1665 = vunpack.c.l.b16 %v634
    %v1666 = vunpack.c.l.b16 %v635
    %v1667 = vunpack.c.l.b16 %v636
    %v1668 = vunpack.c.l.b16 %v637
    %v1669 = vunpack.c.l.b16 %v638
    %v1670 = vunpack.c.l.b16 %v639
    %v1671 = vunpack.c.l.b16 %v640
    %v1672 = vunpack.c.l.b16 %v641
    %v1673 = vunpack.c.l.b16 %v642
    %v1674 = vunpack.c.l.b16 %v643
    %v1675 = vunpack.c.l.b16 %v644
    %v1676 = vunpack.c.l.b16 %v645
    %v1677 = vunpack.c.l.b16 %v646
    %v1678 = vunpack.c.l.b16 %v647
    %v1679 = vunpack.c.l.b16 %v648
    %v1680 = vunpack.c.l.b16 %v649
    %v1681 = vunpack.c.l.b16 %v650
    %v1682 = vunpack.c.l.b16 %v651
    %v1683 = vunpack.c.l.b16 %v652
    %v1684 = vunpack.c.l.b16 %v653
    %v1685 = vunpack.c.l.b16 %v654
    %v1686 = vunpack.c.l.b16 %v655
    %v1687 = vunpack.c.l.b16 %v656
    %v1688 = vunpack.c.l.b16 %v657
    %v1689 = vunpack.c.l.b16 %v658
    %v1690 = vunpack.c.l.b16 %v659
    %v1691 = vunpack.c.l.b16 %v660
    %v1692 = vunpack.c.l.b16 %v661
    %v1693 = vunpack.c.l.b16 %v662
    %v1694 = vunpack.c.l.b16 %v663
    %v1695 = vunpack.c.l.b16 %v664
    %v1696 = vunpack.c.l.b16 %v665
    %v1697 = vunpack.c.l.b16 %v666
    %v1698 = vunpack.c.l.b16 %v667
    %v1699 = vunpack.c.l.b16 %v668
    %v1700 = vunpack.c.l.b16 %v669
    %v1701 = vunpack.c.l.b16 %v670
    %v1702 = vunpack.c.l.b16 %v671
    %v1703 = vunpack.c.l.b16 %v672
    %v1704 = vunpack.c.l.b16 %v673
    %v1705 = vunpack.c.l.b16 %v674
    %v1706 = vunpack.c.l.b16 %v675
    %v1707 = vunpack.c.l.b16 %v676
    %v1708 = vunpack.c.l.b16 %v677
    %v1709 = vunpack.c.l.b16 %v678
    %v1710 = vunpack.c.l.b16 %v679
    %v1711 = vunpack.c.l.b16 %v680
    %v1712 = vunpack.c.l.b16 %v681
    %v1713 = vunpack.c.l.b16 %v682
    %v1714 = vunpack.c.l.b16 %v683
    %v1715 = vunpack.c.l.b16 %v684
    %v1716 = vunpack.c.l.b16 %v685
    %v1717 = vunpack.c.l.b16 %v686
    %v1718 = vunpack.c.l.b16 %v687
    %v1719 = vunpack.c.l.b16 %v688
    %v1720 = vunpack.c.l.b16 %v689
    %v1721 = vunpack.c.l.b16 %v690
    %v1722 = vunpack.c.l.b16 %v691
    %v1723 = vunpack.c.l.b16 %v692
    %v1724 = vunpack.c.l.b16 %v693
    %v1725 = vunpack.c.l.b16 %v694
    %v1726 = vunpack.c.l.b16 %v695
    %v1727 = vunpack.c.l.b16 %v696
    %v1728 = vunpack.c.l.b16 %v697
    %v1729 = vunpack.c.l.b16 %v698
    %v1730 = vunpack.c.l.b16 %v699
    %v1731 = vunpack.c.l.b16 %v700
    %v1732 = vunpack.c.l.b16 %v701
    %v1733 = vunpack.c.l.b16 %v702
    %v1734 = vunpack.c.l.b16 %v703
    %v1735 = vunpack.c.l.b16 %v704
    %v1736 = vunpack.c.l.b16 %v705
    %v1737 = vunpack.c.l.b16 %v706
    %v1738 = vunpack.c.l.b16 %v707
    %v1739 = vunpack.c.l.b16 %v708
    %v1740 = vunpack.c.l.b16 %v709
    %v1741 = vunpack.c.l.b16 %v710
    %v1742 = vunpack.c.l.b16 %v711
    %v1743 = vunpack.c.l.b16 %v712
    %v1744 = vunpack.c.l.b16 %v713
    %v1745 = vunpack.c.l.b16 %v714
    %v1746 = vunpack.c.l.b16 %v715
    %v1747 = vunpack.c.l.b16 %v716
    %v1748 = vunpack.c.l.b16 %v717
    %v1749 = vunpack.c.l.b16 %v718
    %v1750 = vunpack.c.l.b16 %v719
    %v1751 = vunpack.c.l.b16 %v720
    %v1752 = vunpack.c.l.b16 %v721
    %v1753 = vunpack.c.l.b16 %v722
    %v1754 = vunpack.c.l.b16 %v723
    %v1755 = vunpack.c.l.b16 %v724
    %v1756 = vunpack.c.l.b16 %v725
    %v1757 = vunpack.c.l.b16 %v726
    %v1758 = vunpack.c.l.b16 %v727
    %v1759 = vunpack.c.l.b16 %v728
    %v1760 = vunpack.c.l.b16 %v729
    %v1761 = vunpack.c.l.b16 %v730
    %v1762 = vunpack.c.l.b16 %v731
    %v1763 = vunpack.c.l.b16 %v732
    %v1764 = vunpack.c.l.b16 %v733
    %v1765 = vunpack.c.l.b16 %v734
    %v1766 = vunpack.c.l.b16 %v735
    %v1767 = vunpack.c.l.b16 %v736
    %v1768 = vunpack.c.l.b16 %v737
    %v1769 = vunpack.c.l.b16 %v738
    %v1770 = vunpack.c.l.b16 %v739
    %v1771 = vunpack.c.l.b16 %v740
    %v1772 = vunpack.c.l.b16 %v741
    %v1773 = vunpack.c.l.b16 %v742
    %v1774 = vunpack.c.l.b16 %v743
    %v1775 = vunpack.c.l.b16 %v744
    %v1776 = vunpack.c.l.b16 %v745
    %v1777 = vunpack.c.l.b16 %v746
    %v1778 = vunpack.c.l.b16 %v747
    %v1779 = vunpack.c.l.b16 %v748
    %v1780 = vunpack.c.l.b16 %v749
    %v1781 = vunpack.c.l.b16 %v750
    %v1782 = vunpack.c.l.b16 %v751
    %v1783 = vunpack.c.l.b16 %v752
    %v1784 = vunpack.c.l.b16 %v753
    %v1785 = vunpack.c.l.b16 %v754
    %v1786 = vunpack.c.l.b16 %v755
    %v1787 = vunpack.c.l.b16 %v756
    %v1788 = vunpack.c.l.b16 %v757
    %v1789 = vunpack.c.l.b16 %v758
    %v1790 = vunpack.c.l.b16 %v759
    %v1791 = vunpack.c.l.b16 %v760
    %v1792 = vunpack.c.l.b16 %v761
    %v1793 = vunpack.c.l.b16 %v762
    %v1794 = vunpack.c.l.b16 %v763
    %v1795 = vunpack.c.l.b16 %v764
    %v1796 = vunpack.c.l.b16 %v765
    %v1797 = vunpack.c.l.b16 %v766
    %v1798 = vunpack.c.l.b16 %v767
    %v1799 = vunpack.c.l.b16 %v768
    %v1800 = vunpack.c.l.b16 %v769
    %v1801 = vunpack.c.l.b16 %v770
    %v1802 = vunpack.c.l.b16 %v771
    %v1803 = vunpack.c.l.b16 %v772
    %v1804 = vunpack.c.l.b16 %v773
    %v1805 = vunpack.c.l.b16 %v774
    %v1806 = vunpack.c.l.b16 %v775
    %v1807 = vunpack.c.l.b16 %v776
    %v1808 = vunpack.c.l.b16 %v777
    %v1809 = vunpack.c.l.b16 %v778
    %v1810 = vunpack.c.l.b16 %v779
    %v1811 = vunpack.c.l.b16 %v780
    %v1812 = vunpack.c.l.b16 %v781
    %v1813 = vunpack.c.l.b16 %v782
    %v1814 = vunpack.c.l.b16 %v783
    %v1815 = vunpack.c.l.b16 %v784
    %v1816 = vunpack.c.l.b16 %v785
    %v1817 = vunpack.c.l.b16 %v786
    %v1818 = vunpack.c.l.b16 %v787
    %v1819 = vunpack.c.l.b16 %v788
    %v1820 = vunpack.c.l.b16 %v789
    %v1821 = vunpack.c.l.b16 %v790
    %v1822 = vunpack.c.l.b16 %v791
    %v1823 = vunpack.c.l.b16 %v792
    %v1824 = vunpack.c.l.b16 %v793
    %v1825 = vunpack.c.l.b16 %v794
    %v1826 = vunpack.c.l.b16 %v795
    %v1827 = vunpack.c.l.b16 %v796
    %v1828 = vunpack.c.l.b16 %v797
    %v1829 = vunpack.c.l.b16 %v798
    %v1830 = vunpack.c.l.b16 %v799
    %v1831 = vunpack.c.l.b16 %v800
    %v1832 = vunpack.c.l.b16 %v801
    %v1833 = vunpack.c.l.b16 %v802
    %v1834 = vunpack.c.l.b16 %v803
    %v1835 = vunpack.c.l.b16 %v804
    %v1836 = vunpack.c.l.b16 %v805
    %v1837 = vunpack.c.l.b16 %v806
    %v1838 = vunpack.c.l.b16 %v807
    %v1839 = vunpack.c.l.b16 %v808
    %v1840 = vunpack.c.l.b16 %v809
    %v1841 = vunpack.c.l.b16 %v810
    %v1842 = vunpack.c.l.b16 %v811
    %v1843 = vunpack.c.l.b16 %v812
    %v1844 = vunpack.c.l.b16 %v813
    %v1845 = vunpack.c.l.b16 %v814
    %v1846 = vunpack.c.l.b16 %v815
    %v1847 = vunpack.c.l.b16 %v816
    %v1848 = vunpack.c.l.b16 %v817
    %v1849 = vunpack.c.l.b16 %v818
    %v1850 = vunpack.c.l.b16 %v819
    %v1851 = vunpack.c.l.b16 %v820
    %v1852 = vunpack.c.l.b16 %v821
    %v1853 = vunpack.c.l.b16 %v822
    %v1854 = vunpack.c.l.b16 %v823
    %v1855 = vunpack.c.l.b16 %v824
    %v1856 = vunpack.c.l.b16 %v825
    %v1857 = vunpack.c.l.b16 %v826
    %v1858 = vunpack.c.l.b16 %v827
    %v1859 = vunpack.c.l.b16 %v828
    %v1860 = vunpack.c.l.b16 %v829
    %v1861 = vunpack.c.l.b16 %v830
    %v1862 = vunpack.c.l.b16 %v831
    %v1863 = vunpack.c.l.b16 %v832
    %v1864 = vunpack.c.l.b16 %v833
    %v1865 = vunpack.c.l.b16 %v834
    %v1866 = vunpack.c.l.b16 %v835
    %v1867 = vunpack.c.l.b16 %v836
    %v1868 = vunpack.c.l.b16 %v837
    %v1869 = vunpack.c.l.b16 %v838
    %v1870 = vunpack.c.l.b16 %v839
    %v1871 = vunpack.c.l.b16 %v840
    %v1872 = vunpack.c.l.b16 %v841
    %v1873 = vunpack.c.l.b16 %v842
    %v1874 = vunpack.c.l.b16 %v843
    %v1875 = vunpack.c.l.b16 %v844
    %v1876 = vunpack.c.l.b16 %v845
    %v1877 = vunpack.c.l.b16 %v846
    %v1878 = vunpack.c.l.b16 %v847
    %v1879 = vunpack.c.l.b16 %v848
    %v1880 = vunpack.c.l.b16 %v849
    %v1881 = vunpack.c.l.b16 %v850
    %v1882 = vunpack.c.l.b16 %v851
    %v1883 = vunpack.c.l.b16 %v852
    %v1884 = vunpack.c.l.b16 %v853
    %v1885 = vunpack.c.l.b16 %v854
    %v1886 = vunpack.c.l.b16 %v855
    %v1887 = vunpack.c.l.b16 %v856
    %v1888 = vunpack.c.l.b16 %v857
    %v1889 = vunpack.c.l.b16 %v858
    %v1890 = vunpack.c.l.b16 %v859
    %v1891 = vunpack.c.l.b16 %v860
    %v1892 = vunpack.c.l.b16 %v861
    %v1893 = vunpack.c.l.b16 %v862
    %v1894 = vunpack.c.l.b16 %v863
    %v1895 = vunpack.c.l.b16 %v864
    %v1896 = vunpack.c.l.b16 %v865
    %v1897 = vunpack.c.l.b16 %v866
    %v1898 = vunpack.c.l.b16 %v867
    %v1899 = vunpack.c.l.b16 %v868
    %v1900 = vunpack.c.l.b16 %v869
    %v1901 = vunpack.c.l.b16 %v870
    %v1902 = vunpack.c.l.b16 %v871
    %v1903 = vunpack.c.l.b16 %v872
    %v1904 = vunpack.c.l.b16 %v873
    %v1905 = vunpack.c.l.b16 %v874
    %v1906 = vunpack.c.l.b16 %v875
    %v1907 = vunpack.c.l.b16 %v876
    %v1908 = vunpack.c.l.b16 %v877
    %v1909 = vunpack.c.l.b16 %v878
    %v1910 = vunpack.c.l.b16 %v879
    %v1911 = vunpack.c.l.b16 %v880
    %v1912 = vunpack.c.l.b16 %v881
    %v1913 = vunpack.c.l.b16 %v882
    %v1914 = vunpack.c.l.b16 %v883
    %v1915 = vunpack.c.l.b16 %v884
    %v1916 = vunpack.c.l.b16 %v885
    %v1917 = vunpack.c.l.b16 %v886
    %v1918 = vunpack.c.l.b16 %v887
    %v1919 = vunpack.c.l.b16 %v888
    %v1920 = vunpack.c.l.b16 %v889
    %v1921 = vunpack.c.l.b16 %v890
    %v1922 = vunpack.c.l.b16 %v891
    %v1923 = vunpack.c.l.b16 %v892
    %v1924 = vunpack.c.l.b16 %v893
    %v1925 = vunpack.c.l.b16 %v894
    %v1926 = vunpack.c.l.b16 %v895
    %v1927 = vunpack.c.l.b16 %v896
    %v1928 = vunpack.c.l.b16 %v897
    %v1929 = vunpack.c.l.b16 %v898
    %v1930 = vunpack.c.l.b16 %v899
    %v1931 = vunpack.c.l.b16 %v900
    %v1932 = vunpack.c.l.b16 %v901
    %v1933 = vunpack.c.l.b16 %v902
    %v1934 = vunpack.c.l.b16 %v903
    %v1935 = vunpack.c.l.b16 %v904
    %v1936 = vunpack.c.l.b16 %v905
    %v1937 = vunpack.c.l.b16 %v906
    %v1938 = vunpack.c.l.b16 %v907
    %v1939 = vunpack.c.l.b16 %v908
    %v1940 = vunpack.c.l.b16 %v909
    %v1941 = vunpack.c.l.b16 %v910
    %v1942 = vunpack.c.l.b16 %v911
    %v1943 = vunpack.c.l.b16 %v912
    %v1944 = vunpack.c.l.b16 %v913
    %v1945 = vunpack.c.l.b16 %v914
    %v1946 = vunpack.c.l.b16 %v915
    %v1947 = vunpack.c.l.b16 %v916
    %v1948 = vunpack.c.l.b16 %v917
    %v1949 = vunpack.c.l.b16 %v918
    %v1950 = vunpack.c.l.b16 %v919
    %v1951 = vunpack.c.l.b16 %v920
    %v1952 = vunpack.c.l.b16 %v921
    %v1953 = vunpack.c.l.b16 %v922
    %v1954 = vunpack.c.l.b16 %v923
    %v1955 = vunpack.c.l.b16 %v924
    %v1956 = vunpack.c.l.b16 %v925
    %v1957 = vunpack.c.l.b16 %v926
    %v1958 = vunpack.c.l.b16 %v927
    %v1959 = vunpack.c.l.b16 %v928
    %v1960 = vunpack.c.l.b16 %v929
    %v1961 = vunpack.c.l.b16 %v930
    %v1962 = vunpack.c.l.b16 %v931
    %v1963 = vunpack.c.l.b16 %v932
    %v1964 = vunpack.c.l.b16 %v933
    %v1965 = vunpack.c.l.b16 %v934
    %v1966 = vunpack.c.l.b16 %v935
    %v1967 = vunpack.c.l.b16 %v936
    %v1968 = vunpack.c.l.b16 %v937
    %v1969 = vunpack.c.l.b16 %v938
    %v1970 = vunpack.c.l.b16 %v939
    %v1971 = vunpack.c.l.b16 %v940
    %v1972 = vunpack.c.l.b16 %v941
    %v1973 = vunpack.c.l.b16 %v942
    %v1974 = vunpack.c.l.b16 %v943
    %v1975 = vunpack.c.l.b16 %v944
    %v1976 = vunpack.c.l.b16 %v945
    %v1977 = vunpack.c.l.b16 %v946
    %v1978 = vunpack.c.l.b16 %v947
    %v1979 = vunpack.c.l.b16 %v948
    %v1980 = vunpack.c.l.b16 %v949
    %v1981 = vpack.c.b16 %v1470, %v1469
    %v1982 = vpack.c.b16 %v1472, %v1471
    %v1983 = vpack.c.b16 %v1474, %v1473
    %v1984 = vpack.c.b16 %v1476, %v1475
    %v1985 = vpack.c.b16 %v1478, %v1477
    %v1986 = vpack.c.b16 %v1480, %v1479
    %v1987 = vpack.c.b16 %v1482, %v1481
    %v1988 = vpack.c.b16 %v1484, %v1483
    %v1989 = vpack.c.b16 %v1486, %v1485
    %v1990 = vpack.c.b16 %v1488, %v1487
    %v1991 = vpack.c.b16 %v1490, %v1489
    %v1992 = vpack.c.b16 %v1492, %v1491
    %v1993 = vpack.c.b16 %v1494, %v1493
    %v1994 = vpack.c.b16 %v1496, %v1495
    %v1995 = vpack.c.b16 %v1498, %v1497
    %v1996 = vpack.c.b16 %v1500, %v1499
    %v1997 = vpack.c.b16 %v1502, %v1501
    %v1998 = vpack.c.b16 %v1504, %v1503
    %v1999 = vpack.c.b16 %v1506, %v1505
    %v2000 = vpack.c.b16 %v1508, %v1507
    %v2001 = vpack.c.b16 %v1510, %v1509
    %v2002 = vpack.c.b16 %v1512, %v1511
    %v2003 = vpack.c.b16 %v1514, %v1513
    %v2004 = vpack.c.b16 %v1516, %v1515
    %v2005 = vpack.c.b16 %v1518, %v1517
    %v2006 = vpack.c.b16 %v1520, %v1519
    %v2007 = vpack.c.b16 %v1522, %v1521
    %v2008 = vpack.c.b16 %v1524, %v1523
    %v2009 = vpack.c.b16 %v1526, %v1525
    %v2010 = vpack.c.b16 %v1528, %v1527
    %v2011 = vpack.c.b16 %v1530, %v1529
    %v2012 = vpack.c.b16 %v1532, %v1531
    %v2013 = vpack.c.b16 %v1534, %v1533
    %v2014 = vpack.c.b16 %v1536, %v1535
    %v2015 = vpack.c.b16 %v1538, %v1537
    %v2016 = vpack.c.b16 %v1540, %v1539
    %v2017 = vpack.c.b16 %v1542, %v1541
    %v2018 = vpack.c.b16 %v1544, %v1543
    %v2019 = vpack.c.b16 %v1546, %v1545
    %v2020 = vpack.c.b16 %v1548, %v1547
    %v2021 = vpack.c.b16 %v1550, %v1549
    %v2022 = vpack.c.b16 %v1552, %v1551
    %v2023 = vpack.c.b16 %v1554, %v1553
    %v2024 = vpack.c.b16 %v1556, %v1555
    %v2025 = vpack.c.b16 %v1558, %v1557
    %v2026 = vpack.c.b16 %v1560, %v1559
    %v2027 = vpack.c.b16 %v1562, %v1561
    %v2028 = vpack.c.b16 %v1564, %v1563
    %v2029 = vpack.c.b16 %v1566, %v1565
    %v2030 = vpack.c.b16 %v1568, %v1567
    %v2031 = vpack.c.b16 %v1570, %v1569
    %v2032 = vpack.c.b16 %v1572, %v1571
    %v2033 = vpack.c.b16 %v1574, %v1573
    %v2034 = vpack.c.b16 %v1576, %v1575
    %v2035 = vpack.c.b16 %v1578, %v1577
    %v2036 = vpack.c.b16 %v1580, %v1579
    %v2037 = vpack.c.b16 %v1582, %v1581
    %v2038 = vpack.c.b16 %v1584, %v1583
    %v2039 = vpack.c.b16 %v1586, %v1585
    %v2040 = vpack.c.b16 %v1588, %v1587
    %v2041 = vpack.c.b16 %v1590, %v1589
    %v2042 = vpack.c.b16 %v1592, %v1591
    %v2043 = vpack.c.b16 %v1594, %v1593
    %v2044 = vpack.c.b16 %v1596, %v1595
    %v2045 = vpack.c.b16 %v1598, %v1597
    %v2046 = vpack.c.b16 %v1600, %v1599
    %v2047 = vpack.c.b16 %v1602, %v1601
    %v2048 = vpack.c.b16 %v1604, %v1603
    %v2049 = vpack.c.b16 %v1606, %v1605
    %v2050 = vpack.c.b16 %v1608, %v1607
    %v2051 = vpack.c.b16 %v1610, %v1609
    %v2052 = vpack.c.b16 %v1612, %v1611
    %v2053 = vpack.c.b16 %v1614, %v1613
    %v2054 = vpack.c.b16 %v1616, %v1615
    %v2055 = vpack.c.b16 %v1618, %v1617
    %v2056 = vpack.c.b16 %v1620, %v1619
    %v2057 = vpack.c.b16 %v1622, %v1621
    %v2058 = vpack.c.b16 %v1624, %v1623
    %v2059 = vpack.c.b16 %v1626, %v1625
    %v2060 = vpack.c.b16 %v1628, %v1627
    %v2061 = vpack.c.b16 %v1630, %v1629
    %v2062 = vpack.c.b16 %v1632, %v1631
    %v2063 = vpack.c.b16 %v1634, %v1633
    %v2064 = vpack.c.b16 %v1636, %v1635
    %v2065 = vpack.c.b16 %v1638, %v1637
    %v2066 = vpack.c.b16 %v1640, %v1639
    %v2067 = vpack.c.b16 %v1642, %v1641
    %v2068 = vpack.c.b16 %v1644, %v1643
    %v2069 = vpack.c.b16 %v1646, %v1645
    %v2070 = vpack.c.b16 %v1648, %v1647
    %v2071 = vpack.c.b16 %v1650, %v1649
    %v2072 = vpack.c.b16 %v1652, %v1651
    %v2073 = vpack.c.b16 %v1654, %v1653
    %v2074 = vpack.c.b16 %v1656, %v1655
    %v2075 = vpack.c.b16 %v1658, %v1657
    %v2076 = vpack.c.b16 %v1660, %v1659
    %v2077 = vpack.c.b16 %v1662, %v1661
    %v2078 = vpack.c.b16 %v1664, %v1663
    %v2079 = vpack.c.b16 %v1666, %v1665
    %v2080 = vpack.c.b16 %v1668, %v1667
    %v2081 = vpack.c.b16 %v1670, %v1669
    %v2082 = vpack.c.b16 %v1672, %v1671
    %v2083 = vpack.c.b16 %v1674, %v1673
    %v2084 = vpack.c.b16 %v1676, %v1675
    %v2085 = vpack.c.b16 %v1678, %v1677
    %v2086 = vpack.c.b16 %v1680, %v1679
    %v2087 = vpack.c.b16 %v1682, %v1681
    %v2088 = vpack.c.b16 %v1684, %v1683
    %v2089 = vpack.c.b16 %v1686, %v1685
    %v2090 = vpack.c.b16 %v1688, %v1687
    %v2091 = vpack.c.b16 %v1690, %v1689
    %v2092 = vpack.c.b16 %v1692, %v1691
    %v2093 = vpack.c.b16 %v1694, %v1693
    %v2094 = vpack.c.b16 %v1696, %v1695
    %v2095 = vpack.c.b16 %v1698, %v1697
    %v2096 = vpack.c.b16 %v1700, %v1699
    %v2097 = vpack.c.b16 %v1702, %v1701
    %v2098 = vpack.c.b16 %v1704, %v1703
    %v2099 = vpack.c.b16 %v1706, %v1705
    %v2100 = vpack.c.b16 %v1708, %v1707
    %v2101 = vpack.c.b16 %v1710, %v1709
    %v2102 = vpack.c.b16 %v1712, %v1711
    %v2103 = vpack.c.b16 %v1714, %v1713
    %v2104 = vpack.c.b16 %v1716, %v1715
    %v2105 = vpack.c.b16 %v1718, %v1717
    %v2106 = vpack.c.b16 %v1720, %v1719
    %v2107 = vpack.c.b16 %v1722, %v1721
    %v2108 = vpack.c.b16 %v1724, %v1723
    %v2109 = vpack.c.b16 %v1726, %v1725
    %v2110 = vpack.c.b16 %v1728, %v1727
    %v2111 = vpack.c.b16 %v1730, %v1729
    %v2112 = vpack.c.b16 %v1732, %v1731
    %v2113 = vpack.c.b16 %v1734, %v1733
    %v2114 = vpack.c.b16 %v1736, %v1735
    %v2115 = vpack.c.b16 %v1738, %v1737
    %v2116 = vpack.c.b16 %v1740, %v1739
    %v2117 = vpack.c.b16 %v1742, %v1741
    %v2118 = vpack.c.b16 %v1744, %v1743
    %v2119 = vpack.c.b16 %v1746, %v1745
    %v2120 = vpack.c.b16 %v1748, %v1747
    %v2121 = vpack.c.b16 %v1750, %v1749
    %v2122 = vpack.c.b16 %v1752, %v1751
    %v2123 = vpack.c.b16 %v1754, %v1753
    %v2124 = vpack.c.b16 %v1756, %v1755
    %v2125 = vpack.c.b16 %v1758, %v1757
    %v2126 = vpack.c.b16 %v1760, %v1759
    %v2127 = vpack.c.b16 %v1762, %v1761
    %v2128 = vpack.c.b16 %v1764, %v1763
    %v2129 = vpack.c.b16 %v1766, %v1765
    %v2130 = vpack.c.b16 %v1768, %v1767
    %v2131 = vpack.c.b16 %v1770, %v1769
    %v2132 = vpack.c.b16 %v1772, %v1771
    %v2133 = vpack.c.b16 %v1774, %v1773
    %v2134 = vpack.c.b16 %v1776, %v1775
    %v2135 = vpack.c.b16 %v1778, %v1777
    %v2136 = vpack.c.b16 %v1780, %v1779
    %v2137 = vpack.c.b16 %v1782, %v1781
    %v2138 = vpack.c.b16 %v1784, %v1783
    %v2139 = vpack.c.b16 %v1786, %v1785
    %v2140 = vpack.c.b16 %v1788, %v1787
    %v2141 = vpack.c.b16 %v1790, %v1789
    %v2142 = vpack.c.b16 %v1792, %v1791
    %v2143 = vpack.c.b16 %v1794, %v1793
    %v2144 = vpack.c.b16 %v1796, %v1795
    %v2145 = vpack.c.b16 %v1798, %v1797
    %v2146 = vpack.c.b16 %v1800, %v1799
    %v2147 = vpack.c.b16 %v1802, %v1801
    %v2148 = vpack.c.b16 %v1804, %v1803
    %v2149 = vpack.c.b16 %v1806, %v1805
    %v2150 = vpack.c.b16 %v1808, %v1807
    %v2151 = vpack.c.b16 %v1810, %v1809
    %v2152 = vpack.c.b16 %v1812, %v1811
    %v2153 = vpack.c.b16 %v1814, %v1813
    %v2154 = vpack.c.b16 %v1816, %v1815
    %v2155 = vpack.c.b16 %v1818, %v1817
    %v2156 = vpack.c.b16 %v1820, %v1819
    %v2157 = vpack.c.b16 %v1822, %v1821
    %v2158 = vpack.c.b16 %v1824, %v1823
    %v2159 = vpack.c.b16 %v1826, %v1825
    %v2160 = vpack.c.b16 %v1828, %v1827
    %v2161 = vpack.c.b16 %v1830, %v1829
    %v2162 = vpack.c.b16 %v1832, %v1831
    %v2163 = vpack.c.b16 %v1834, %v1833
    %v2164 = vpack.c.b16 %v1836, %v1835
    %v2165 = vpack.c.b16 %v1838, %v1837
    %v2166 = vpack.c.b16 %v1840, %v1839
    %v2167 = vpack.c.b16 %v1842, %v1841
    %v2168 = vpack.c.b16 %v1844, %v1843
    %v2169 = vpack.c.b16 %v1846, %v1845
    %v2170 = vpack.c.b16 %v1848, %v1847
    %v2171 = vpack.c.b16 %v1850, %v1849
    %v2172 = vpack.c.b16 %v1852, %v1851
    %v2173 = vpack.c.b16 %v1854, %v1853
    %v2174 = vpack.c.b16 %v1856, %v1855
    %v2175 = vpack.c.b16 %v1858, %v1857
    %v2176 = vpack.c.b16 %v1860, %v1859
    %v2177 = vpack.c.b16 %v1862, %v1861
    %v2178 = vpack.c.b16 %v1864, %v1863
    %v2179 = vpack.c.b16 %v1866, %v1865
    %v2180 = vpack.c.b16 %v1868, %v1867
    %v2181 = vpack.c.b16 %v1870, %v1869
    %v2182 = vpack.c.b16 %v1872, %v1871
    %v2183 = vpack.c.b16 %v1874, %v1873
    %v2184 = vpack.c.b16 %v1876, %v1875
    %v2185 = vpack.c.b16 %v1878, %v1877
    %v2186 = vpack.c.b16 %v1880, %v1879
    %v2187 = vpack.c.b16 %v1882, %v1881
    %v2188 = vpack.c.b16 %v1884, %v1883
    %v2189 = vpack.c.b16 %v1886, %v1885
    %v2190 = vpack.c.b16 %v1888, %v1887
    %v2191 = vpack.c.b16 %v1890, %v1889
    %v2192 = vpack.c.b16 %v1892, %v1891
    %v2193 = vpack.c.b16 %v1894, %v1893
    %v2194 = vpack.c.b16 %v1896, %v1895
    %v2195 = vpack.c.b16 %v1898, %v1897
    %v2196 = vpack.c.b16 %v1900, %v1899
    %v2197 = vpack.c.b16 %v1902, %v1901
    %v2198 = vpack.c.b16 %v1904, %v1903
    %v2199 = vpack.c.b16 %v1906, %v1905
    %v2200 = vpack.c.b16 %v1908, %v1907
    %v2201 = vpack.c.b16 %v1910, %v1909
    %v2202 = vpack.c.b16 %v1912, %v1911
    %v2203 = vpack.c.b16 %v1914, %v1913
    %v2204 = vpack.c.b16 %v1916, %v1915
    %v2205 = vpack.c.b16 %v1918, %v1917
    %v2206 = vpack.c.b16 %v1920, %v1919
    %v2207 = vpack.c.b16 %v1922, %v1921
    %v2208 = vpack.c.b16 %v1924, %v1923
    %v2209 = vpack.c.b16 %v1926, %v1925
    %v2210 = vpack.c.b16 %v1928, %v1927
    %v2211 = vpack.c.b16 %v1930, %v1929
    %v2212 = vpack.c.b16 %v1932, %v1931
    %v2213 = vpack.c.b16 %v1934, %v1933
    %v2214 = vpack.c.b16 %v1936, %v1935
    %v2215 = vpack.c.b16 %v1938, %v1937
    %v2216 = vpack.c.b16 %v1940, %v1939
    %v2217 = vpack.c.b16 %v1942, %v1941
    %v2218 = vpack.c.b16 %v1944, %v1943
    %v2219 = vpack.c.b16 %v1946, %v1945
    %v2220 = vpack.c.b16 %v1948, %v1947
    %v2221 = vpack.c.b16 %v1950, %v1949
    %v2222 = vpack.c.b16 %v1952, %v1951
    %v2223 = vpack.c.b16 %v1954, %v1953
    %v2224 = vpack.c.b16 %v1956, %v1955
    %v2225 = vpack.c.b16 %v1958, %v1957
    %v2226 = vpack.c.b16 %v1960, %v1959
    %v2227 = vpack.c.b16 %v1962, %v1961
    %v2228 = vpack.c.b16 %v1964, %v1963
    %v2229 = vpack.c.b16 %v1966, %v1965
    %v2230 = vpack.c.b16 %v1968, %v1967
    %v2231 = vpack.c.b16 %v1970, %v1969
    %v2232 = vpack.c.b16 %v1972, %v1971
    %v2233 = vpack.c.b16 %v1974, %v1973
    %v2234 = vpack.c.b16 %v1976, %v1975
    %v2235 = vpack.c.b16 %v1978, %v1977
    %v2236 = vpack.c.b16 %v1980, %v1979
    %2493 = vmatprep.subr.bf16.mxu0 0
    %2494 = vmatpush1.bf16.msra.mxu0 %v1981
    %2495 = vmatprep.subr.bf16.mxu0 0
    %2496 = vmatpush1.bf16.msra.mxu0 %v1982
    %2497 = vmatprep.subr.bf16.mxu0 0
    %2498 = vmatpush1.bf16.msra.mxu0 %v1983
    %2499 = vmatprep.subr.bf16.mxu0 0
    %2500 = vmatpush1.bf16.msra.mxu0 %v1984
    %2501 = vmatprep.subr.bf16.mxu0 0
    %2502 = vmatpush1.bf16.msra.mxu0 %v1985
    %2503 = vmatprep.subr.bf16.mxu0 0
    %2504 = vmatpush1.bf16.msra.mxu0 %v1986
    %2505 = vmatprep.subr.bf16.mxu0 0
    %2506 = vmatpush1.bf16.msra.mxu0 %v1987
    %2507 = vmatprep.subr.bf16.mxu0 0
    %2508 = vmatpush1.bf16.msra.mxu0 %v1988
    %2509 = vmatprep.subr.bf16.mxu0 0
    %2510 = vmatpush1.bf16.msra.mxu0 %v1989
    %2511 = vmatprep.subr.bf16.mxu0 0
    %2512 = vmatpush1.bf16.msra.mxu0 %v1990
    %2513 = vmatprep.subr.bf16.mxu0 0
    %2514 = vmatpush1.bf16.msra.mxu0 %v1991
    %2515 = vmatprep.subr.bf16.mxu0 0
    %2516 = vmatpush1.bf16.msra.mxu0 %v1992
    %2517 = vmatprep.subr.bf16.mxu0 0
    %2518 = vmatpush1.bf16.msra.mxu0 %v1993
    %2519 = vmatprep.subr.bf16.mxu0 0
    %2520 = vmatpush1.bf16.msra.mxu0 %v1994
    %2521 = vmatprep.subr.bf16.mxu0 0
    %2522 = vmatpush1.bf16.msra.mxu0 %v1995
    %2523 = vmatprep.subr.bf16.mxu0 0
    %2524 = vmatpush1.bf16.msra.mxu0 %v1996
    %2525 = vmatprep.mubr.bf16.mxu0 %v407
    %2526 = vmatmul.mubr.bf16.gmra.mrb[0].mxu0 %v406
    %v2527 = vpop.f32.mrb[0].mxu0
    %v2528 = vadd.f32 %v955, %v2527
    %v2529 = vpop.f32.mrb[0].mxu0
    %v2530 = vpop.f32.mrb[0].mxu0
    %v2531 = vpop.f32.mrb[0].mxu0
    %2532 = vdwg.mxu0
    %2533 = vmatprep.subr.bf16.mxu0 0
    %2534 = vmatpush1.bf16.msra.mxu0 %v1997
    %2535 = vmatprep.subr.bf16.mxu0 0
    %2536 = vmatpush1.bf16.msra.mxu0 %v1998
    %2537 = vmatprep.subr.bf16.mxu0 0
    %2538 = vmatpush1.bf16.msra.mxu0 %v1999
    %2539 = vmatprep.subr.bf16.mxu0 0
    %2540 = vmatpush1.bf16.msra.mxu0 %v2000
    %2541 = vmatprep.subr.bf16.mxu0 0
    %2542 = vmatpush1.bf16.msra.mxu0 %v2001
    %2543 = vmatprep.subr.bf16.mxu0 0
    %2544 = vmatpush1.bf16.msra.mxu0 %v2002
    %2545 = vmatprep.subr.bf16.mxu0 0
    %2546 = vmatpush1.bf16.msra.mxu0 %v2003
    %2547 = vmatprep.subr.bf16.mxu0 0
    %2548 = vmatpush1.bf16.msra.mxu0 %v2004
    %2549 = vmatprep.subr.bf16.mxu0 0
    %2550 = vmatpush1.bf16.msra.mxu0 %v2005
    %2551 = vmatprep.subr.bf16.mxu0 0
    %2552 = vmatpush1.bf16.msra.mxu0 %v2006
    %2553 = vmatprep.subr.bf16.mxu0 0
    %2554 = vmatpush1.bf16.msra.mxu0 %v2007
    %2555 = vmatprep.subr.bf16.mxu0 0
    %2556 = vmatpush1.bf16.msra.mxu0 %v2008
    %2557 = vmatprep.subr.bf16.mxu0 0
    %2558 = vmatpush1.bf16.msra.mxu0 %v2009
    %2559 = vmatprep.subr.bf16.mxu0 0
    %2560 = vmatpush1.bf16.msra.mxu0 %v2010
    %2561 = vmatprep.subr.bf16.mxu0 0
    %2562 = vmatpush1.bf16.msra.mxu0 %v2011
    %2563 = vmatprep.subr.bf16.mxu0 0
    %2564 = vmatpush1.bf16.msra.mxu0 %v2012
    %2565 = vmatprep.mubr.bf16.mxu0 %v409
    %2566 = vmatmul.mubr.bf16.gmra.mrb[0].mxu0 %v408
    %v2567 = vpop.f32.mrb[0].mxu0
    %v2568 = vadd.f32 %v2528, %v2567
    %v2569 = vpop.f32.mrb[0].mxu0
    %v2570 = vpop.f32.mrb[0].mxu0
    %v2571 = vpop.f32.mrb[0].mxu0
    %2572 = vdwg.mxu0
    %2573 = vmatprep.subr.bf16.mxu0 0
    %2574 = vmatpush1.bf16.msra.mxu0 %v2013
    %2575 = vmatprep.subr.bf16.mxu0 0
    %2576 = vmatpush1.bf16.msra.mxu0 %v2014
    %2577 = vmatprep.subr.bf16.mxu0 0
    %2578 = vmatpush1.bf16.msra.mxu0 %v2015
    %2579 = vmatprep.subr.bf16.mxu0 0
    %2580 = vmatpush1.bf16.msra.mxu0 %v2016
    %2581 = vmatprep.subr.bf16.mxu0 0
    %2582 = vmatpush1.bf16.msra.mxu0 %v2017
    %2583 = vmatprep.subr.bf16.mxu0 0
    %2584 = vmatpush1.bf16.msra.mxu0 %v2018
    %2585 = vmatprep.subr.bf16.mxu0 0
    %2586 = vmatpush1.bf16.msra.mxu0 %v2019
    %2587 = vmatprep.subr.bf16.mxu0 0
    %2588 = vmatpush1.bf16.msra.mxu0 %v2020
    %2589 = vmatprep.subr.bf16.mxu0 0
    %2590 = vmatpush1.bf16.msra.mxu0 %v2021
    %2591 = vmatprep.subr.bf16.mxu0 0
    %2592 = vmatpush1.bf16.msra.mxu0 %v2022
    %2593 = vmatprep.subr.bf16.mxu0 0
    %2594 = vmatpush1.bf16.msra.mxu0 %v2023
    %2595 = vmatprep.subr.bf16.mxu0 0
    %2596 = vmatpush1.bf16.msra.mxu0 %v2024
    %2597 = vmatprep.subr.bf16.mxu0 0
    %2598 = vmatpush1.bf16.msra.mxu0 %v2025
    %2599 = vmatprep.subr.bf16.mxu0 0
    %2600 = vmatpush1.bf16.msra.mxu0 %v2026
    %2601 = vmatprep.subr.bf16.mxu0 0
    %2602 = vmatpush1.bf16.msra.mxu0 %v2027
    %2603 = vmatprep.subr.bf16.mxu0 0
    %2604 = vmatpush1.bf16.msra.mxu0 %v2028
    %2605 = vmatprep.mubr.bf16.mxu0 %v411
    %2606 = vmatmul.mubr.bf16.gmra.mrb[0].mxu0 %v410
    %v2607 = vpop.f32.mrb[0].mxu0
    %v2608 = vadd.f32 %v2568, %v2607
    %v2609 = vpop.f32.mrb[0].mxu0
    %v2610 = vpop.f32.mrb[0].mxu0
    %v2611 = vpop.f32.mrb[0].mxu0
    %2612 = vdwg.mxu0
    %2613 = vmatprep.subr.bf16.mxu0 0
    %2614 = vmatpush1.bf16.msra.mxu0 %v2029
    %2615 = vmatprep.subr.bf16.mxu0 0
    %2616 = vmatpush1.bf16.msra.mxu0 %v2030
    %2617 = vmatprep.subr.bf16.mxu0 0
    %2618 = vmatpush1.bf16.msra.mxu0 %v2031
    %2619 = vmatprep.subr.bf16.mxu0 0
    %2620 = vmatpush1.bf16.msra.mxu0 %v2032
    %2621 = vmatprep.subr.bf16.mxu0 0
    %2622 = vmatpush1.bf16.msra.mxu0 %v2033
    %2623 = vmatprep.subr.bf16.mxu0 0
    %2624 = vmatpush1.bf16.msra.mxu0 %v2034
    %2625 = vmatprep.subr.bf16.mxu0 0
    %2626 = vmatpush1.bf16.msra.mxu0 %v2035
    %2627 = vmatprep.subr.bf16.mxu0 0
    %2628 = vmatpush1.bf16.msra.mxu0 %v2036
    %2629 = vmatprep.subr.bf16.mxu0 0
    %2630 = vmatpush1.bf16.msra.mxu0 %v2037
    %2631 = vmatprep.subr.bf16.mxu0 0
    %2632 = vmatpush1.bf16.msra.mxu0 %v2038
    %2633 = vmatprep.subr.bf16.mxu0 0
    %2634 = vmatpush1.bf16.msra.mxu0 %v2039
    %2635 = vmatprep.subr.bf16.mxu0 0
    %2636 = vmatpush1.bf16.msra.mxu0 %v2040
    %2637 = vmatprep.subr.bf16.mxu0 0
    %2638 = vmatpush1.bf16.msra.mxu0 %v2041
    %2639 = vmatprep.subr.bf16.mxu0 0
    %2640 = vmatpush1.bf16.msra.mxu0 %v2042
    %2641 = vmatprep.subr.bf16.mxu0 0
    %2642 = vmatpush1.bf16.msra.mxu0 %v2043
    %2643 = vmatprep.subr.bf16.mxu0 0
    %2644 = vmatpush1.bf16.msra.mxu0 %v2044
    %2645 = vmatprep.mubr.bf16.mxu0 %v413
    %2646 = vmatmul.mubr.bf16.gmra.mrb[0].mxu0 %v412
    %v2647 = vpop.f32.mrb[0].mxu0
    %v2648 = vadd.f32 %v2608, %v2647
    %v2649 = vpop.f32.mrb[0].mxu0
    %v2650 = vpop.f32.mrb[0].mxu0
    %v2651 = vpop.f32.mrb[0].mxu0
    %2652 = vdwg.mxu0
    %2653 = vmatprep.subr.bf16.mxu0 0
    %2654 = vmatpush1.bf16.msra.mxu0 %v2045
    %2655 = vmatprep.subr.bf16.mxu0 0
    %2656 = vmatpush1.bf16.msra.mxu0 %v2046
    %2657 = vmatprep.subr.bf16.mxu0 0
    %2658 = vmatpush1.bf16.msra.mxu0 %v2047
    %2659 = vmatprep.subr.bf16.mxu0 0
    %2660 = vmatpush1.bf16.msra.mxu0 %v2048
    %2661 = vmatprep.subr.bf16.mxu0 0
    %2662 = vmatpush1.bf16.msra.mxu0 %v2049
    %2663 = vmatprep.subr.bf16.mxu0 0
    %2664 = vmatpush1.bf16.msra.mxu0 %v2050
    %2665 = vmatprep.subr.bf16.mxu0 0
    %2666 = vmatpush1.bf16.msra.mxu0 %v2051
    %2667 = vmatprep.subr.bf16.mxu0 0
    %2668 = vmatpush1.bf16.msra.mxu0 %v2052
    %2669 = vmatprep.subr.bf16.mxu0 0
    %2670 = vmatpush1.bf16.msra.mxu0 %v2053
    %2671 = vmatprep.subr.bf16.mxu0 0
    %2672 = vmatpush1.bf16.msra.mxu0 %v2054
    %2673 = vmatprep.subr.bf16.mxu0 0
    %2674 = vmatpush1.bf16.msra.mxu0 %v2055
    %2675 = vmatprep.subr.bf16.mxu0 0
    %2676 = vmatpush1.bf16.msra.mxu0 %v2056
    %2677 = vmatprep.subr.bf16.mxu0 0
    %2678 = vmatpush1.bf16.msra.mxu0 %v2057
    %2679 = vmatprep.subr.bf16.mxu0 0
    %2680 = vmatpush1.bf16.msra.mxu0 %v2058
    %2681 = vmatprep.subr.bf16.mxu0 0
    %2682 = vmatpush1.bf16.msra.mxu0 %v2059
    %2683 = vmatprep.subr.bf16.mxu0 0
    %2684 = vmatpush1.bf16.msra.mxu0 %v2060
    %2685 = vmatprep.mubr.bf16.mxu0 %v415
    %2686 = vmatmul.mubr.bf16.gmra.mrb[0].mxu0 %v414
    %v2687 = vpop.f32.mrb[0].mxu0
    %v2688 = vadd.f32 %v2648, %v2687
    %v2689 = vpop.f32.mrb[0].mxu0
    %v2690 = vpop.f32.mrb[0].mxu0
    %v2691 = vpop.f32.mrb[0].mxu0
    %2692 = vdwg.mxu0
    %2693 = vmatprep.subr.bf16.mxu0 0
    %2694 = vmatpush1.bf16.msra.mxu0 %v2061
    %2695 = vmatprep.subr.bf16.mxu0 0
    %2696 = vmatpush1.bf16.msra.mxu0 %v2062
    %2697 = vmatprep.subr.bf16.mxu0 0
    %2698 = vmatpush1.bf16.msra.mxu0 %v2063
    %2699 = vmatprep.subr.bf16.mxu0 0
    %2700 = vmatpush1.bf16.msra.mxu0 %v2064
    %2701 = vmatprep.subr.bf16.mxu0 0
    %2702 = vmatpush1.bf16.msra.mxu0 %v2065
    %2703 = vmatprep.subr.bf16.mxu0 0
    %2704 = vmatpush1.bf16.msra.mxu0 %v2066
    %2705 = vmatprep.subr.bf16.mxu0 0
    %2706 = vmatpush1.bf16.msra.mxu0 %v2067
    %2707 = vmatprep.subr.bf16.mxu0 0
    %2708 = vmatpush1.bf16.msra.mxu0 %v2068
    %2709 = vmatprep.subr.bf16.mxu0 0
    %2710 = vmatpush1.bf16.msra.mxu0 %v2069
    %2711 = vmatprep.subr.bf16.mxu0 0
    %2712 = vmatpush1.bf16.msra.mxu0 %v2070
    %2713 = vmatprep.subr.bf16.mxu0 0
    %2714 = vmatpush1.bf16.msra.mxu0 %v2071
    %2715 = vmatprep.subr.bf16.mxu0 0
    %2716 = vmatpush1.bf16.msra.mxu0 %v2072
    %2717 = vmatprep.subr.bf16.mxu0 0
    %2718 = vmatpush1.bf16.msra.mxu0 %v2073
    %2719 = vmatprep.subr.bf16.mxu0 0
    %2720 = vmatpush1.bf16.msra.mxu0 %v2074
    %2721 = vmatprep.subr.bf16.mxu0 0
    %2722 = vmatpush1.bf16.msra.mxu0 %v2075
    %2723 = vmatprep.subr.bf16.mxu0 0
    %2724 = vmatpush1.bf16.msra.mxu0 %v2076
    %2725 = vmatprep.mubr.bf16.mxu0 %v417
    %2726 = vmatmul.mubr.bf16.gmra.mrb[0].mxu0 %v416
    %v2727 = vpop.f32.mrb[0].mxu0
    %v2728 = vadd.f32 %v2688, %v2727
    %v2729 = vpop.f32.mrb[0].mxu0
    %v2730 = vpop.f32.mrb[0].mxu0
    %v2731 = vpop.f32.mrb[0].mxu0
    %2732 = vdwg.mxu0
    %2733 = vmatprep.subr.bf16.mxu0 0
    %2734 = vmatpush1.bf16.msra.mxu0 %v2077
    %2735 = vmatprep.subr.bf16.mxu0 0
    %2736 = vmatpush1.bf16.msra.mxu0 %v2078
    %2737 = vmatprep.subr.bf16.mxu0 0
    %2738 = vmatpush1.bf16.msra.mxu0 %v2079
    %2739 = vmatprep.subr.bf16.mxu0 0
    %2740 = vmatpush1.bf16.msra.mxu0 %v2080
    %2741 = vmatprep.subr.bf16.mxu0 0
    %2742 = vmatpush1.bf16.msra.mxu0 %v2081
    %2743 = vmatprep.subr.bf16.mxu0 0
    %2744 = vmatpush1.bf16.msra.mxu0 %v2082
    %2745 = vmatprep.subr.bf16.mxu0 0
    %2746 = vmatpush1.bf16.msra.mxu0 %v2083
    %2747 = vmatprep.subr.bf16.mxu0 0
    %2748 = vmatpush1.bf16.msra.mxu0 %v2084
    %2749 = vmatprep.subr.bf16.mxu0 0
    %2750 = vmatpush1.bf16.msra.mxu0 %v2085
    %2751 = vmatprep.subr.bf16.mxu0 0
    %2752 = vmatpush1.bf16.msra.mxu0 %v2086
    %2753 = vmatprep.subr.bf16.mxu0 0
    %2754 = vmatpush1.bf16.msra.mxu0 %v2087
    %2755 = vmatprep.subr.bf16.mxu0 0
    %2756 = vmatpush1.bf16.msra.mxu0 %v2088
    %2757 = vmatprep.subr.bf16.mxu0 0
    %2758 = vmatpush1.bf16.msra.mxu0 %v2089
    %2759 = vmatprep.subr.bf16.mxu0 0
    %2760 = vmatpush1.bf16.msra.mxu0 %v2090
    %2761 = vmatprep.subr.bf16.mxu0 0
    %2762 = vmatpush1.bf16.msra.mxu0 %v2091
    %2763 = vmatprep.subr.bf16.mxu0 0
    %2764 = vmatpush1.bf16.msra.mxu0 %v2092
    %2765 = vmatprep.mubr.bf16.mxu0 %v419
    %2766 = vmatmul.mubr.bf16.gmra.mrb[0].mxu0 %v418
    %v2767 = vpop.f32.mrb[0].mxu0
    %v2768 = vadd.f32 %v2728, %v2767
    %v2769 = vpop.f32.mrb[0].mxu0
    %v2770 = vpop.f32.mrb[0].mxu0
    %v2771 = vpop.f32.mrb[0].mxu0
    %2772 = vdwg.mxu0
    %2773 = vmatprep.subr.bf16.mxu0 0
    %2774 = vmatpush1.bf16.msra.mxu0 %v2093
    %2775 = vmatprep.subr.bf16.mxu0 0
    %2776 = vmatpush1.bf16.msra.mxu0 %v2094
    %2777 = vmatprep.subr.bf16.mxu0 0
    %2778 = vmatpush1.bf16.msra.mxu0 %v2095
    %2779 = vmatprep.subr.bf16.mxu0 0
    %2780 = vmatpush1.bf16.msra.mxu0 %v2096
    %2781 = vmatprep.subr.bf16.mxu0 0
    %2782 = vmatpush1.bf16.msra.mxu0 %v2097
    %2783 = vmatprep.subr.bf16.mxu0 0
    %2784 = vmatpush1.bf16.msra.mxu0 %v2098
    %2785 = vmatprep.subr.bf16.mxu0 0
    %2786 = vmatpush1.bf16.msra.mxu0 %v2099
    %2787 = vmatprep.subr.bf16.mxu0 0
    %2788 = vmatpush1.bf16.msra.mxu0 %v2100
    %2789 = vmatprep.subr.bf16.mxu0 0
    %2790 = vmatpush1.bf16.msra.mxu0 %v2101
    %2791 = vmatprep.subr.bf16.mxu0 0
    %2792 = vmatpush1.bf16.msra.mxu0 %v2102
    %2793 = vmatprep.subr.bf16.mxu0 0
    %2794 = vmatpush1.bf16.msra.mxu0 %v2103
    %2795 = vmatprep.subr.bf16.mxu0 0
    %2796 = vmatpush1.bf16.msra.mxu0 %v2104
    %2797 = vmatprep.subr.bf16.mxu0 0
    %2798 = vmatpush1.bf16.msra.mxu0 %v2105
    %2799 = vmatprep.subr.bf16.mxu0 0
    %2800 = vmatpush1.bf16.msra.mxu0 %v2106
    %2801 = vmatprep.subr.bf16.mxu0 0
    %2802 = vmatpush1.bf16.msra.mxu0 %v2107
    %2803 = vmatprep.subr.bf16.mxu0 0
    %2804 = vmatpush1.bf16.msra.mxu0 %v2108
    %2805 = vmatprep.mubr.bf16.mxu0 %v421
    %2806 = vmatmul.mubr.bf16.gmra.mrb[0].mxu0 %v420
    %v2807 = vpop.f32.mrb[0].mxu0
    %v2808 = vadd.f32 %v2768, %v2807
    %v2809 = vpop.f32.mrb[0].mxu0
    %v2810 = vpop.f32.mrb[0].mxu0
    %v2811 = vpop.f32.mrb[0].mxu0
    %2812 = vdwg.mxu0
    %2813 = vmatprep.subr.bf16.mxu0 0
    %2814 = vmatpush1.bf16.msra.mxu0 %v2109
    %2815 = vmatprep.subr.bf16.mxu0 0
    %2816 = vmatpush1.bf16.msra.mxu0 %v2110
    %2817 = vmatprep.subr.bf16.mxu0 0
    %2818 = vmatpush1.bf16.msra.mxu0 %v2111
    %2819 = vmatprep.subr.bf16.mxu0 0
    %2820 = vmatpush1.bf16.msra.mxu0 %v2112
    %2821 = vmatprep.subr.bf16.mxu0 0
    %2822 = vmatpush1.bf16.msra.mxu0 %v2113
    %2823 = vmatprep.subr.bf16.mxu0 0
    %2824 = vmatpush1.bf16.msra.mxu0 %v2114
    %2825 = vmatprep.subr.bf16.mxu0 0
    %2826 = vmatpush1.bf16.msra.mxu0 %v2115
    %2827 = vmatprep.subr.bf16.mxu0 0
    %2828 = vmatpush1.bf16.msra.mxu0 %v2116
    %2829 = vmatprep.subr.bf16.mxu0 0
    %2830 = vmatpush1.bf16.msra.mxu0 %v2117
    %2831 = vmatprep.subr.bf16.mxu0 0
    %2832 = vmatpush1.bf16.msra.mxu0 %v2118
    %2833 = vmatprep.subr.bf16.mxu0 0
    %2834 = vmatpush1.bf16.msra.mxu0 %v2119
    %2835 = vmatprep.subr.bf16.mxu0 0
    %2836 = vmatpush1.bf16.msra.mxu0 %v2120
    %2837 = vmatprep.subr.bf16.mxu0 0
    %2838 = vmatpush1.bf16.msra.mxu0 %v2121
    %2839 = vmatprep.subr.bf16.mxu0 0
    %2840 = vmatpush1.bf16.msra.mxu0 %v2122
    %2841 = vmatprep.subr.bf16.mxu0 0
    %2842 = vmatpush1.bf16.msra.mxu0 %v2123
    %2843 = vmatprep.subr.bf16.mxu0 0
    %2844 = vmatpush1.bf16.msra.mxu0 %v2124
    %2845 = vmatprep.mubr.bf16.mxu0 %v423
    %2846 = vmatmul.mubr.bf16.gmra.mrb[0].mxu0 %v422
    %v2847 = vpop.f32.mrb[0].mxu0
    %v2848 = vadd.f32 %v2808, %v2847
    %v2849 = vpop.f32.mrb[0].mxu0
    %v2850 = vpop.f32.mrb[0].mxu0
    %v2851 = vpop.f32.mrb[0].mxu0
    %2852 = vdwg.mxu0
    %2853 = vmatprep.subr.bf16.mxu0 0
    %2854 = vmatpush1.bf16.msra.mxu0 %v2125
    %2855 = vmatprep.subr.bf16.mxu0 0
    %2856 = vmatpush1.bf16.msra.mxu0 %v2126
    %2857 = vmatprep.subr.bf16.mxu0 0
    %2858 = vmatpush1.bf16.msra.mxu0 %v2127
    %2859 = vmatprep.subr.bf16.mxu0 0
    %2860 = vmatpush1.bf16.msra.mxu0 %v2128
    %2861 = vmatprep.subr.bf16.mxu0 0
    %2862 = vmatpush1.bf16.msra.mxu0 %v2129
    %2863 = vmatprep.subr.bf16.mxu0 0
    %2864 = vmatpush1.bf16.msra.mxu0 %v2130
    %2865 = vmatprep.subr.bf16.mxu0 0
    %2866 = vmatpush1.bf16.msra.mxu0 %v2131
    %2867 = vmatprep.subr.bf16.mxu0 0
    %2868 = vmatpush1.bf16.msra.mxu0 %v2132
    %2869 = vmatprep.subr.bf16.mxu0 0
    %2870 = vmatpush1.bf16.msra.mxu0 %v2133
    %2871 = vmatprep.subr.bf16.mxu0 0
    %2872 = vmatpush1.bf16.msra.mxu0 %v2134
    %2873 = vmatprep.subr.bf16.mxu0 0
    %2874 = vmatpush1.bf16.msra.mxu0 %v2135
    %2875 = vmatprep.subr.bf16.mxu0 0
    %2876 = vmatpush1.bf16.msra.mxu0 %v2136
    %2877 = vmatprep.subr.bf16.mxu0 0
    %2878 = vmatpush1.bf16.msra.mxu0 %v2137
    %2879 = vmatprep.subr.bf16.mxu0 0
    %2880 = vmatpush1.bf16.msra.mxu0 %v2138
    %2881 = vmatprep.subr.bf16.mxu0 0
    %2882 = vmatpush1.bf16.msra.mxu0 %v2139
    %2883 = vmatprep.subr.bf16.mxu0 0
    %2884 = vmatpush1.bf16.msra.mxu0 %v2140
    %2885 = vmatprep.mubr.bf16.mxu0 %v425
    %2886 = vmatmul.mubr.bf16.gmra.mrb[0].mxu0 %v424
    %v2887 = vpop.f32.mrb[0].mxu0
    %v2888 = vadd.f32 %v2848, %v2887
    %v2889 = vpop.f32.mrb[0].mxu0
    %v2890 = vpop.f32.mrb[0].mxu0
    %v2891 = vpop.f32.mrb[0].mxu0
    %2892 = vdwg.mxu0
    %2893 = vmatprep.subr.bf16.mxu0 0
    %2894 = vmatpush1.bf16.msra.mxu0 %v2141
    %2895 = vmatprep.subr.bf16.mxu0 0
    %2896 = vmatpush1.bf16.msra.mxu0 %v2142
    %2897 = vmatprep.subr.bf16.mxu0 0
    %2898 = vmatpush1.bf16.msra.mxu0 %v2143
    %2899 = vmatprep.subr.bf16.mxu0 0
    %2900 = vmatpush1.bf16.msra.mxu0 %v2144
    %2901 = vmatprep.subr.bf16.mxu0 0
    %2902 = vmatpush1.bf16.msra.mxu0 %v2145
    %2903 = vmatprep.subr.bf16.mxu0 0
    %2904 = vmatpush1.bf16.msra.mxu0 %v2146
    %2905 = vmatprep.subr.bf16.mxu0 0
    %2906 = vmatpush1.bf16.msra.mxu0 %v2147
    %2907 = vmatprep.subr.bf16.mxu0 0
    %2908 = vmatpush1.bf16.msra.mxu0 %v2148
    %2909 = vmatprep.subr.bf16.mxu0 0
    %2910 = vmatpush1.bf16.msra.mxu0 %v2149
    %2911 = vmatprep.subr.bf16.mxu0 0
    %2912 = vmatpush1.bf16.msra.mxu0 %v2150
    %2913 = vmatprep.subr.bf16.mxu0 0
    %2914 = vmatpush1.bf16.msra.mxu0 %v2151
    %2915 = vmatprep.subr.bf16.mxu0 0
    %2916 = vmatpush1.bf16.msra.mxu0 %v2152
    %2917 = vmatprep.subr.bf16.mxu0 0
    %2918 = vmatpush1.bf16.msra.mxu0 %v2153
    %2919 = vmatprep.subr.bf16.mxu0 0
    %2920 = vmatpush1.bf16.msra.mxu0 %v2154
    %2921 = vmatprep.subr.bf16.mxu0 0
    %2922 = vmatpush1.bf16.msra.mxu0 %v2155
    %2923 = vmatprep.subr.bf16.mxu0 0
    %2924 = vmatpush1.bf16.msra.mxu0 %v2156
    %2925 = vmatprep.mubr.bf16.mxu0 %v427
    %2926 = vmatmul.mubr.bf16.gmra.mrb[0].mxu0 %v426
    %v2927 = vpop.f32.mrb[0].mxu0
    %v2928 = vadd.f32 %v2888, %v2927
    %v2929 = vpop.f32.mrb[0].mxu0
    %v2930 = vpop.f32.mrb[0].mxu0
    %v2931 = vpop.f32.mrb[0].mxu0
    %2932 = vdwg.mxu0
    %2933 = vmatprep.subr.bf16.mxu0 0
    %2934 = vmatpush1.bf16.msra.mxu0 %v2157
    %2935 = vmatprep.subr.bf16.mxu0 0
    %2936 = vmatpush1.bf16.msra.mxu0 %v2158
    %2937 = vmatprep.subr.bf16.mxu0 0
    %2938 = vmatpush1.bf16.msra.mxu0 %v2159
    %2939 = vmatprep.subr.bf16.mxu0 0
    %2940 = vmatpush1.bf16.msra.mxu0 %v2160
    %2941 = vmatprep.subr.bf16.mxu0 0
    %2942 = vmatpush1.bf16.msra.mxu0 %v2161
    %2943 = vmatprep.subr.bf16.mxu0 0
    %2944 = vmatpush1.bf16.msra.mxu0 %v2162
    %2945 = vmatprep.subr.bf16.mxu0 0
    %2946 = vmatpush1.bf16.msra.mxu0 %v2163
    %2947 = vmatprep.subr.bf16.mxu0 0
    %2948 = vmatpush1.bf16.msra.mxu0 %v2164
    %2949 = vmatprep.subr.bf16.mxu0 0
    %2950 = vmatpush1.bf16.msra.mxu0 %v2165
    %2951 = vmatprep.subr.bf16.mxu0 0
    %2952 = vmatpush1.bf16.msra.mxu0 %v2166
    %2953 = vmatprep.subr.bf16.mxu0 0
    %2954 = vmatpush1.bf16.msra.mxu0 %v2167
    %2955 = vmatprep.subr.bf16.mxu0 0
    %2956 = vmatpush1.bf16.msra.mxu0 %v2168
    %2957 = vmatprep.subr.bf16.mxu0 0
    %2958 = vmatpush1.bf16.msra.mxu0 %v2169
    %2959 = vmatprep.subr.bf16.mxu0 0
    %2960 = vmatpush1.bf16.msra.mxu0 %v2170
    %2961 = vmatprep.subr.bf16.mxu0 0
    %2962 = vmatpush1.bf16.msra.mxu0 %v2171
    %2963 = vmatprep.subr.bf16.mxu0 0
    %2964 = vmatpush1.bf16.msra.mxu0 %v2172
    %2965 = vmatprep.mubr.bf16.mxu0 %v429
    %2966 = vmatmul.mubr.bf16.gmra.mrb[0].mxu0 %v428
    %v2967 = vpop.f32.mrb[0].mxu0
    %v2968 = vadd.f32 %v2928, %v2967
    %v2969 = vpop.f32.mrb[0].mxu0
    %v2970 = vpop.f32.mrb[0].mxu0
    %v2971 = vpop.f32.mrb[0].mxu0
    %2972 = vdwg.mxu0
    %2973 = vmatprep.subr.bf16.mxu0 0
    %2974 = vmatpush1.bf16.msra.mxu0 %v2173
    %2975 = vmatprep.subr.bf16.mxu0 0
    %2976 = vmatpush1.bf16.msra.mxu0 %v2174
    %2977 = vmatprep.subr.bf16.mxu0 0
    %2978 = vmatpush1.bf16.msra.mxu0 %v2175
    %2979 = vmatprep.subr.bf16.mxu0 0
    %2980 = vmatpush1.bf16.msra.mxu0 %v2176
    %2981 = vmatprep.subr.bf16.mxu0 0
    %2982 = vmatpush1.bf16.msra.mxu0 %v2177
    %2983 = vmatprep.subr.bf16.mxu0 0
    %2984 = vmatpush1.bf16.msra.mxu0 %v2178
    %2985 = vmatprep.subr.bf16.mxu0 0
    %2986 = vmatpush1.bf16.msra.mxu0 %v2179
    %2987 = vmatprep.subr.bf16.mxu0 0
    %2988 = vmatpush1.bf16.msra.mxu0 %v2180
    %2989 = vmatprep.subr.bf16.mxu0 0
    %2990 = vmatpush1.bf16.msra.mxu0 %v2181
    %2991 = vmatprep.subr.bf16.mxu0 0
    %2992 = vmatpush1.bf16.msra.mxu0 %v2182
    %2993 = vmatprep.subr.bf16.mxu0 0
    %2994 = vmatpush1.bf16.msra.mxu0 %v2183
    %2995 = vmatprep.subr.bf16.mxu0 0
    %2996 = vmatpush1.bf16.msra.mxu0 %v2184
    %2997 = vmatprep.subr.bf16.mxu0 0
    %2998 = vmatpush1.bf16.msra.mxu0 %v2185
    %2999 = vmatprep.subr.bf16.mxu0 0
    %3000 = vmatpush1.bf16.msra.mxu0 %v2186
    %3001 = vmatprep.subr.bf16.mxu0 0
    %3002 = vmatpush1.bf16.msra.mxu0 %v2187
    %3003 = vmatprep.subr.bf16.mxu0 0
    %3004 = vmatpush1.bf16.msra.mxu0 %v2188
    %3005 = vmatprep.mubr.bf16.mxu0 %v431
    %3006 = vmatmul.mubr.bf16.gmra.mrb[0].mxu0 %v430
    %v3007 = vpop.f32.mrb[0].mxu0
    %v3008 = vadd.f32 %v2968, %v3007
    %v3009 = vpop.f32.mrb[0].mxu0
    %v3010 = vpop.f32.mrb[0].mxu0
    %v3011 = vpop.f32.mrb[0].mxu0
    %3012 = vdwg.mxu0
    %3013 = vmatprep.subr.bf16.mxu0 0
    %3014 = vmatpush1.bf16.msra.mxu0 %v2189
    %3015 = vmatprep.subr.bf16.mxu0 0
    %3016 = vmatpush1.bf16.msra.mxu0 %v2190
    %3017 = vmatprep.subr.bf16.mxu0 0
    %3018 = vmatpush1.bf16.msra.mxu0 %v2191
    %3019 = vmatprep.subr.bf16.mxu0 0
    %3020 = vmatpush1.bf16.msra.mxu0 %v2192
    %3021 = vmatprep.subr.bf16.mxu0 0
    %3022 = vmatpush1.bf16.msra.mxu0 %v2193
    %3023 = vmatprep.subr.bf16.mxu0 0
    %3024 = vmatpush1.bf16.msra.mxu0 %v2194
    %3025 = vmatprep.subr.bf16.mxu0 0
    %3026 = vmatpush1.bf16.msra.mxu0 %v2195
    %3027 = vmatprep.subr.bf16.mxu0 0
    %3028 = vmatpush1.bf16.msra.mxu0 %v2196
    %3029 = vmatprep.subr.bf16.mxu0 0
    %3030 = vmatpush1.bf16.msra.mxu0 %v2197
    %3031 = vmatprep.subr.bf16.mxu0 0
    %3032 = vmatpush1.bf16.msra.mxu0 %v2198
    %3033 = vmatprep.subr.bf16.mxu0 0
    %3034 = vmatpush1.bf16.msra.mxu0 %v2199
    %3035 = vmatprep.subr.bf16.mxu0 0
    %3036 = vmatpush1.bf16.msra.mxu0 %v2200
    %3037 = vmatprep.subr.bf16.mxu0 0
    %3038 = vmatpush1.bf16.msra.mxu0 %v2201
    %3039 = vmatprep.subr.bf16.mxu0 0
    %3040 = vmatpush1.bf16.msra.mxu0 %v2202
    %3041 = vmatprep.subr.bf16.mxu0 0
    %3042 = vmatpush1.bf16.msra.mxu0 %v2203
    %3043 = vmatprep.subr.bf16.mxu0 0
    %3044 = vmatpush1.bf16.msra.mxu0 %v2204
    %3045 = vmatprep.mubr.bf16.mxu0 %v433
    %3046 = vmatmul.mubr.bf16.gmra.mrb[0].mxu0 %v432
    %v3047 = vpop.f32.mrb[0].mxu0
    %v3048 = vadd.f32 %v3008, %v3047
    %v3049 = vpop.f32.mrb[0].mxu0
    %v3050 = vpop.f32.mrb[0].mxu0
    %v3051 = vpop.f32.mrb[0].mxu0
    %3052 = vdwg.mxu0
    %3053 = vmatprep.subr.bf16.mxu0 0
    %3054 = vmatpush1.bf16.msra.mxu0 %v2205
    %3055 = vmatprep.subr.bf16.mxu0 0
    %3056 = vmatpush1.bf16.msra.mxu0 %v2206
    %3057 = vmatprep.subr.bf16.mxu0 0
    %3058 = vmatpush1.bf16.msra.mxu0 %v2207
    %3059 = vmatprep.subr.bf16.mxu0 0
    %3060 = vmatpush1.bf16.msra.mxu0 %v2208
    %3061 = vmatprep.subr.bf16.mxu0 0
    %3062 = vmatpush1.bf16.msra.mxu0 %v2209
    %3063 = vmatprep.subr.bf16.mxu0 0
    %3064 = vmatpush1.bf16.msra.mxu0 %v2210
    %3065 = vmatprep.subr.bf16.mxu0 0
    %3066 = vmatpush1.bf16.msra.mxu0 %v2211
    %3067 = vmatprep.subr.bf16.mxu0 0
    %3068 = vmatpush1.bf16.msra.mxu0 %v2212
    %3069 = vmatprep.subr.bf16.mxu0 0
    %3070 = vmatpush1.bf16.msra.mxu0 %v2213
    %3071 = vmatprep.subr.bf16.mxu0 0
    %3072 = vmatpush1.bf16.msra.mxu0 %v2214
    %3073 = vmatprep.subr.bf16.mxu0 0
    %3074 = vmatpush1.bf16.msra.mxu0 %v2215
    %3075 = vmatprep.subr.bf16.mxu0 0
    %3076 = vmatpush1.bf16.msra.mxu0 %v2216
    %3077 = vmatprep.subr.bf16.mxu0 0
    %3078 = vmatpush1.bf16.msra.mxu0 %v2217
    %3079 = vmatprep.subr.bf16.mxu0 0
    %3080 = vmatpush1.bf16.msra.mxu0 %v2218
    %3081 = vmatprep.subr.bf16.mxu0 0
    %3082 = vmatpush1.bf16.msra.mxu0 %v2219
    %3083 = vmatprep.subr.bf16.mxu0 0
    %3084 = vmatpush1.bf16.msra.mxu0 %v2220
    %3085 = vmatprep.mubr.bf16.mxu0 %v435
    %3086 = vmatmul.mubr.bf16.gmra.mrb[0].mxu0 %v434
    %v3087 = vpop.f32.mrb[0].mxu0
    %v3088 = vadd.f32 %v3048, %v3087
    %v3089 = vpop.f32.mrb[0].mxu0
    %v3090 = vpop.f32.mrb[0].mxu0
    %v3091 = vpop.f32.mrb[0].mxu0
    %3092 = vdwg.mxu0
    %3093 = vmatprep.subr.bf16.mxu0 0
    %3094 = vmatpush1.bf16.msra.mxu0 %v2221
    %3095 = vmatprep.subr.bf16.mxu0 0
    %3096 = vmatpush1.bf16.msra.mxu0 %v2222
    %3097 = vmatprep.subr.bf16.mxu0 0
    %3098 = vmatpush1.bf16.msra.mxu0 %v2223
    %3099 = vmatprep.subr.bf16.mxu0 0
    %3100 = vmatpush1.bf16.msra.mxu0 %v2224
    %3101 = vmatprep.subr.bf16.mxu0 0
    %3102 = vmatpush1.bf16.msra.mxu0 %v2225
    %3103 = vmatprep.subr.bf16.mxu0 0
    %3104 = vmatpush1.bf16.msra.mxu0 %v2226
    %3105 = vmatprep.subr.bf16.mxu0 0
    %3106 = vmatpush1.bf16.msra.mxu0 %v2227
    %3107 = vmatprep.subr.bf16.mxu0 0
    %3108 = vmatpush1.bf16.msra.mxu0 %v2228
    %3109 = vmatprep.subr.bf16.mxu0 0
    %3110 = vmatpush1.bf16.msra.mxu0 %v2229
    %3111 = vmatprep.subr.bf16.mxu0 0
    %3112 = vmatpush1.bf16.msra.mxu0 %v2230
    %3113 = vmatprep.subr.bf16.mxu0 0
    %3114 = vmatpush1.bf16.msra.mxu0 %v2231
    %3115 = vmatprep.subr.bf16.mxu0 0
    %3116 = vmatpush1.bf16.msra.mxu0 %v2232
    %3117 = vmatprep.subr.bf16.mxu0 0
    %3118 = vmatpush1.bf16.msra.mxu0 %v2233
    %3119 = vmatprep.subr.bf16.mxu0 0
    %3120 = vmatpush1.bf16.msra.mxu0 %v2234
    %3121 = vmatprep.subr.bf16.mxu0 0
    %3122 = vmatpush1.bf16.msra.mxu0 %v2235
    %3123 = vmatprep.subr.bf16.mxu0 0
    %3124 = vmatpush1.bf16.msra.mxu0 %v2236
    %3125 = vmatprep.mubr.bf16.mxu0 %v437
    %3126 = vmatmul.mubr.bf16.gmra.mrb[0].mxu0 %v436
    %v3127 = vpop.f32.mrb[0].mxu0
    %v3128 = vadd.f32 %v3088, %v3127
    %v3129 = vpop.f32.mrb[0].mxu0
    %v3130 = vpop.f32.mrb[0].mxu0
    %v3131 = vpop.f32.mrb[0].mxu0
    %3132 = vdwg.mxu0
    %v3133 = vmax.f32 %v3128, 0.0
    %v3134 = vpack.c.bf16 %v3133, %v3133
    %v3135 = vld [vmem:[%s3] sm:$0xff]
    %v3136 = vld [vmem:[%s3 + $0x8] sm:$0xff]
    %v3137 = vld [vmem:[%s3 + $0x10] sm:$0xff]
    %v3138 = vld [vmem:[%s3 + $0x18] sm:$0xff]
    %v3139 = vld [vmem:[%s3 + $0x20] sm:$0xff]
    %v3140 = vld [vmem:[%s3 + $0x28] sm:$0xff]
    %v3141 = vld [vmem:[%s3 + $0x30] sm:$0xff]
    %v3142 = vld [vmem:[%s3 + $0x38] sm:$0xff]
    %v3143 = vld [vmem:[%s3 + $0x40] sm:$0xff]
    %v3144 = vld [vmem:[%s3 + $0x48] sm:$0xff]
    %v3145 = vld [vmem:[%s3 + $0x50] sm:$0xff]
    %v3146 = vld [vmem:[%s3 + $0x58] sm:$0xff]
    %v3147 = vld [vmem:[%s3 + $0x60] sm:$0xff]
    %v3148 = vld [vmem:[%s3 + $0x68] sm:$0xff]
    %v3149 = vld [vmem:[%s3 + $0x70] sm:$0xff]
    %v3150 = vld [vmem:[%s3 + $0x78] sm:$0xff]
    %v3151 = vld [vmem:[%s3 + $0x80] sm:$0xff]
    %v3152 = vld [vmem:[%s3 + $0x88] sm:$0xff]
    %v3153 = vld [vmem:[%s3 + $0x90] sm:$0xff]
    %v3154 = vld [vmem:[%s3 + $0x98] sm:$0xff]
    %v3155 = vld [vmem:[%s3 + $0xa0] sm:$0xff]
    %v3156 = vld [vmem:[%s3 + $0xa8] sm:$0xff]
    %v3157 = vld [vmem:[%s3 + $0xb0] sm:$0xff]
    %v3158 = vld [vmem:[%s3 + $0xb8] sm:$0xff]
    %v3159 = vld [vmem:[%s3 + $0xc0] sm:$0xff]
    %v3160 = vld [vmem:[%s3 + $0xc8] sm:$0xff]
    %v3161 = vld [vmem:[%s3 + $0xd0] sm:$0xff]
    %v3162 = vld [vmem:[%s3 + $0xd8] sm:$0xff]
    %v3163 = vld [vmem:[%s3 + $0xe0] sm:$0xff]
    %v3164 = vld [vmem:[%s3 + $0xe8] sm:$0xff]
    %v3165 = vld [vmem:[%s3 + $0xf0] sm:$0xff]
    %v3166 = vld [vmem:[%s3 + $0xf8] sm:$0xff]
    %v3167 = vld [vmem:[%s3 + $0x100] sm:$0xff]
    %v3168 = vld [vmem:[%s3 + $0x108] sm:$0xff]
    %v3169 = vld [vmem:[%s3 + $0x110] sm:$0xff]
    %v3170 = vld [vmem:[%s3 + $0x118] sm:$0xff]
    %v3171 = vld [vmem:[%s3 + $0x120] sm:$0xff]
    %v3172 = vld [vmem:[%s3 + $0x128] sm:$0xff]
    %v3173 = vld [vmem:[%s3 + $0x130] sm:$0xff]
    %v3174 = vld [vmem:[%s3 + $0x138] sm:$0xff]
    %v3175 = vld [vmem:[%s3 + $0x140] sm:$0xff]
    %v3176 = vld [vmem:[%s3 + $0x148] sm:$0xff]
    %v3177 = vld [vmem:[%s3 + $0x150] sm:$0xff]
    %v3178 = vld [vmem:[%s3 + $0x158] sm:$0xff]
    %v3179 = vld [vmem:[%s3 + $0x160] sm:$0xff]
    %v3180 = vld [vmem:[%s3 + $0x168] sm:$0xff]
    %v3181 = vld [vmem:[%s3 + $0x170] sm:$0xff]
    %v3182 = vld [vmem:[%s3 + $0x178] sm:$0xff]
    %v3183 = vld [vmem:[%s3 + $0x180] sm:$0xff]
    %v3184 = vld [vmem:[%s3 + $0x188] sm:$0xff]
    %v3185 = vld [vmem:[%s3 + $0x190] sm:$0xff]
    %v3186 = vld [vmem:[%s3 + $0x198] sm:$0xff]
    %v3187 = vld [vmem:[%s3 + $0x1a0] sm:$0xff]
    %v3188 = vld [vmem:[%s3 + $0x1a8] sm:$0xff]
    %v3189 = vld [vmem:[%s3 + $0x1b0] sm:$0xff]
    %v3190 = vld [vmem:[%s3 + $0x1b8] sm:$0xff]
    %v3191 = vld [vmem:[%s3 + $0x1c0] sm:$0xff]
    %v3192 = vld [vmem:[%s3 + $0x1c8] sm:$0xff]
    %v3193 = vld [vmem:[%s3 + $0x1d0] sm:$0xff]
    %v3194 = vld [vmem:[%s3 + $0x1d8] sm:$0xff]
    %v3195 = vld [vmem:[%s3 + $0x1e0] sm:$0xff]
    %v3196 = vld [vmem:[%s3 + $0x1e8] sm:$0xff]
    %v3197 = vld [vmem:[%s3 + $0x1f0] sm:$0xff]
    %v3198 = vld [vmem:[%s3 + $0x1f8] sm:$0xff]
    %v3199 = vld [vmem:[%s3 + $0x200] sm:$0xff]
    %v3200 = vld [vmem:[%s3 + $0x208] sm:$0xff]
    %v3201 = vld [vmem:[%s3 + $0x210] sm:$0xff]
    %v3202 = vld [vmem:[%s3 + $0x218] sm:$0xff]
    %v3203 = vld [vmem:[%s3 + $0x220] sm:$0xff]
    %v3204 = vld [vmem:[%s3 + $0x228] sm:$0xff]
    %v3205 = vld [vmem:[%s3 + $0x230] sm:$0xff]
    %v3206 = vld [vmem:[%s3 + $0x238] sm:$0xff]
    %v3207 = vld [vmem:[%s3 + $0x240] sm:$0xff]
    %v3208 = vld [vmem:[%s3 + $0x248] sm:$0xff]
    %v3209 = vld [vmem:[%s3 + $0x250] sm:$0xff]
    %v3210 = vld [vmem:[%s3 + $0x258] sm:$0xff]
    %v3211 = vld [vmem:[%s3 + $0x260] sm:$0xff]
    %v3212 = vld [vmem:[%s3 + $0x268] sm:$0xff]
    %v3213 = vld [vmem:[%s3 + $0x270] sm:$0xff]
    %v3214 = vld [vmem:[%s3 + $0x278] sm:$0xff]
    %v3215 = vld [vmem:[%s3 + $0x280] sm:$0xff]
    %v3216 = vld [vmem:[%s3 + $0x288] sm:$0xff]
    %v3217 = vld [vmem:[%s3 + $0x290] sm:$0xff]
    %v3218 = vld [vmem:[%s3 + $0x298] sm:$0xff]
    %v3219 = vld [vmem:[%s3 + $0x2a0] sm:$0xff]
    %v3220 = vld [vmem:[%s3 + $0x2a8] sm:$0xff]
    %v3221 = vld [vmem:[%s3 + $0x2b0] sm:$0xff]
    %v3222 = vld [vmem:[%s3 + $0x2b8] sm:$0xff]
    %v3223 = vld [vmem:[%s3 + $0x2c0] sm:$0xff]
    %v3224 = vld [vmem:[%s3 + $0x2c8] sm:$0xff]
    %v3225 = vld [vmem:[%s3 + $0x2d0] sm:$0xff]
    %v3226 = vld [vmem:[%s3 + $0x2d8] sm:$0xff]
    %v3227 = vld [vmem:[%s3 + $0x2e0] sm:$0xff]
    %v3228 = vld [vmem:[%s3 + $0x2e8] sm:$0xff]
    %v3229 = vld [vmem:[%s3 + $0x2f0] sm:$0xff]
    %v3230 = vld [vmem:[%s3 + $0x2f8] sm:$0xff]
    %v3231 = vld [vmem:[%s3 + $0x300] sm:$0xff]
    %v3232 = vld [vmem:[%s3 + $0x308] sm:$0xff]
    %v3233 = vld [vmem:[%s3 + $0x310] sm:$0xff]
    %v3234 = vld [vmem:[%s3 + $0x318] sm:$0xff]
    %v3235 = vld [vmem:[%s3 + $0x320] sm:$0xff]
    %v3236 = vld [vmem:[%s3 + $0x328] sm:$0xff]
    %v3237 = vld [vmem:[%s3 + $0x330] sm:$0xff]
    %v3238 = vld [vmem:[%s3 + $0x338] sm:$0xff]
    %v3239 = vld [vmem:[%s3 + $0x340] sm:$0xff]
    %v3240 = vld [vmem:[%s3 + $0x348] sm:$0xff]
    %v3241 = vld [vmem:[%s3 + $0x350] sm:$0xff]
    %v3242 = vld [vmem:[%s3 + $0x358] sm:$0xff]
    %v3243 = vld [vmem:[%s3 + $0x360] sm:$0xff]
    %v3244 = vld [vmem:[%s3 + $0x368] sm:$0xff]
    %v3245 = vld [vmem:[%s3 + $0x370] sm:$0xff]
    %v3246 = vld [vmem:[%s3 + $0x378] sm:$0xff]
    %v3247 = vld [vmem:[%s3 + $0x380] sm:$0xff]
    %v3248 = vld [vmem:[%s3 + $0x388] sm:$0xff]
    %v3249 = vld [vmem:[%s3 + $0x390] sm:$0xff]
    %v3250 = vld [vmem:[%s3 + $0x398] sm:$0xff]
    %v3251 = vld [vmem:[%s3 + $0x3a0] sm:$0xff]
    %v3252 = vld [vmem:[%s3 + $0x3a8] sm:$0xff]
    %v3253 = vld [vmem:[%s3 + $0x3b0] sm:$0xff]
    %v3254 = vld [vmem:[%s3 + $0x3b8] sm:$0xff]
    %v3255 = vld [vmem:[%s3 + $0x3c0] sm:$0xff]
    %v3256 = vld [vmem:[%s3 + $0x3c8] sm:$0xff]
    %v3257 = vld [vmem:[%s3 + $0x3d0] sm:$0xff]
    %v3258 = vld [vmem:[%s3 + $0x3d8] sm:$0xff]
    %v3259 = vld [vmem:[%s3 + $0x3e0] sm:$0xff]
    %v3260 = vld [vmem:[%s3 + $0x3e8] sm:$0xff]
    %v3261 = vld [vmem:[%s3 + $0x3f0] sm:$0xff]
    %v3262 = vld [vmem:[%s3 + $0x3f8] sm:$0xff]
    %v3263 = vld [vmem:[%s3 + $0x400] sm:$0xff]
    %v3264 = vld [vmem:[%s3 + $0x408] sm:$0xff]
    %v3265 = vld [vmem:[%s3 + $0x410] sm:$0xff]
    %v3266 = vld [vmem:[%s3 + $0x418] sm:$0xff]
    %v3267 = vld [vmem:[%s3 + $0x420] sm:$0xff]
    %v3268 = vld [vmem:[%s3 + $0x428] sm:$0xff]
    %v3269 = vld [vmem:[%s3 + $0x430] sm:$0xff]
    %v3270 = vld [vmem:[%s3 + $0x438] sm:$0xff]
    %v3271 = vld [vmem:[%s3 + $0x440] sm:$0xff]
    %v3272 = vld [vmem:[%s3 + $0x448] sm:$0xff]
    %v3273 = vld [vmem:[%s3 + $0x450] sm:$0xff]
    %v3274 = vld [vmem:[%s3 + $0x458] sm:$0xff]
    %v3275 = vld [vmem:[%s3 + $0x460] sm:$0xff]
    %v3276 = vld [vmem:[%s3 + $0x468] sm:$0xff]
    %v3277 = vld [vmem:[%s3 + $0x470] sm:$0xff]
    %v3278 = vld [vmem:[%s3 + $0x478] sm:$0xff]
    %v3279 = vld [vmem:[%s3 + $0x480] sm:$0xff]
    %v3280 = vld [vmem:[%s3 + $0x488] sm:$0xff]
    %v3281 = vld [vmem:[%s3 + $0x490] sm:$0xff]
    %v3282 = vld [vmem:[%s3 + $0x498] sm:$0xff]
    %v3283 = vld [vmem:[%s3 + $0x4a0] sm:$0xff]
    %v3284 = vld [vmem:[%s3 + $0x4a8] sm:$0xff]
    %v3285 = vld [vmem:[%s3 + $0x4b0] sm:$0xff]
    %v3286 = vld [vmem:[%s3 + $0x4b8] sm:$0xff]
    %v3287 = vld [vmem:[%s3 + $0x4c0] sm:$0xff]
    %v3288 = vld [vmem:[%s3 + $0x4c8] sm:$0xff]
    %v3289 = vld [vmem:[%s3 + $0x4d0] sm:$0xff]
    %v3290 = vld [vmem:[%s3 + $0x4d8] sm:$0xff]
    %v3291 = vld [vmem:[%s3 + $0x4e0] sm:$0xff]
    %v3292 = vld [vmem:[%s3 + $0x4e8] sm:$0xff]
    %v3293 = vld [vmem:[%s3 + $0x4f0] sm:$0xff]
    %v3294 = vld [vmem:[%s3 + $0x4f8] sm:$0xff]
    %v3295 = vld [vmem:[%s3 + $0x500] sm:$0xff]
    %v3296 = vld [vmem:[%s3 + $0x508] sm:$0xff]
    %v3297 = vld [vmem:[%s3 + $0x510] sm:$0xff]
    %v3298 = vld [vmem:[%s3 + $0x518] sm:$0xff]
    %v3299 = vld [vmem:[%s3 + $0x520] sm:$0xff]
    %v3300 = vld [vmem:[%s3 + $0x528] sm:$0xff]
    %v3301 = vld [vmem:[%s3 + $0x530] sm:$0xff]
    %v3302 = vld [vmem:[%s3 + $0x538] sm:$0xff]
    %v3303 = vld [vmem:[%s3 + $0x540] sm:$0xff]
    %v3304 = vld [vmem:[%s3 + $0x548] sm:$0xff]
    %v3305 = vld [vmem:[%s3 + $0x550] sm:$0xff]
    %v3306 = vld [vmem:[%s3 + $0x558] sm:$0xff]
    %v3307 = vld [vmem:[%s3 + $0x560] sm:$0xff]
    %v3308 = vld [vmem:[%s3 + $0x568] sm:$0xff]
    %v3309 = vld [vmem:[%s3 + $0x570] sm:$0xff]
    %v3310 = vld [vmem:[%s3 + $0x578] sm:$0xff]
    %v3311 = vld [vmem:[%s3 + $0x580] sm:$0xff]
    %v3312 = vld [vmem:[%s3 + $0x588] sm:$0xff]
    %v3313 = vld [vmem:[%s3 + $0x590] sm:$0xff]
    %v3314 = vld [vmem:[%s3 + $0x598] sm:$0xff]
    %v3315 = vld [vmem:[%s3 + $0x5a0] sm:$0xff]
    %v3316 = vld [vmem:[%s3 + $0x5a8] sm:$0xff]
    %v3317 = vld [vmem:[%s3 + $0x5b0] sm:$0xff]
    %v3318 = vld [vmem:[%s3 + $0x5b8] sm:$0xff]
    %v3319 = vld [vmem:[%s3 + $0x5c0] sm:$0xff]
    %v3320 = vld [vmem:[%s3 + $0x5c8] sm:$0xff]
    %v3321 = vld [vmem:[%s3 + $0x5d0] sm:$0xff]
    %v3322 = vld [vmem:[%s3 + $0x5d8] sm:$0xff]
    %v3323 = vld [vmem:[%s3 + $0x5e0] sm:$0xff]
    %v3324 = vld [vmem:[%s3 + $0x5e8] sm:$0xff]
    %v3325 = vld [vmem:[%s3 + $0x5f0] sm:$0xff]
    %v3326 = vld [vmem:[%s3 + $0x5f8] sm:$0xff]
    %v3327 = vld [vmem:[%s3 + $0x600] sm:$0xff]
    %v3328 = vld [vmem:[%s3 + $0x608] sm:$0xff]
    %v3329 = vld [vmem:[%s3 + $0x610] sm:$0xff]
    %v3330 = vld [vmem:[%s3 + $0x618] sm:$0xff]
    %v3331 = vld [vmem:[%s3 + $0x620] sm:$0xff]
    %v3332 = vld [vmem:[%s3 + $0x628] sm:$0xff]
    %v3333 = vld [vmem:[%s3 + $0x630] sm:$0xff]
    %v3334 = vld [vmem:[%s3 + $0x638] sm:$0xff]
    %v3335 = vld [vmem:[%s3 + $0x640] sm:$0xff]
    %v3336 = vld [vmem:[%s3 + $0x648] sm:$0xff]
    %v3337 = vld [vmem:[%s3 + $0x650] sm:$0xff]
    %v3338 = vld [vmem:[%s3 + $0x658] sm:$0xff]
    %v3339 = vld [vmem:[%s3 + $0x660] sm:$0xff]
    %v3340 = vld [vmem:[%s3 + $0x668] sm:$0xff]
    %v3341 = vld [vmem:[%s3 + $0x670] sm:$0xff]
    %v3342 = vld [vmem:[%s3 + $0x678] sm:$0xff]
    %v3343 = vld [vmem:[%s3 + $0x680] sm:$0xff]
    %v3344 = vld [vmem:[%s3 + $0x688] sm:$0xff]
    %v3345 = vld [vmem:[%s3 + $0x690] sm:$0xff]
    %v3346 = vld [vmem:[%s3 + $0x698] sm:$0xff]
    %v3347 = vld [vmem:[%s3 + $0x6a0] sm:$0xff]
    %v3348 = vld [vmem:[%s3 + $0x6a8] sm:$0xff]
    %v3349 = vld [vmem:[%s3 + $0x6b0] sm:$0xff]
    %v3350 = vld [vmem:[%s3 + $0x6b8] sm:$0xff]
    %v3351 = vld [vmem:[%s3 + $0x6c0] sm:$0xff]
    %v3352 = vld [vmem:[%s3 + $0x6c8] sm:$0xff]
    %v3353 = vld [vmem:[%s3 + $0x6d0] sm:$0xff]
    %v3354 = vld [vmem:[%s3 + $0x6d8] sm:$0xff]
    %v3355 = vld [vmem:[%s3 + $0x6e0] sm:$0xff]
    %v3356 = vld [vmem:[%s3 + $0x6e8] sm:$0xff]
    %v3357 = vld [vmem:[%s3 + $0x6f0] sm:$0xff]
    %v3358 = vld [vmem:[%s3 + $0x6f8] sm:$0xff]
    %v3359 = vld [vmem:[%s3 + $0x700] sm:$0xff]
    %v3360 = vld [vmem:[%s3 + $0x708] sm:$0xff]
    %v3361 = vld [vmem:[%s3 + $0x710] sm:$0xff]
    %v3362 = vld [vmem:[%s3 + $0x718] sm:$0xff]
    %v3363 = vld [vmem:[%s3 + $0x720] sm:$0xff]
    %v3364 = vld [vmem:[%s3 + $0x728] sm:$0xff]
    %v3365 = vld [vmem:[%s3 + $0x730] sm:$0xff]
    %v3366 = vld [vmem:[%s3 + $0x738] sm:$0xff]
    %v3367 = vld [vmem:[%s3 + $0x740] sm:$0xff]
    %v3368 = vld [vmem:[%s3 + $0x748] sm:$0xff]
    %v3369 = vld [vmem:[%s3 + $0x750] sm:$0xff]
    %v3370 = vld [vmem:[%s3 + $0x758] sm:$0xff]
    %v3371 = vld [vmem:[%s3 + $0x760] sm:$0xff]
    %v3372 = vld [vmem:[%s3 + $0x768] sm:$0xff]
    %v3373 = vld [vmem:[%s3 + $0x770] sm:$0xff]
    %v3374 = vld [vmem:[%s3 + $0x778] sm:$0xff]
    %v3375 = vld [vmem:[%s3 + $0x780] sm:$0xff]
    %v3376 = vld [vmem:[%s3 + $0x788] sm:$0xff]
    %v3377 = vld [vmem:[%s3 + $0x790] sm:$0xff]
    %v3378 = vld [vmem:[%s3 + $0x798] sm:$0xff]
    %v3379 = vld [vmem:[%s3 + $0x7a0] sm:$0xff]
    %v3380 = vld [vmem:[%s3 + $0x7a8] sm:$0xff]
    %v3381 = vld [vmem:[%s3 + $0x7b0] sm:$0xff]
    %v3382 = vld [vmem:[%s3 + $0x7b8] sm:$0xff]
    %v3383 = vld [vmem:[%s3 + $0x7c0] sm:$0xff]
    %v3384 = vld [vmem:[%s3 + $0x7c8] sm:$0xff]
    %v3385 = vld [vmem:[%s3 + $0x7d0] sm:$0xff]
    %v3386 = vld [vmem:[%s3 + $0x7d8] sm:$0xff]
    %v3387 = vld [vmem:[%s3 + $0x7e0] sm:$0xff]
    %v3388 = vld [vmem:[%s3 + $0x7e8] sm:$0xff]
    %v3389 = vld [vmem:[%s3 + $0x7f0] sm:$0xff]
    %v3390 = vld [vmem:[%s3 + $0x7f8] sm:$0xff]
    %v3391 = vld [vmem:[%s4] sm:$0xff]
    %v3392 = vld [vmem:[%s4 + $0x8] sm:$0xff]
    %v3393 = vld [vmem:[%s4 + $0x10] sm:$0xff]
    %v3394 = vld [vmem:[%s4 + $0x18] sm:$0xff]
    %v3399 = vlaneseq
    %v3400 = vshrl.u32 %v3399, 7
    %v3401 = vsub.s32 0, %v3400
    %v3402 = vrot.slane %v3391, %v3401
    %v3403 = vlaneseq
    %v3404 = vshrl.u32 %v3403, 7
    %v3405 = vsub.s32 1, %v3404
    %v3406 = vrot.slane %v3391, %v3405
    %v3407 = vlaneseq
    %v3408 = vshrl.u32 %v3407, 7
    %v3409 = vsub.s32 2, %v3408
    %v3410 = vrot.slane %v3391, %v3409
    %v3411 = vlaneseq
    %v3412 = vshrl.u32 %v3411, 7
    %v3413 = vsub.s32 3, %v3412
    %v3414 = vrot.slane %v3391, %v3413
    %v3415 = vlaneseq
    %v3416 = vshrl.u32 %v3415, 7
    %v3417 = vsub.s32 4, %v3416
    %v3418 = vrot.slane %v3391, %v3417
    %v3419 = vlaneseq
    %v3420 = vshrl.u32 %v3419, 7
    %v3421 = vsub.s32 5, %v3420
    %v3422 = vrot.slane %v3391, %v3421
    %v3423 = vlaneseq
    %v3424 = vshrl.u32 %v3423, 7
    %v3425 = vsub.s32 6, %v3424
    %v3426 = vrot.slane %v3391, %v3425
    %v3427 = vlaneseq
    %v3428 = vshrl.u32 %v3427, 7
    %v3429 = vsub.s32 7, %v3428
    %v3430 = vrot.slane %v3391, %v3429
    %v3431 = vlaneseq
    %v3432 = vshrl.u32 %v3431, 7
    %v3433 = vsub.s32 0, %v3432
    %v3434 = vrot.slane %v3392, %v3433
    %v3435 = vlaneseq
    %v3436 = vshrl.u32 %v3435, 7
    %v3437 = vsub.s32 1, %v3436
    %v3438 = vrot.slane %v3392, %v3437
    %v3439 = vlaneseq
    %v3440 = vshrl.u32 %v3439, 7
    %v3441 = vsub.s32 2, %v3440
    %v3442 = vrot.slane %v3392, %v3441
    %v3443 = vlaneseq
    %v3444 = vshrl.u32 %v3443, 7
    %v3445 = vsub.s32 3, %v3444
    %v3446 = vrot.slane %v3392, %v3445
    %v3447 = vlaneseq
    %v3448 = vshrl.u32 %v3447, 7
    %v3449 = vsub.s32 4, %v3448
    %v3450 = vrot.slane %v3392, %v3449
    %v3451 = vlaneseq
    %v3452 = vshrl.u32 %v3451, 7
    %v3453 = vsub.s32 5, %v3452
    %v3454 = vrot.slane %v3392, %v3453
    %v3455 = vlaneseq
    %v3456 = vshrl.u32 %v3455, 7
    %v3457 = vsub.s32 6, %v3456
    %v3458 = vrot.slane %v3392, %v3457
    %v3459 = vlaneseq
    %v3460 = vshrl.u32 %v3459, 7
    %v3461 = vsub.s32 7, %v3460
    %v3462 = vrot.slane %v3392, %v3461
    %v3463 = vlaneseq
    %v3464 = vshrl.u32 %v3463, 7
    %v3465 = vsub.s32 0, %v3464
    %v3466 = vrot.slane %v3393, %v3465
    %v3467 = vlaneseq
    %v3468 = vshrl.u32 %v3467, 7
    %v3469 = vsub.s32 1, %v3468
    %v3470 = vrot.slane %v3393, %v3469
    %v3471 = vlaneseq
    %v3472 = vshrl.u32 %v3471, 7
    %v3473 = vsub.s32 2, %v3472
    %v3474 = vrot.slane %v3393, %v3473
    %v3475 = vlaneseq
    %v3476 = vshrl.u32 %v3475, 7
    %v3477 = vsub.s32 3, %v3476
    %v3478 = vrot.slane %v3393, %v3477
    %v3479 = vlaneseq
    %v3480 = vshrl.u32 %v3479, 7
    %v3481 = vsub.s32 4, %v3480
    %v3482 = vrot.slane %v3393, %v3481
    %v3483 = vlaneseq
    %v3484 = vshrl.u32 %v3483, 7
    %v3485 = vsub.s32 5, %v3484
    %v3486 = vrot.slane %v3393, %v3485
    %v3487 = vlaneseq
    %v3488 = vshrl.u32 %v3487, 7
    %v3489 = vsub.s32 6, %v3488
    %v3490 = vrot.slane %v3393, %v3489
    %v3491 = vlaneseq
    %v3492 = vshrl.u32 %v3491, 7
    %v3493 = vsub.s32 7, %v3492
    %v3494 = vrot.slane %v3393, %v3493
    %v3495 = vlaneseq
    %v3496 = vshrl.u32 %v3495, 7
    %v3497 = vsub.s32 0, %v3496
    %v3498 = vrot.slane %v3394, %v3497
    %v3499 = vlaneseq
    %v3500 = vshrl.u32 %v3499, 7
    %v3501 = vsub.s32 1, %v3500
    %v3502 = vrot.slane %v3394, %v3501
    %v3503 = vlaneseq
    %v3504 = vshrl.u32 %v3503, 7
    %v3505 = vsub.s32 2, %v3504
    %v3506 = vrot.slane %v3394, %v3505
    %v3507 = vlaneseq
    %v3508 = vshrl.u32 %v3507, 7
    %v3509 = vsub.s32 3, %v3508
    %v3510 = vrot.slane %v3394, %v3509
    %v3511 = vlaneseq
    %v3512 = vshrl.u32 %v3511, 7
    %v3513 = vsub.s32 4, %v3512
    %v3514 = vrot.slane %v3394, %v3513
    %v3515 = vlaneseq
    %v3516 = vshrl.u32 %v3515, 7
    %v3517 = vsub.s32 5, %v3516
    %v3518 = vrot.slane %v3394, %v3517
    %v3519 = vlaneseq
    %v3520 = vshrl.u32 %v3519, 7
    %v3521 = vsub.s32 6, %v3520
    %v3522 = vrot.slane %v3394, %v3521
    %v3523 = vlaneseq
    %v3524 = vshrl.u32 %v3523, 7
    %v3525 = vsub.s32 7, %v3524
    %v3526 = vrot.slane %v3394, %v3525
    %v3815 = vunpack.c.l.b16 %v3135
    %v3816 = vunpack.c.h.b16 %v3135
    %v3817 = vunpack.c.l.b16 %v3136
    %v3818 = vunpack.c.h.b16 %v3136
    %v3819 = vunpack.c.l.b16 %v3137
    %v3820 = vunpack.c.h.b16 %v3137
    %v3821 = vunpack.c.l.b16 %v3138
    %v3822 = vunpack.c.h.b16 %v3138
    %v3823 = vunpack.c.l.b16 %v3139
    %v3824 = vunpack.c.h.b16 %v3139
    %v3825 = vunpack.c.l.b16 %v3140
    %v3826 = vunpack.c.h.b16 %v3140
    %v3827 = vunpack.c.l.b16 %v3141
    %v3828 = vunpack.c.h.b16 %v3141
    %v3829 = vunpack.c.l.b16 %v3142
    %v3830 = vunpack.c.h.b16 %v3142
    %v3831 = vunpack.c.l.b16 %v3143
    %v3832 = vunpack.c.h.b16 %v3143
    %v3833 = vunpack.c.l.b16 %v3144
    %v3834 = vunpack.c.h.b16 %v3144
    %v3835 = vunpack.c.l.b16 %v3145
    %v3836 = vunpack.c.h.b16 %v3145
    %v3837 = vunpack.c.l.b16 %v3146
    %v3838 = vunpack.c.h.b16 %v3146
    %v3839 = vunpack.c.l.b16 %v3147
    %v3840 = vunpack.c.h.b16 %v3147
    %v3841 = vunpack.c.l.b16 %v3148
    %v3842 = vunpack.c.h.b16 %v3148
    %v3843 = vunpack.c.l.b16 %v3149
    %v3844 = vunpack.c.h.b16 %v3149
    %v3845 = vunpack.c.l.b16 %v3150
    %v3846 = vunpack.c.h.b16 %v3150
    %v3847 = vunpack.c.l.b16 %v3151
    %v3848 = vunpack.c.h.b16 %v3151
    %v3849 = vunpack.c.l.b16 %v3152
    %v3850 = vunpack.c.h.b16 %v3152
    %v3851 = vunpack.c.l.b16 %v3153
    %v3852 = vunpack.c.h.b16 %v3153
    %v3853 = vunpack.c.l.b16 %v3154
    %v3854 = vunpack.c.h.b16 %v3154
    %v3855 = vunpack.c.l.b16 %v3155
    %v3856 = vunpack.c.h.b16 %v3155
    %v3857 = vunpack.c.l.b16 %v3156
    %v3858 = vunpack.c.h.b16 %v3156
    %v3859 = vunpack.c.l.b16 %v3157
    %v3860 = vunpack.c.h.b16 %v3157
    %v3861 = vunpack.c.l.b16 %v3158
    %v3862 = vunpack.c.h.b16 %v3158
    %v3863 = vunpack.c.l.b16 %v3159
    %v3864 = vunpack.c.h.b16 %v3159
    %v3865 = vunpack.c.l.b16 %v3160
    %v3866 = vunpack.c.h.b16 %v3160
    %v3867 = vunpack.c.l.b16 %v3161
    %v3868 = vunpack.c.h.b16 %v3161
    %v3869 = vunpack.c.l.b16 %v3162
    %v3870 = vunpack.c.h.b16 %v3162
    %v3871 = vunpack.c.l.b16 %v3163
    %v3872 = vunpack.c.h.b16 %v3163
    %v3873 = vunpack.c.l.b16 %v3164
    %v3874 = vunpack.c.h.b16 %v3164
    %v3875 = vunpack.c.l.b16 %v3165
    %v3876 = vunpack.c.h.b16 %v3165
    %v3877 = vunpack.c.l.b16 %v3166
    %v3878 = vunpack.c.h.b16 %v3166
    %v3879 = vunpack.c.l.b16 %v3167
    %v3880 = vunpack.c.h.b16 %v3167
    %v3881 = vunpack.c.l.b16 %v3168
    %v3882 = vunpack.c.h.b16 %v3168
    %v3883 = vunpack.c.l.b16 %v3169
    %v3884 = vunpack.c.h.b16 %v3169
    %v3885 = vunpack.c.l.b16 %v3170
    %v3886 = vunpack.c.h.b16 %v3170
    %v3887 = vunpack.c.l.b16 %v3171
    %v3888 = vunpack.c.h.b16 %v3171
    %v3889 = vunpack.c.l.b16 %v3172
    %v3890 = vunpack.c.h.b16 %v3172
    %v3891 = vunpack.c.l.b16 %v3173
    %v3892 = vunpack.c.h.b16 %v3173
    %v3893 = vunpack.c.l.b16 %v3174
    %v3894 = vunpack.c.h.b16 %v3174
    %v3895 = vunpack.c.l.b16 %v3175
    %v3896 = vunpack.c.h.b16 %v3175
    %v3897 = vunpack.c.l.b16 %v3176
    %v3898 = vunpack.c.h.b16 %v3176
    %v3899 = vunpack.c.l.b16 %v3177
    %v3900 = vunpack.c.h.b16 %v3177
    %v3901 = vunpack.c.l.b16 %v3178
    %v3902 = vunpack.c.h.b16 %v3178
    %v3903 = vunpack.c.l.b16 %v3179
    %v3904 = vunpack.c.h.b16 %v3179
    %v3905 = vunpack.c.l.b16 %v3180
    %v3906 = vunpack.c.h.b16 %v3180
    %v3907 = vunpack.c.l.b16 %v3181
    %v3908 = vunpack.c.h.b16 %v3181
    %v3909 = vunpack.c.l.b16 %v3182
    %v3910 = vunpack.c.h.b16 %v3182
    %v3911 = vunpack.c.l.b16 %v3183
    %v3912 = vunpack.c.h.b16 %v3183
    %v3913 = vunpack.c.l.b16 %v3184
    %v3914 = vunpack.c.h.b16 %v3184
    %v3915 = vunpack.c.l.b16 %v3185
    %v3916 = vunpack.c.h.b16 %v3185
    %v3917 = vunpack.c.l.b16 %v3186
    %v3918 = vunpack.c.h.b16 %v3186
    %v3919 = vunpack.c.l.b16 %v3187
    %v3920 = vunpack.c.h.b16 %v3187
    %v3921 = vunpack.c.l.b16 %v3188
    %v3922 = vunpack.c.h.b16 %v3188
    %v3923 = vunpack.c.l.b16 %v3189
    %v3924 = vunpack.c.h.b16 %v3189
    %v3925 = vunpack.c.l.b16 %v3190
    %v3926 = vunpack.c.h.b16 %v3190
    %v3927 = vunpack.c.l.b16 %v3191
    %v3928 = vunpack.c.h.b16 %v3191
    %v3929 = vunpack.c.l.b16 %v3192
    %v3930 = vunpack.c.h.b16 %v3192
    %v3931 = vunpack.c.l.b16 %v3193
    %v3932 = vunpack.c.h.b16 %v3193
    %v3933 = vunpack.c.l.b16 %v3194
    %v3934 = vunpack.c.h.b16 %v3194
    %v3935 = vunpack.c.l.b16 %v3195
    %v3936 = vunpack.c.h.b16 %v3195
    %v3937 = vunpack.c.l.b16 %v3196
    %v3938 = vunpack.c.h.b16 %v3196
    %v3939 = vunpack.c.l.b16 %v3197
    %v3940 = vunpack.c.h.b16 %v3197
    %v3941 = vunpack.c.l.b16 %v3198
    %v3942 = vunpack.c.h.b16 %v3198
    %v3943 = vunpack.c.l.b16 %v3199
    %v3944 = vunpack.c.h.b16 %v3199
    %v3945 = vunpack.c.l.b16 %v3200
    %v3946 = vunpack.c.h.b16 %v3200
    %v3947 = vunpack.c.l.b16 %v3201
    %v3948 = vunpack.c.h.b16 %v3201
    %v3949 = vunpack.c.l.b16 %v3202
    %v3950 = vunpack.c.h.b16 %v3202
    %v3951 = vunpack.c.l.b16 %v3203
    %v3952 = vunpack.c.h.b16 %v3203
    %v3953 = vunpack.c.l.b16 %v3204
    %v3954 = vunpack.c.h.b16 %v3204
    %v3955 = vunpack.c.l.b16 %v3205
    %v3956 = vunpack.c.h.b16 %v3205
    %v3957 = vunpack.c.l.b16 %v3206
    %v3958 = vunpack.c.h.b16 %v3206
    %v3959 = vunpack.c.l.b16 %v3207
    %v3960 = vunpack.c.h.b16 %v3207
    %v3961 = vunpack.c.l.b16 %v3208
    %v3962 = vunpack.c.h.b16 %v3208
    %v3963 = vunpack.c.l.b16 %v3209
    %v3964 = vunpack.c.h.b16 %v3209
    %v3965 = vunpack.c.l.b16 %v3210
    %v3966 = vunpack.c.h.b16 %v3210
    %v3967 = vunpack.c.l.b16 %v3211
    %v3968 = vunpack.c.h.b16 %v3211
    %v3969 = vunpack.c.l.b16 %v3212
    %v3970 = vunpack.c.h.b16 %v3212
    %v3971 = vunpack.c.l.b16 %v3213
    %v3972 = vunpack.c.h.b16 %v3213
    %v3973 = vunpack.c.l.b16 %v3214
    %v3974 = vunpack.c.h.b16 %v3214
    %v3975 = vunpack.c.l.b16 %v3215
    %v3976 = vunpack.c.h.b16 %v3215
    %v3977 = vunpack.c.l.b16 %v3216
    %v3978 = vunpack.c.h.b16 %v3216
    %v3979 = vunpack.c.l.b16 %v3217
    %v3980 = vunpack.c.h.b16 %v3217
    %v3981 = vunpack.c.l.b16 %v3218
    %v3982 = vunpack.c.h.b16 %v3218
    %v3983 = vunpack.c.l.b16 %v3219
    %v3984 = vunpack.c.h.b16 %v3219
    %v3985 = vunpack.c.l.b16 %v3220
    %v3986 = vunpack.c.h.b16 %v3220
    %v3987 = vunpack.c.l.b16 %v3221
    %v3988 = vunpack.c.h.b16 %v3221
    %v3989 = vunpack.c.l.b16 %v3222
    %v3990 = vunpack.c.h.b16 %v3222
    %v3991 = vunpack.c.l.b16 %v3223
    %v3992 = vunpack.c.h.b16 %v3223
    %v3993 = vunpack.c.l.b16 %v3224
    %v3994 = vunpack.c.h.b16 %v3224
    %v3995 = vunpack.c.l.b16 %v3225
    %v3996 = vunpack.c.h.b16 %v3225
    %v3997 = vunpack.c.l.b16 %v3226
    %v3998 = vunpack.c.h.b16 %v3226
    %v3999 = vunpack.c.l.b16 %v3227
    %v4000 = vunpack.c.h.b16 %v3227
    %v4001 = vunpack.c.l.b16 %v3228
    %v4002 = vunpack.c.h.b16 %v3228
    %v4003 = vunpack.c.l.b16 %v3229
    %v4004 = vunpack.c.h.b16 %v3229
    %v4005 = vunpack.c.l.b16 %v3230
    %v4006 = vunpack.c.h.b16 %v3230
    %v4007 = vunpack.c.l.b16 %v3231
    %v4008 = vunpack.c.h.b16 %v3231
    %v4009 = vunpack.c.l.b16 %v3232
    %v4010 = vunpack.c.h.b16 %v3232
    %v4011 = vunpack.c.l.b16 %v3233
    %v4012 = vunpack.c.h.b16 %v3233
    %v4013 = vunpack.c.l.b16 %v3234
    %v4014 = vunpack.c.h.b16 %v3234
    %v4015 = vunpack.c.l.b16 %v3235
    %v4016 = vunpack.c.h.b16 %v3235
    %v4017 = vunpack.c.l.b16 %v3236
    %v4018 = vunpack.c.h.b16 %v3236
    %v4019 = vunpack.c.l.b16 %v3237
    %v4020 = vunpack.c.h.b16 %v3237
    %v4021 = vunpack.c.l.b16 %v3238
    %v4022 = vunpack.c.h.b16 %v3238
    %v4023 = vunpack.c.l.b16 %v3239
    %v4024 = vunpack.c.h.b16 %v3239
    %v4025 = vunpack.c.l.b16 %v3240
    %v4026 = vunpack.c.h.b16 %v3240
    %v4027 = vunpack.c.l.b16 %v3241
    %v4028 = vunpack.c.h.b16 %v3241
    %v4029 = vunpack.c.l.b16 %v3242
    %v4030 = vunpack.c.h.b16 %v3242
    %v4031 = vunpack.c.l.b16 %v3243
    %v4032 = vunpack.c.h.b16 %v3243
    %v4033 = vunpack.c.l.b16 %v3244
    %v4034 = vunpack.c.h.b16 %v3244
    %v4035 = vunpack.c.l.b16 %v3245
    %v4036 = vunpack.c.h.b16 %v3245
    %v4037 = vunpack.c.l.b16 %v3246
    %v4038 = vunpack.c.h.b16 %v3246
    %v4039 = vunpack.c.l.b16 %v3247
    %v4040 = vunpack.c.h.b16 %v3247
    %v4041 = vunpack.c.l.b16 %v3248
    %v4042 = vunpack.c.h.b16 %v3248
    %v4043 = vunpack.c.l.b16 %v3249
    %v4044 = vunpack.c.h.b16 %v3249
    %v4045 = vunpack.c.l.b16 %v3250
    %v4046 = vunpack.c.h.b16 %v3250
    %v4047 = vunpack.c.l.b16 %v3251
    %v4048 = vunpack.c.h.b16 %v3251
    %v4049 = vunpack.c.l.b16 %v3252
    %v4050 = vunpack.c.h.b16 %v3252
    %v4051 = vunpack.c.l.b16 %v3253
    %v4052 = vunpack.c.h.b16 %v3253
    %v4053 = vunpack.c.l.b16 %v3254
    %v4054 = vunpack.c.h.b16 %v3254
    %v4055 = vunpack.c.l.b16 %v3255
    %v4056 = vunpack.c.h.b16 %v3255
    %v4057 = vunpack.c.l.b16 %v3256
    %v4058 = vunpack.c.h.b16 %v3256
    %v4059 = vunpack.c.l.b16 %v3257
    %v4060 = vunpack.c.h.b16 %v3257
    %v4061 = vunpack.c.l.b16 %v3258
    %v4062 = vunpack.c.h.b16 %v3258
    %v4063 = vunpack.c.l.b16 %v3259
    %v4064 = vunpack.c.h.b16 %v3259
    %v4065 = vunpack.c.l.b16 %v3260
    %v4066 = vunpack.c.h.b16 %v3260
    %v4067 = vunpack.c.l.b16 %v3261
    %v4068 = vunpack.c.h.b16 %v3261
    %v4069 = vunpack.c.l.b16 %v3262
    %v4070 = vunpack.c.h.b16 %v3262
    %v4071 = vunpack.c.l.b16 %v3263
    %v4072 = vunpack.c.h.b16 %v3263
    %v4073 = vunpack.c.l.b16 %v3264
    %v4074 = vunpack.c.h.b16 %v3264
    %v4075 = vunpack.c.l.b16 %v3265
    %v4076 = vunpack.c.h.b16 %v3265
    %v4077 = vunpack.c.l.b16 %v3266
    %v4078 = vunpack.c.h.b16 %v3266
    %v4079 = vunpack.c.l.b16 %v3267
    %v4080 = vunpack.c.h.b16 %v3267
    %v4081 = vunpack.c.l.b16 %v3268
    %v4082 = vunpack.c.h.b16 %v3268
    %v4083 = vunpack.c.l.b16 %v3269
    %v4084 = vunpack.c.h.b16 %v3269
    %v4085 = vunpack.c.l.b16 %v3270
    %v4086 = vunpack.c.h.b16 %v3270
    %v4087 = vunpack.c.l.b16 %v3271
    %v4088 = vunpack.c.h.b16 %v3271
    %v4089 = vunpack.c.l.b16 %v3272
    %v4090 = vunpack.c.h.b16 %v3272
    %v4091 = vunpack.c.l.b16 %v3273
    %v4092 = vunpack.c.h.b16 %v3273
    %v4093 = vunpack.c.l.b16 %v3274
    %v4094 = vunpack.c.h.b16 %v3274
    %v4095 = vunpack.c.l.b16 %v3275
    %v4096 = vunpack.c.h.b16 %v3275
    %v4097 = vunpack.c.l.b16 %v3276
    %v4098 = vunpack.c.h.b16 %v3276
    %v4099 = vunpack.c.l.b16 %v3277
    %v4100 = vunpack.c.h.b16 %v3277
    %v4101 = vunpack.c.l.b16 %v3278
    %v4102 = vunpack.c.h.b16 %v3278
    %v4103 = vunpack.c.l.b16 %v3279
    %v4104 = vunpack.c.h.b16 %v3279
    %v4105 = vunpack.c.l.b16 %v3280
    %v4106 = vunpack.c.h.b16 %v3280
    %v4107 = vunpack.c.l.b16 %v3281
    %v4108 = vunpack.c.h.b16 %v3281
    %v4109 = vunpack.c.l.b16 %v3282
    %v4110 = vunpack.c.h.b16 %v3282
    %v4111 = vunpack.c.l.b16 %v3283
    %v4112 = vunpack.c.h.b16 %v3283
    %v4113 = vunpack.c.l.b16 %v3284
    %v4114 = vunpack.c.h.b16 %v3284
    %v4115 = vunpack.c.l.b16 %v3285
    %v4116 = vunpack.c.h.b16 %v3285
    %v4117 = vunpack.c.l.b16 %v3286
    %v4118 = vunpack.c.h.b16 %v3286
    %v4119 = vunpack.c.l.b16 %v3287
    %v4120 = vunpack.c.h.b16 %v3287
    %v4121 = vunpack.c.l.b16 %v3288
    %v4122 = vunpack.c.h.b16 %v3288
    %v4123 = vunpack.c.l.b16 %v3289
    %v4124 = vunpack.c.h.b16 %v3289
    %v4125 = vunpack.c.l.b16 %v3290
    %v4126 = vunpack.c.h.b16 %v3290
    %v4127 = vunpack.c.l.b16 %v3291
    %v4128 = vunpack.c.h.b16 %v3291
    %v4129 = vunpack.c.l.b16 %v3292
    %v4130 = vunpack.c.h.b16 %v3292
    %v4131 = vunpack.c.l.b16 %v3293
    %v4132 = vunpack.c.h.b16 %v3293
    %v4133 = vunpack.c.l.b16 %v3294
    %v4134 = vunpack.c.h.b16 %v3294
    %v4135 = vunpack.c.l.b16 %v3295
    %v4136 = vunpack.c.h.b16 %v3295
    %v4137 = vunpack.c.l.b16 %v3296
    %v4138 = vunpack.c.h.b16 %v3296
    %v4139 = vunpack.c.l.b16 %v3297
    %v4140 = vunpack.c.h.b16 %v3297
    %v4141 = vunpack.c.l.b16 %v3298
    %v4142 = vunpack.c.h.b16 %v3298
    %v4143 = vunpack.c.l.b16 %v3299
    %v4144 = vunpack.c.h.b16 %v3299
    %v4145 = vunpack.c.l.b16 %v3300
    %v4146 = vunpack.c.h.b16 %v3300
    %v4147 = vunpack.c.l.b16 %v3301
    %v4148 = vunpack.c.h.b16 %v3301
    %v4149 = vunpack.c.l.b16 %v3302
    %v4150 = vunpack.c.h.b16 %v3302
    %v4151 = vunpack.c.l.b16 %v3303
    %v4152 = vunpack.c.h.b16 %v3303
    %v4153 = vunpack.c.l.b16 %v3304
    %v4154 = vunpack.c.h.b16 %v3304
    %v4155 = vunpack.c.l.b16 %v3305
    %v4156 = vunpack.c.h.b16 %v3305
    %v4157 = vunpack.c.l.b16 %v3306
    %v4158 = vunpack.c.h.b16 %v3306
    %v4159 = vunpack.c.l.b16 %v3307
    %v4160 = vunpack.c.h.b16 %v3307
    %v4161 = vunpack.c.l.b16 %v3308
    %v4162 = vunpack.c.h.b16 %v3308
    %v4163 = vunpack.c.l.b16 %v3309
    %v4164 = vunpack.c.h.b16 %v3309
    %v4165 = vunpack.c.l.b16 %v3310
    %v4166 = vunpack.c.h.b16 %v3310
    %v4167 = vunpack.c.l.b16 %v3311
    %v4168 = vunpack.c.h.b16 %v3311
    %v4169 = vunpack.c.l.b16 %v3312
    %v4170 = vunpack.c.h.b16 %v3312
    %v4171 = vunpack.c.l.b16 %v3313
    %v4172 = vunpack.c.h.b16 %v3313
    %v4173 = vunpack.c.l.b16 %v3314
    %v4174 = vunpack.c.h.b16 %v3314
    %v4175 = vunpack.c.l.b16 %v3315
    %v4176 = vunpack.c.h.b16 %v3315
    %v4177 = vunpack.c.l.b16 %v3316
    %v4178 = vunpack.c.h.b16 %v3316
    %v4179 = vunpack.c.l.b16 %v3317
    %v4180 = vunpack.c.h.b16 %v3317
    %v4181 = vunpack.c.l.b16 %v3318
    %v4182 = vunpack.c.h.b16 %v3318
    %v4183 = vunpack.c.l.b16 %v3319
    %v4184 = vunpack.c.h.b16 %v3319
    %v4185 = vunpack.c.l.b16 %v3320
    %v4186 = vunpack.c.h.b16 %v3320
    %v4187 = vunpack.c.l.b16 %v3321
    %v4188 = vunpack.c.h.b16 %v3321
    %v4189 = vunpack.c.l.b16 %v3322
    %v4190 = vunpack.c.h.b16 %v3322
    %v4191 = vunpack.c.l.b16 %v3323
    %v4192 = vunpack.c.h.b16 %v3323
    %v4193 = vunpack.c.l.b16 %v3324
    %v4194 = vunpack.c.h.b16 %v3324
    %v4195 = vunpack.c.l.b16 %v3325
    %v4196 = vunpack.c.h.b16 %v3325
    %v4197 = vunpack.c.l.b16 %v3326
    %v4198 = vunpack.c.h.b16 %v3326
    %v4199 = vunpack.c.l.b16 %v3327
    %v4200 = vunpack.c.h.b16 %v3327
    %v4201 = vunpack.c.l.b16 %v3328
    %v4202 = vunpack.c.h.b16 %v3328
    %v4203 = vunpack.c.l.b16 %v3329
    %v4204 = vunpack.c.h.b16 %v3329
    %v4205 = vunpack.c.l.b16 %v3330
    %v4206 = vunpack.c.h.b16 %v3330
    %v4207 = vunpack.c.l.b16 %v3331
    %v4208 = vunpack.c.h.b16 %v3331
    %v4209 = vunpack.c.l.b16 %v3332
    %v4210 = vunpack.c.h.b16 %v3332
    %v4211 = vunpack.c.l.b16 %v3333
    %v4212 = vunpack.c.h.b16 %v3333
    %v4213 = vunpack.c.l.b16 %v3334
    %v4214 = vunpack.c.h.b16 %v3334
    %v4215 = vunpack.c.l.b16 %v3335
    %v4216 = vunpack.c.h.b16 %v3335
    %v4217 = vunpack.c.l.b16 %v3336
    %v4218 = vunpack.c.h.b16 %v3336
    %v4219 = vunpack.c.l.b16 %v3337
    %v4220 = vunpack.c.h.b16 %v3337
    %v4221 = vunpack.c.l.b16 %v3338
    %v4222 = vunpack.c.h.b16 %v3338
    %v4223 = vunpack.c.l.b16 %v3339
    %v4224 = vunpack.c.h.b16 %v3339
    %v4225 = vunpack.c.l.b16 %v3340
    %v4226 = vunpack.c.h.b16 %v3340
    %v4227 = vunpack.c.l.b16 %v3341
    %v4228 = vunpack.c.h.b16 %v3341
    %v4229 = vunpack.c.l.b16 %v3342
    %v4230 = vunpack.c.h.b16 %v3342
    %v4231 = vunpack.c.l.b16 %v3343
    %v4232 = vunpack.c.h.b16 %v3343
    %v4233 = vunpack.c.l.b16 %v3344
    %v4234 = vunpack.c.h.b16 %v3344
    %v4235 = vunpack.c.l.b16 %v3345
    %v4236 = vunpack.c.h.b16 %v3345
    %v4237 = vunpack.c.l.b16 %v3346
    %v4238 = vunpack.c.h.b16 %v3346
    %v4239 = vunpack.c.l.b16 %v3347
    %v4240 = vunpack.c.h.b16 %v3347
    %v4241 = vunpack.c.l.b16 %v3348
    %v4242 = vunpack.c.h.b16 %v3348
    %v4243 = vunpack.c.l.b16 %v3349
    %v4244 = vunpack.c.h.b16 %v3349
    %v4245 = vunpack.c.l.b16 %v3350
    %v4246 = vunpack.c.h.b16 %v3350
    %v4247 = vunpack.c.l.b16 %v3351
    %v4248 = vunpack.c.h.b16 %v3351
    %v4249 = vunpack.c.l.b16 %v3352
    %v4250 = vunpack.c.h.b16 %v3352
    %v4251 = vunpack.c.l.b16 %v3353
    %v4252 = vunpack.c.h.b16 %v3353
    %v4253 = vunpack.c.l.b16 %v3354
    %v4254 = vunpack.c.h.b16 %v3354
    %v4255 = vunpack.c.l.b16 %v3355
    %v4256 = vunpack.c.h.b16 %v3355
    %v4257 = vunpack.c.l.b16 %v3356
    %v4258 = vunpack.c.h.b16 %v3356
    %v4259 = vunpack.c.l.b16 %v3357
    %v4260 = vunpack.c.h.b16 %v3357
    %v4261 = vunpack.c.l.b16 %v3358
    %v4262 = vunpack.c.h.b16 %v3358
    %v4263 = vunpack.c.l.b16 %v3359
    %v4264 = vunpack.c.h.b16 %v3359
    %v4265 = vunpack.c.l.b16 %v3360
    %v4266 = vunpack.c.h.b16 %v3360
    %v4267 = vunpack.c.l.b16 %v3361
    %v4268 = vunpack.c.h.b16 %v3361
    %v4269 = vunpack.c.l.b16 %v3362
    %v4270 = vunpack.c.h.b16 %v3362
    %v4271 = vunpack.c.l.b16 %v3363
    %v4272 = vunpack.c.h.b16 %v3363
    %v4273 = vunpack.c.l.b16 %v3364
    %v4274 = vunpack.c.h.b16 %v3364
    %v4275 = vunpack.c.l.b16 %v3365
    %v4276 = vunpack.c.h.b16 %v3365
    %v4277 = vunpack.c.l.b16 %v3366
    %v4278 = vunpack.c.h.b16 %v3366
    %v4279 = vunpack.c.l.b16 %v3367
    %v4280 = vunpack.c.h.b16 %v3367
    %v4281 = vunpack.c.l.b16 %v3368
    %v4282 = vunpack.c.h.b16 %v3368
    %v4283 = vunpack.c.l.b16 %v3369
    %v4284 = vunpack.c.h.b16 %v3369
    %v4285 = vunpack.c.l.b16 %v3370
    %v4286 = vunpack.c.h.b16 %v3370
    %v4287 = vunpack.c.l.b16 %v3371
    %v4288 = vunpack.c.h.b16 %v3371
    %v4289 = vunpack.c.l.b16 %v3372
    %v4290 = vunpack.c.h.b16 %v3372
    %v4291 = vunpack.c.l.b16 %v3373
    %v4292 = vunpack.c.h.b16 %v3373
    %v4293 = vunpack.c.l.b16 %v3374
    %v4294 = vunpack.c.h.b16 %v3374
    %v4295 = vunpack.c.l.b16 %v3375
    %v4296 = vunpack.c.h.b16 %v3375
    %v4297 = vunpack.c.l.b16 %v3376
    %v4298 = vunpack.c.h.b16 %v3376
    %v4299 = vunpack.c.l.b16 %v3377
    %v4300 = vunpack.c.h.b16 %v3377
    %v4301 = vunpack.c.l.b16 %v3378
    %v4302 = vunpack.c.h.b16 %v3378
    %v4303 = vunpack.c.l.b16 %v3379
    %v4304 = vunpack.c.h.b16 %v3379
    %v4305 = vunpack.c.l.b16 %v3380
    %v4306 = vunpack.c.h.b16 %v3380
    %v4307 = vunpack.c.l.b16 %v3381
    %v4308 = vunpack.c.h.b16 %v3381
    %v4309 = vunpack.c.l.b16 %v3382
    %v4310 = vunpack.c.h.b16 %v3382
    %v4311 = vunpack.c.l.b16 %v3383
    %v4312 = vunpack.c.h.b16 %v3383
    %v4313 = vunpack.c.l.b16 %v3384
    %v4314 = vunpack.c.h.b16 %v3384
    %v4315 = vunpack.c.l.b16 %v3385
    %v4316 = vunpack.c.h.b16 %v3385
    %v4317 = vunpack.c.l.b16 %v3386
    %v4318 = vunpack.c.h.b16 %v3386
    %v4319 = vunpack.c.l.b16 %v3387
    %v4320 = vunpack.c.h.b16 %v3387
    %v4321 = vunpack.c.l.b16 %v3388
    %v4322 = vunpack.c.h.b16 %v3388
    %v4323 = vunpack.c.l.b16 %v3389
    %v4324 = vunpack.c.h.b16 %v3389
    %v4325 = vunpack.c.l.b16 %v3390
    %v4326 = vunpack.c.h.b16 %v3390
    %v4327 = vpack.c.b16 %v3847, %v3815
    %v4328 = vpack.c.b16 %v3848, %v3816
    %v4329 = vpack.c.b16 %v3849, %v3817
    %v4330 = vpack.c.b16 %v3850, %v3818
    %v4331 = vpack.c.b16 %v3851, %v3819
    %v4332 = vpack.c.b16 %v3852, %v3820
    %v4333 = vpack.c.b16 %v3853, %v3821
    %v4334 = vpack.c.b16 %v3854, %v3822
    %v4335 = vpack.c.b16 %v3855, %v3823
    %v4336 = vpack.c.b16 %v3856, %v3824
    %v4337 = vpack.c.b16 %v3857, %v3825
    %v4338 = vpack.c.b16 %v3858, %v3826
    %v4339 = vpack.c.b16 %v3859, %v3827
    %v4340 = vpack.c.b16 %v3860, %v3828
    %v4341 = vpack.c.b16 %v3861, %v3829
    %v4342 = vpack.c.b16 %v3862, %v3830
    %v4343 = vpack.c.b16 %v3863, %v3831
    %v4344 = vpack.c.b16 %v3864, %v3832
    %v4345 = vpack.c.b16 %v3865, %v3833
    %v4346 = vpack.c.b16 %v3866, %v3834
    %v4347 = vpack.c.b16 %v3867, %v3835
    %v4348 = vpack.c.b16 %v3868, %v3836
    %v4349 = vpack.c.b16 %v3869, %v3837
    %v4350 = vpack.c.b16 %v3870, %v3838
    %v4351 = vpack.c.b16 %v3871, %v3839
    %v4352 = vpack.c.b16 %v3872, %v3840
    %v4353 = vpack.c.b16 %v3873, %v3841
    %v4354 = vpack.c.b16 %v3874, %v3842
    %v4355 = vpack.c.b16 %v3875, %v3843
    %v4356 = vpack.c.b16 %v3876, %v3844
    %v4357 = vpack.c.b16 %v3877, %v3845
    %v4358 = vpack.c.b16 %v3878, %v3846
    %v4359 = vpack.c.b16 %v3911, %v3879
    %v4360 = vpack.c.b16 %v3912, %v3880
    %v4361 = vpack.c.b16 %v3913, %v3881
    %v4362 = vpack.c.b16 %v3914, %v3882
    %v4363 = vpack.c.b16 %v3915, %v3883
    %v4364 = vpack.c.b16 %v3916, %v3884
    %v4365 = vpack.c.b16 %v3917, %v3885
    %v4366 = vpack.c.b16 %v3918, %v3886
    %v4367 = vpack.c.b16 %v3919, %v3887
    %v4368 = vpack.c.b16 %v3920, %v3888
    %v4369 = vpack.c.b16 %v3921, %v3889
    %v4370 = vpack.c.b16 %v3922, %v3890
    %v4371 = vpack.c.b16 %v3923, %v3891
    %v4372 = vpack.c.b16 %v3924, %v3892
    %v4373 = vpack.c.b16 %v3925, %v3893
    %v4374 = vpack.c.b16 %v3926, %v3894
    %v4375 = vpack.c.b16 %v3927, %v3895
    %v4376 = vpack.c.b16 %v3928, %v3896
    %v4377 = vpack.c.b16 %v3929, %v3897
    %v4378 = vpack.c.b16 %v3930, %v3898
    %v4379 = vpack.c.b16 %v3931, %v3899
    %v4380 = vpack.c.b16 %v3932, %v3900
    %v4381 = vpack.c.b16 %v3933, %v3901
    %v4382 = vpack.c.b16 %v3934, %v3902
    %v4383 = vpack.c.b16 %v3935, %v3903
    %v4384 = vpack.c.b16 %v3936, %v3904
    %v4385 = vpack.c.b16 %v3937, %v3905
    %v4386 = vpack.c.b16 %v3938, %v3906
    %v4387 = vpack.c.b16 %v3939, %v3907
    %v4388 = vpack.c.b16 %v3940, %v3908
    %v4389 = vpack.c.b16 %v3941, %v3909
    %v4390 = vpack.c.b16 %v3942, %v3910
    %v4391 = vpack.c.b16 %v3975, %v3943
    %v4392 = vpack.c.b16 %v3976, %v3944
    %v4393 = vpack.c.b16 %v3977, %v3945
    %v4394 = vpack.c.b16 %v3978, %v3946
    %v4395 = vpack.c.b16 %v3979, %v3947
    %v4396 = vpack.c.b16 %v3980, %v3948
    %v4397 = vpack.c.b16 %v3981, %v3949
    %v4398 = vpack.c.b16 %v3982, %v3950
    %v4399 = vpack.c.b16 %v3983, %v3951
    %v4400 = vpack.c.b16 %v3984, %v3952
    %v4401 = vpack.c.b16 %v3985, %v3953
    %v4402 = vpack.c.b16 %v3986, %v3954
    %v4403 = vpack.c.b16 %v3987, %v3955
    %v4404 = vpack.c.b16 %v3988, %v3956
    %v4405 = vpack.c.b16 %v3989, %v3957
    %v4406 = vpack.c.b16 %v3990, %v3958
    %v4407 = vpack.c.b16 %v3991, %v3959
    %v4408 = vpack.c.b16 %v3992, %v3960
    %v4409 = vpack.c.b16 %v3993, %v3961
    %v4410 = vpack.c.b16 %v3994, %v3962
    %v4411 = vpack.c.b16 %v3995, %v3963
    %v4412 = vpack.c.b16 %v3996, %v3964
    %v4413 = vpack.c.b16 %v3997, %v3965
    %v4414 = vpack.c.b16 %v3998, %v3966
    %v4415 = vpack.c.b16 %v3999, %v3967
    %v4416 = vpack.c.b16 %v4000, %v3968
    %v4417 = vpack.c.b16 %v4001, %v3969
    %v4418 = vpack.c.b16 %v4002, %v3970
    %v4419 = vpack.c.b16 %v4003, %v3971
    %v4420 = vpack.c.b16 %v4004, %v3972
    %v4421 = vpack.c.b16 %v4005, %v3973
    %v4422 = vpack.c.b16 %v4006, %v3974
    %v4423 = vpack.c.b16 %v4039, %v4007
    %v4424 = vpack.c.b16 %v4040, %v4008
    %v4425 = vpack.c.b16 %v4041, %v4009
    %v4426 = vpack.c.b16 %v4042, %v4010
    %v4427 = vpack.c.b16 %v4043, %v4011
    %v4428 = vpack.c.b16 %v4044, %v4012
    %v4429 = vpack.c.b16 %v4045, %v4013
    %v4430 = vpack.c.b16 %v4046, %v4014
    %v4431 = vpack.c.b16 %v4047, %v4015
    %v4432 = vpack.c.b16 %v4048, %v4016
    %v4433 = vpack.c.b16 %v4049, %v4017
    %v4434 = vpack.c.b16 %v4050, %v4018
    %v4435 = vpack.c.b16 %v4051, %v4019
    %v4436 = vpack.c.b16 %v4052, %v4020
    %v4437 = vpack.c.b16 %v4053, %v4021
    %v4438 = vpack.c.b16 %v4054, %v4022
    %v4439 = vpack.c.b16 %v4055, %v4023
    %v4440 = vpack.c.b16 %v4056, %v4024
    %v4441 = vpack.c.b16 %v4057, %v4025
    %v4442 = vpack.c.b16 %v4058, %v4026
    %v4443 = vpack.c.b16 %v4059, %v4027
    %v4444 = vpack.c.b16 %v4060, %v4028
    %v4445 = vpack.c.b16 %v4061, %v4029
    %v4446 = vpack.c.b16 %v4062, %v4030
    %v4447 = vpack.c.b16 %v4063, %v4031
    %v4448 = vpack.c.b16 %v4064, %v4032
    %v4449 = vpack.c.b16 %v4065, %v4033
    %v4450 = vpack.c.b16 %v4066, %v4034
    %v4451 = vpack.c.b16 %v4067, %v4035
    %v4452 = vpack.c.b16 %v4068, %v4036
    %v4453 = vpack.c.b16 %v4069, %v4037
    %v4454 = vpack.c.b16 %v4070, %v4038
    %v4455 = vpack.c.b16 %v4103, %v4071
    %v4456 = vpack.c.b16 %v4104, %v4072
    %v4457 = vpack.c.b16 %v4105, %v4073
    %v4458 = vpack.c.b16 %v4106, %v4074
    %v4459 = vpack.c.b16 %v4107, %v4075
    %v4460 = vpack.c.b16 %v4108, %v4076
    %v4461 = vpack.c.b16 %v4109, %v4077
    %v4462 = vpack.c.b16 %v4110, %v4078
    %v4463 = vpack.c.b16 %v4111, %v4079
    %v4464 = vpack.c.b16 %v4112, %v4080
    %v4465 = vpack.c.b16 %v4113, %v4081
    %v4466 = vpack.c.b16 %v4114, %v4082
    %v4467 = vpack.c.b16 %v4115, %v4083
    %v4468 = vpack.c.b16 %v4116, %v4084
    %v4469 = vpack.c.b16 %v4117, %v4085
    %v4470 = vpack.c.b16 %v4118, %v4086
    %v4471 = vpack.c.b16 %v4119, %v4087
    %v4472 = vpack.c.b16 %v4120, %v4088
    %v4473 = vpack.c.b16 %v4121, %v4089
    %v4474 = vpack.c.b16 %v4122, %v4090
    %v4475 = vpack.c.b16 %v4123, %v4091
    %v4476 = vpack.c.b16 %v4124, %v4092
    %v4477 = vpack.c.b16 %v4125, %v4093
    %v4478 = vpack.c.b16 %v4126, %v4094
    %v4479 = vpack.c.b16 %v4127, %v4095
    %v4480 = vpack.c.b16 %v4128, %v4096
    %v4481 = vpack.c.b16 %v4129, %v4097
    %v4482 = vpack.c.b16 %v4130, %v4098
    %v4483 = vpack.c.b16 %v4131, %v4099
    %v4484 = vpack.c.b16 %v4132, %v4100
    %v4485 = vpack.c.b16 %v4133, %v4101
    %v4486 = vpack.c.b16 %v4134, %v4102
    %v4487 = vpack.c.b16 %v4167, %v4135
    %v4488 = vpack.c.b16 %v4168, %v4136
    %v4489 = vpack.c.b16 %v4169, %v4137
    %v4490 = vpack.c.b16 %v4170, %v4138
    %v4491 = vpack.c.b16 %v4171, %v4139
    %v4492 = vpack.c.b16 %v4172, %v4140
    %v4493 = vpack.c.b16 %v4173, %v4141
    %v4494 = vpack.c.b16 %v4174, %v4142
    %v4495 = vpack.c.b16 %v4175, %v4143
    %v4496 = vpack.c.b16 %v4176, %v4144
    %v4497 = vpack.c.b16 %v4177, %v4145
    %v4498 = vpack.c.b16 %v4178, %v4146
    %v4499 = vpack.c.b16 %v4179, %v4147
    %v4500 = vpack.c.b16 %v4180, %v4148
    %v4501 = vpack.c.b16 %v4181, %v4149
    %v4502 = vpack.c.b16 %v4182, %v4150
    %v4503 = vpack.c.b16 %v4183, %v4151
    %v4504 = vpack.c.b16 %v4184, %v4152
    %v4505 = vpack.c.b16 %v4185, %v4153
    %v4506 = vpack.c.b16 %v4186, %v4154
    %v4507 = vpack.c.b16 %v4187, %v4155
    %v4508 = vpack.c.b16 %v4188, %v4156
    %v4509 = vpack.c.b16 %v4189, %v4157
    %v4510 = vpack.c.b16 %v4190, %v4158
    %v4511 = vpack.c.b16 %v4191, %v4159
    %v4512 = vpack.c.b16 %v4192, %v4160
    %v4513 = vpack.c.b16 %v4193, %v4161
    %v4514 = vpack.c.b16 %v4194, %v4162
    %v4515 = vpack.c.b16 %v4195, %v4163
    %v4516 = vpack.c.b16 %v4196, %v4164
    %v4517 = vpack.c.b16 %v4197, %v4165
    %v4518 = vpack.c.b16 %v4198, %v4166
    %v4519 = vpack.c.b16 %v4231, %v4199
    %v4520 = vpack.c.b16 %v4232, %v4200
    %v4521 = vpack.c.b16 %v4233, %v4201
    %v4522 = vpack.c.b16 %v4234, %v4202
    %v4523 = vpack.c.b16 %v4235, %v4203
    %v4524 = vpack.c.b16 %v4236, %v4204
    %v4525 = vpack.c.b16 %v4237, %v4205
    %v4526 = vpack.c.b16 %v4238, %v4206
    %v4527 = vpack.c.b16 %v4239, %v4207
    %v4528 = vpack.c.b16 %v4240, %v4208
    %v4529 = vpack.c.b16 %v4241, %v4209
    %v4530 = vpack.c.b16 %v4242, %v4210
    %v4531 = vpack.c.b16 %v4243, %v4211
    %v4532 = vpack.c.b16 %v4244, %v4212
    %v4533 = vpack.c.b16 %v4245, %v4213
    %v4534 = vpack.c.b16 %v4246, %v4214
    %v4535 = vpack.c.b16 %v4247, %v4215
    %v4536 = vpack.c.b16 %v4248, %v4216
    %v4537 = vpack.c.b16 %v4249, %v4217
    %v4538 = vpack.c.b16 %v4250, %v4218
    %v4539 = vpack.c.b16 %v4251, %v4219
    %v4540 = vpack.c.b16 %v4252, %v4220
    %v4541 = vpack.c.b16 %v4253, %v4221
    %v4542 = vpack.c.b16 %v4254, %v4222
    %v4543 = vpack.c.b16 %v4255, %v4223
    %v4544 = vpack.c.b16 %v4256, %v4224
    %v4545 = vpack.c.b16 %v4257, %v4225
    %v4546 = vpack.c.b16 %v4258, %v4226
    %v4547 = vpack.c.b16 %v4259, %v4227
    %v4548 = vpack.c.b16 %v4260, %v4228
    %v4549 = vpack.c.b16 %v4261, %v4229
    %v4550 = vpack.c.b16 %v4262, %v4230
    %v4551 = vpack.c.b16 %v4295, %v4263
    %v4552 = vpack.c.b16 %v4296, %v4264
    %v4553 = vpack.c.b16 %v4297, %v4265
    %v4554 = vpack.c.b16 %v4298, %v4266
    %v4555 = vpack.c.b16 %v4299, %v4267
    %v4556 = vpack.c.b16 %v4300, %v4268
    %v4557 = vpack.c.b16 %v4301, %v4269
    %v4558 = vpack.c.b16 %v4302, %v4270
    %v4559 = vpack.c.b16 %v4303, %v4271
    %v4560 = vpack.c.b16 %v4304, %v4272
    %v4561 = vpack.c.b16 %v4305, %v4273
    %v4562 = vpack.c.b16 %v4306, %v4274
    %v4563 = vpack.c.b16 %v4307, %v4275
    %v4564 = vpack.c.b16 %v4308, %v4276
    %v4565 = vpack.c.b16 %v4309, %v4277
    %v4566 = vpack.c.b16 %v4310, %v4278
    %v4567 = vpack.c.b16 %v4311, %v4279
    %v4568 = vpack.c.b16 %v4312, %v4280
    %v4569 = vpack.c.b16 %v4313, %v4281
    %v4570 = vpack.c.b16 %v4314, %v4282
    %v4571 = vpack.c.b16 %v4315, %v4283
    %v4572 = vpack.c.b16 %v4316, %v4284
    %v4573 = vpack.c.b16 %v4317, %v4285
    %v4574 = vpack.c.b16 %v4318, %v4286
    %v4575 = vpack.c.b16 %v4319, %v4287
    %v4576 = vpack.c.b16 %v4320, %v4288
    %v4577 = vpack.c.b16 %v4321, %v4289
    %v4578 = vpack.c.b16 %v4322, %v4290
    %v4579 = vpack.c.b16 %v4323, %v4291
    %v4580 = vpack.c.b16 %v4324, %v4292
    %v4581 = vpack.c.b16 %v4325, %v4293
    %v4582 = vpack.c.b16 %v4326, %v4294
    %4839 = vmatprep.subr.bf16.mxu0 %v4328
    %4840 = vmatpush1.bf16.msra.mxu0 %v4327
    %4841 = vmatprep.subr.bf16.mxu0 %v4360
    %4842 = vmatpush1.bf16.msra.mxu0 %v4359
    %4843 = vmatprep.subr.bf16.mxu0 %v4392
    %4844 = vmatpush1.bf16.msra.mxu0 %v4391
    %4845 = vmatprep.subr.bf16.mxu0 %v4424
    %4846 = vmatpush1.bf16.msra.mxu0 %v4423
    %4847 = vmatprep.subr.bf16.mxu0 %v4456
    %4848 = vmatpush1.bf16.msra.mxu0 %v4455
    %4849 = vmatprep.subr.bf16.mxu0 %v4488
    %4850 = vmatpush1.bf16.msra.mxu0 %v4487
    %4851 = vmatprep.subr.bf16.mxu0 %v4520
    %4852 = vmatpush1.bf16.msra.mxu0 %v4519
    %4853 = vmatprep.subr.bf16.mxu0 %v4552
    %4854 = vmatpush1.bf16.msra.mxu0 %v4551
    %4855 = vmatprep.subr.bf16.mxu0 0
    %4856 = vmatpush1.bf16.msra.mxu0 0
    %4857 = vmatprep.subr.bf16.mxu0 0
    %4858 = vmatpush1.bf16.msra.mxu0 0
    %4859 = vmatprep.subr.bf16.mxu0 0
    %4860 = vmatpush1.bf16.msra.mxu0 0
    %4861 = vmatprep.subr.bf16.mxu0 0
    %4862 = vmatpush1.bf16.msra.mxu0 0
    %4863 = vmatprep.subr.bf16.mxu0 0
    %4864 = vmatpush1.bf16.msra.mxu0 0
    %4865 = vmatprep.subr.bf16.mxu0 0
    %4866 = vmatpush1.bf16.msra.mxu0 0
    %4867 = vmatprep.subr.bf16.mxu0 0
    %4868 = vmatpush1.bf16.msra.mxu0 0
    %4869 = vmatprep.subr.bf16.mxu0 0
    %4870 = vmatpush1.bf16.msra.mxu0 0
    %4871 = vmatprep.mubr.bf16.mxu0 0
    %4872 = vmatmul.mubr.bf16.gmra.mrb[0].mxu0 %v3134
    %v4873 = vpop.f32.mrb[0].mxu0
    %v4874 = vadd.f32 %v3402, %v4873
    %v4875 = vpop.f32.mrb[0].mxu0
    %v4876 = vadd.f32 %v3406, %v4875
    %v4877 = vpop.f32.mrb[0].mxu0
    %v4878 = vpop.f32.mrb[0].mxu0
    %4879 = vdwg.mxu0
    %4880 = vmatprep.subr.bf16.mxu0 %v4330
    %4881 = vmatpush1.bf16.msra.mxu0 %v4329
    %4882 = vmatprep.subr.bf16.mxu0 %v4362
    %4883 = vmatpush1.bf16.msra.mxu0 %v4361
    %4884 = vmatprep.subr.bf16.mxu0 %v4394
    %4885 = vmatpush1.bf16.msra.mxu0 %v4393
    %4886 = vmatprep.subr.bf16.mxu0 %v4426
    %4887 = vmatpush1.bf16.msra.mxu0 %v4425
    %4888 = vmatprep.subr.bf16.mxu0 %v4458
    %4889 = vmatpush1.bf16.msra.mxu0 %v4457
    %4890 = vmatprep.subr.bf16.mxu0 %v4490
    %4891 = vmatpush1.bf16.msra.mxu0 %v4489
    %4892 = vmatprep.subr.bf16.mxu0 %v4522
    %4893 = vmatpush1.bf16.msra.mxu0 %v4521
    %4894 = vmatprep.subr.bf16.mxu0 %v4554
    %4895 = vmatpush1.bf16.msra.mxu0 %v4553
    %4896 = vmatprep.subr.bf16.mxu0 0
    %4897 = vmatpush1.bf16.msra.mxu0 0
    %4898 = vmatprep.subr.bf16.mxu0 0
    %4899 = vmatpush1.bf16.msra.mxu0 0
    %4900 = vmatprep.subr.bf16.mxu0 0
    %4901 = vmatpush1.bf16.msra.mxu0 0
    %4902 = vmatprep.subr.bf16.mxu0 0
    %4903 = vmatpush1.bf16.msra.mxu0 0
    %4904 = vmatprep.subr.bf16.mxu0 0
    %4905 = vmatpush1.bf16.msra.mxu0 0
    %4906 = vmatprep.subr.bf16.mxu0 0
    %4907 = vmatpush1.bf16.msra.mxu0 0
    %4908 = vmatprep.subr.bf16.mxu0 0
    %4909 = vmatpush1.bf16.msra.mxu0 0
    %4910 = vmatprep.subr.bf16.mxu0 0
    %4911 = vmatpush1.bf16.msra.mxu0 0
    %4912 = vmatprep.mubr.bf16.mxu0 0
    %4913 = vmatmul.mubr.bf16.gmra.mrb[0].mxu0 %v3134
    %v4914 = vpop.f32.mrb[0].mxu0
    %v4915 = vadd.f32 %v3410, %v4914
    %v4916 = vpop.f32.mrb[0].mxu0
    %v4917 = vadd.f32 %v3414, %v4916
    %v4918 = vpop.f32.mrb[0].mxu0
    %v4919 = vpop.f32.mrb[0].mxu0
    %4920 = vdwg.mxu0
    %4921 = vmatprep.subr.bf16.mxu0 %v4332
    %4922 = vmatpush1.bf16.msra.mxu0 %v4331
    %4923 = vmatprep.subr.bf16.mxu0 %v4364
    %4924 = vmatpush1.bf16.msra.mxu0 %v4363
    %4925 = vmatprep.subr.bf16.mxu0 %v4396
    %4926 = vmatpush1.bf16.msra.mxu0 %v4395
    %4927 = vmatprep.subr.bf16.mxu0 %v4428
    %4928 = vmatpush1.bf16.msra.mxu0 %v4427
    %4929 = vmatprep.subr.bf16.mxu0 %v4460
    %4930 = vmatpush1.bf16.msra.mxu0 %v4459
    %4931 = vmatprep.subr.bf16.mxu0 %v4492
    %4932 = vmatpush1.bf16.msra.mxu0 %v4491
    %4933 = vmatprep.subr.bf16.mxu0 %v4524
    %4934 = vmatpush1.bf16.msra.mxu0 %v4523
    %4935 = vmatprep.subr.bf16.mxu0 %v4556
    %4936 = vmatpush1.bf16.msra.mxu0 %v4555
    %4937 = vmatprep.subr.bf16.mxu0 0
    %4938 = vmatpush1.bf16.msra.mxu0 0
    %4939 = vmatprep.subr.bf16.mxu0 0
    %4940 = vmatpush1.bf16.msra.mxu0 0
    %4941 = vmatprep.subr.bf16.mxu0 0
    %4942 = vmatpush1.bf16.msra.mxu0 0
    %4943 = vmatprep.subr.bf16.mxu0 0
    %4944 = vmatpush1.bf16.msra.mxu0 0
    %4945 = vmatprep.subr.bf16.mxu0 0
    %4946 = vmatpush1.bf16.msra.mxu0 0
    %4947 = vmatprep.subr.bf16.mxu0 0
    %4948 = vmatpush1.bf16.msra.mxu0 0
    %4949 = vmatprep.subr.bf16.mxu0 0
    %4950 = vmatpush1.bf16.msra.mxu0 0
    %4951 = vmatprep.subr.bf16.mxu0 0
    %4952 = vmatpush1.bf16.msra.mxu0 0
    %4953 = vmatprep.mubr.bf16.mxu0 0
    %4954 = vmatmul.mubr.bf16.gmra.mrb[0].mxu0 %v3134
    %v4955 = vpop.f32.mrb[0].mxu0
    %v4956 = vadd.f32 %v3418, %v4955
    %v4957 = vpop.f32.mrb[0].mxu0
    %v4958 = vadd.f32 %v3422, %v4957
    %v4959 = vpop.f32.mrb[0].mxu0
    %v4960 = vpop.f32.mrb[0].mxu0
    %4961 = vdwg.mxu0
    %4962 = vmatprep.subr.bf16.mxu0 %v4334
    %4963 = vmatpush1.bf16.msra.mxu0 %v4333
    %4964 = vmatprep.subr.bf16.mxu0 %v4366
    %4965 = vmatpush1.bf16.msra.mxu0 %v4365
    %4966 = vmatprep.subr.bf16.mxu0 %v4398
    %4967 = vmatpush1.bf16.msra.mxu0 %v4397
    %4968 = vmatprep.subr.bf16.mxu0 %v4430
    %4969 = vmatpush1.bf16.msra.mxu0 %v4429
    %4970 = vmatprep.subr.bf16.mxu0 %v4462
    %4971 = vmatpush1.bf16.msra.mxu0 %v4461
    %4972 = vmatprep.subr.bf16.mxu0 %v4494
    %4973 = vmatpush1.bf16.msra.mxu0 %v4493
    %4974 = vmatprep.subr.bf16.mxu0 %v4526
    %4975 = vmatpush1.bf16.msra.mxu0 %v4525
    %4976 = vmatprep.subr.bf16.mxu0 %v4558
    %4977 = vmatpush1.bf16.msra.mxu0 %v4557
    %4978 = vmatprep.subr.bf16.mxu0 0
    %4979 = vmatpush1.bf16.msra.mxu0 0
    %4980 = vmatprep.subr.bf16.mxu0 0
    %4981 = vmatpush1.bf16.msra.mxu0 0
    %4982 = vmatprep.subr.bf16.mxu0 0
    %4983 = vmatpush1.bf16.msra.mxu0 0
    %4984 = vmatprep.subr.bf16.mxu0 0
    %4985 = vmatpush1.bf16.msra.mxu0 0
    %4986 = vmatprep.subr.bf16.mxu0 0
    %4987 = vmatpush1.bf16.msra.mxu0 0
    %4988 = vmatprep.subr.bf16.mxu0 0
    %4989 = vmatpush1.bf16.msra.mxu0 0
    %4990 = vmatprep.subr.bf16.mxu0 0
    %4991 = vmatpush1.bf16.msra.mxu0 0
    %4992 = vmatprep.subr.bf16.mxu0 0
    %4993 = vmatpush1.bf16.msra.mxu0 0
    %4994 = vmatprep.mubr.bf16.mxu0 0
    %4995 = vmatmul.mubr.bf16.gmra.mrb[0].mxu0 %v3134
    %v4996 = vpop.f32.mrb[0].mxu0
    %v4997 = vadd.f32 %v3426, %v4996
    %v4998 = vpop.f32.mrb[0].mxu0
    %v4999 = vadd.f32 %v3430, %v4998
    %v5000 = vpop.f32.mrb[0].mxu0
    %v5001 = vpop.f32.mrb[0].mxu0
    %5002 = vdwg.mxu0
    %5003 = vmatprep.subr.bf16.mxu0 %v4336
    %5004 = vmatpush1.bf16.msra.mxu0 %v4335
    %5005 = vmatprep.subr.bf16.mxu0 %v4368
    %5006 = vmatpush1.bf16.msra.mxu0 %v4367
    %5007 = vmatprep.subr.bf16.mxu0 %v4400
    %5008 = vmatpush1.bf16.msra.mxu0 %v4399
    %5009 = vmatprep.subr.bf16.mxu0 %v4432
    %5010 = vmatpush1.bf16.msra.mxu0 %v4431
    %5011 = vmatprep.subr.bf16.mxu0 %v4464
    %5012 = vmatpush1.bf16.msra.mxu0 %v4463
    %5013 = vmatprep.subr.bf16.mxu0 %v4496
    %5014 = vmatpush1.bf16.msra.mxu0 %v4495
    %5015 = vmatprep.subr.bf16.mxu0 %v4528
    %5016 = vmatpush1.bf16.msra.mxu0 %v4527
    %5017 = vmatprep.subr.bf16.mxu0 %v4560
    %5018 = vmatpush1.bf16.msra.mxu0 %v4559
    %5019 = vmatprep.subr.bf16.mxu0 0
    %5020 = vmatpush1.bf16.msra.mxu0 0
    %5021 = vmatprep.subr.bf16.mxu0 0
    %5022 = vmatpush1.bf16.msra.mxu0 0
    %5023 = vmatprep.subr.bf16.mxu0 0
    %5024 = vmatpush1.bf16.msra.mxu0 0
    %5025 = vmatprep.subr.bf16.mxu0 0
    %5026 = vmatpush1.bf16.msra.mxu0 0
    %5027 = vmatprep.subr.bf16.mxu0 0
    %5028 = vmatpush1.bf16.msra.mxu0 0
    %5029 = vmatprep.subr.bf16.mxu0 0
    %5030 = vmatpush1.bf16.msra.mxu0 0
    %5031 = vmatprep.subr.bf16.mxu0 0
    %5032 = vmatpush1.bf16.msra.mxu0 0
    %5033 = vmatprep.subr.bf16.mxu0 0
    %5034 = vmatpush1.bf16.msra.mxu0 0
    %5035 = vmatprep.mubr.bf16.mxu0 0
    %5036 = vmatmul.mubr.bf16.gmra.mrb[0].mxu0 %v3134
    %v5037 = vpop.f32.mrb[0].mxu0
    %v5038 = vadd.f32 %v3434, %v5037
    %v5039 = vpop.f32.mrb[0].mxu0
    %v5040 = vadd.f32 %v3438, %v5039
    %v5041 = vpop.f32.mrb[0].mxu0
    %v5042 = vpop.f32.mrb[0].mxu0
    %5043 = vdwg.mxu0
    %5044 = vmatprep.subr.bf16.mxu0 %v4338
    %5045 = vmatpush1.bf16.msra.mxu0 %v4337
    %5046 = vmatprep.subr.bf16.mxu0 %v4370
    %5047 = vmatpush1.bf16.msra.mxu0 %v4369
    %5048 = vmatprep.subr.bf16.mxu0 %v4402
    %5049 = vmatpush1.bf16.msra.mxu0 %v4401
    %5050 = vmatprep.subr.bf16.mxu0 %v4434
    %5051 = vmatpush1.bf16.msra.mxu0 %v4433
    %5052 = vmatprep.subr.bf16.mxu0 %v4466
    %5053 = vmatpush1.bf16.msra.mxu0 %v4465
    %5054 = vmatprep.subr.bf16.mxu0 %v4498
    %5055 = vmatpush1.bf16.msra.mxu0 %v4497
    %5056 = vmatprep.subr.bf16.mxu0 %v4530
    %5057 = vmatpush1.bf16.msra.mxu0 %v4529
    %5058 = vmatprep.subr.bf16.mxu0 %v4562
    %5059 = vmatpush1.bf16.msra.mxu0 %v4561
    %5060 = vmatprep.subr.bf16.mxu0 0
    %5061 = vmatpush1.bf16.msra.mxu0 0
    %5062 = vmatprep.subr.bf16.mxu0 0
    %5063 = vmatpush1.bf16.msra.mxu0 0
    %5064 = vmatprep.subr.bf16.mxu0 0
    %5065 = vmatpush1.bf16.msra.mxu0 0
    %5066 = vmatprep.subr.bf16.mxu0 0
    %5067 = vmatpush1.bf16.msra.mxu0 0
    %5068 = vmatprep.subr.bf16.mxu0 0
    %5069 = vmatpush1.bf16.msra.mxu0 0
    %5070 = vmatprep.subr.bf16.mxu0 0
    %5071 = vmatpush1.bf16.msra.mxu0 0
    %5072 = vmatprep.subr.bf16.mxu0 0
    %5073 = vmatpush1.bf16.msra.mxu0 0
    %5074 = vmatprep.subr.bf16.mxu0 0
    %5075 = vmatpush1.bf16.msra.mxu0 0
    %5076 = vmatprep.mubr.bf16.mxu0 0
    %5077 = vmatmul.mubr.bf16.gmra.mrb[0].mxu0 %v3134
    %v5078 = vpop.f32.mrb[0].mxu0
    %v5079 = vadd.f32 %v3442, %v5078
    %v5080 = vpop.f32.mrb[0].mxu0
    %v5081 = vadd.f32 %v3446, %v5080
    %v5082 = vpop.f32.mrb[0].mxu0
    %v5083 = vpop.f32.mrb[0].mxu0
    %5084 = vdwg.mxu0
    %5085 = vmatprep.subr.bf16.mxu0 %v4340
    %5086 = vmatpush1.bf16.msra.mxu0 %v4339
    %5087 = vmatprep.subr.bf16.mxu0 %v4372
    %5088 = vmatpush1.bf16.msra.mxu0 %v4371
    %5089 = vmatprep.subr.bf16.mxu0 %v4404
    %5090 = vmatpush1.bf16.msra.mxu0 %v4403
    %5091 = vmatprep.subr.bf16.mxu0 %v4436
    %5092 = vmatpush1.bf16.msra.mxu0 %v4435
    %5093 = vmatprep.subr.bf16.mxu0 %v4468
    %5094 = vmatpush1.bf16.msra.mxu0 %v4467
    %5095 = vmatprep.subr.bf16.mxu0 %v4500
    %5096 = vmatpush1.bf16.msra.mxu0 %v4499
    %5097 = vmatprep.subr.bf16.mxu0 %v4532
    %5098 = vmatpush1.bf16.msra.mxu0 %v4531
    %5099 = vmatprep.subr.bf16.mxu0 %v4564
    %5100 = vmatpush1.bf16.msra.mxu0 %v4563
    %5101 = vmatprep.subr.bf16.mxu0 0
    %5102 = vmatpush1.bf16.msra.mxu0 0
    %5103 = vmatprep.subr.bf16.mxu0 0
    %5104 = vmatpush1.bf16.msra.mxu0 0
    %5105 = vmatprep.subr.bf16.mxu0 0
    %5106 = vmatpush1.bf16.msra.mxu0 0
    %5107 = vmatprep.subr.bf16.mxu0 0
    %5108 = vmatpush1.bf16.msra.mxu0 0
    %5109 = vmatprep.subr.bf16.mxu0 0
    %5110 = vmatpush1.bf16.msra.mxu0 0
    %5111 = vmatprep.subr.bf16.mxu0 0
    %5112 = vmatpush1.bf16.msra.mxu0 0
    %5113 = vmatprep.subr.bf16.mxu0 0
    %5114 = vmatpush1.bf16.msra.mxu0 0
    %5115 = vmatprep.subr.bf16.mxu0 0
    %5116 = vmatpush1.bf16.msra.mxu0 0
    %5117 = vmatprep.mubr.bf16.mxu0 0
    %5118 = vmatmul.mubr.bf16.gmra.mrb[0].mxu0 %v3134
    %v5119 = vpop.f32.mrb[0].mxu0
    %v5120 = vadd.f32 %v3450, %v5119
    %v5121 = vpop.f32.mrb[0].mxu0
    %v5122 = vadd.f32 %v3454, %v5121
    %v5123 = vpop.f32.mrb[0].mxu0
    %v5124 = vpop.f32.mrb[0].mxu0
    %5125 = vdwg.mxu0
    %5126 = vmatprep.subr.bf16.mxu0 %v4342
    %5127 = vmatpush1.bf16.msra.mxu0 %v4341
    %5128 = vmatprep.subr.bf16.mxu0 %v4374
    %5129 = vmatpush1.bf16.msra.mxu0 %v4373
    %5130 = vmatprep.subr.bf16.mxu0 %v4406
    %5131 = vmatpush1.bf16.msra.mxu0 %v4405
    %5132 = vmatprep.subr.bf16.mxu0 %v4438
    %5133 = vmatpush1.bf16.msra.mxu0 %v4437
    %5134 = vmatprep.subr.bf16.mxu0 %v4470
    %5135 = vmatpush1.bf16.msra.mxu0 %v4469
    %5136 = vmatprep.subr.bf16.mxu0 %v4502
    %5137 = vmatpush1.bf16.msra.mxu0 %v4501
    %5138 = vmatprep.subr.bf16.mxu0 %v4534
    %5139 = vmatpush1.bf16.msra.mxu0 %v4533
    %5140 = vmatprep.subr.bf16.mxu0 %v4566
    %5141 = vmatpush1.bf16.msra.mxu0 %v4565
    %5142 = vmatprep.subr.bf16.mxu0 0
    %5143 = vmatpush1.bf16.msra.mxu0 0
    %5144 = vmatprep.subr.bf16.mxu0 0
    %5145 = vmatpush1.bf16.msra.mxu0 0
    %5146 = vmatprep.subr.bf16.mxu0 0
    %5147 = vmatpush1.bf16.msra.mxu0 0
    %5148 = vmatprep.subr.bf16.mxu0 0
    %5149 = vmatpush1.bf16.msra.mxu0 0
    %5150 = vmatprep.subr.bf16.mxu0 0
    %5151 = vmatpush1.bf16.msra.mxu0 0
    %5152 = vmatprep.subr.bf16.mxu0 0
    %5153 = vmatpush1.bf16.msra.mxu0 0
    %5154 = vmatprep.subr.bf16.mxu0 0
    %5155 = vmatpush1.bf16.msra.mxu0 0
    %5156 = vmatprep.subr.bf16.mxu0 0
    %5157 = vmatpush1.bf16.msra.mxu0 0
    %5158 = vmatprep.mubr.bf16.mxu0 0
    %5159 = vmatmul.mubr.bf16.gmra.mrb[0].mxu0 %v3134
    %v5160 = vpop.f32.mrb[0].mxu0
    %v5161 = vadd.f32 %v3458, %v5160
    %v5162 = vpop.f32.mrb[0].mxu0
    %v5163 = vadd.f32 %v3462, %v5162
    %v5164 = vpop.f32.mrb[0].mxu0
    %v5165 = vpop.f32.mrb[0].mxu0
    %5166 = vdwg.mxu0
    %5167 = vmatprep.subr.bf16.mxu0 %v4344
    %5168 = vmatpush1.bf16.msra.mxu0 %v4343
    %5169 = vmatprep.subr.bf16.mxu0 %v4376
    %5170 = vmatpush1.bf16.msra.mxu0 %v4375
    %5171 = vmatprep.subr.bf16.mxu0 %v4408
    %5172 = vmatpush1.bf16.msra.mxu0 %v4407
    %5173 = vmatprep.subr.bf16.mxu0 %v4440
    %5174 = vmatpush1.bf16.msra.mxu0 %v4439
    %5175 = vmatprep.subr.bf16.mxu0 %v4472
    %5176 = vmatpush1.bf16.msra.mxu0 %v4471
    %5177 = vmatprep.subr.bf16.mxu0 %v4504
    %5178 = vmatpush1.bf16.msra.mxu0 %v4503
    %5179 = vmatprep.subr.bf16.mxu0 %v4536
    %5180 = vmatpush1.bf16.msra.mxu0 %v4535
    %5181 = vmatprep.subr.bf16.mxu0 %v4568
    %5182 = vmatpush1.bf16.msra.mxu0 %v4567
    %5183 = vmatprep.subr.bf16.mxu0 0
    %5184 = vmatpush1.bf16.msra.mxu0 0
    %5185 = vmatprep.subr.bf16.mxu0 0
    %5186 = vmatpush1.bf16.msra.mxu0 0
    %5187 = vmatprep.subr.bf16.mxu0 0
    %5188 = vmatpush1.bf16.msra.mxu0 0
    %5189 = vmatprep.subr.bf16.mxu0 0
    %5190 = vmatpush1.bf16.msra.mxu0 0
    %5191 = vmatprep.subr.bf16.mxu0 0
    %5192 = vmatpush1.bf16.msra.mxu0 0
    %5193 = vmatprep.subr.bf16.mxu0 0
    %5194 = vmatpush1.bf16.msra.mxu0 0
    %5195 = vmatprep.subr.bf16.mxu0 0
    %5196 = vmatpush1.bf16.msra.mxu0 0
    %5197 = vmatprep.subr.bf16.mxu0 0
    %5198 = vmatpush1.bf16.msra.mxu0 0
    %5199 = vmatprep.mubr.bf16.mxu0 0
    %5200 = vmatmul.mubr.bf16.gmra.mrb[0].mxu0 %v3134
    %v5201 = vpop.f32.mrb[0].mxu0
    %v5202 = vadd.f32 %v3466, %v5201
    %v5203 = vpop.f32.mrb[0].mxu0
    %v5204 = vadd.f32 %v3470, %v5203
    %v5205 = vpop.f32.mrb[0].mxu0
    %v5206 = vpop.f32.mrb[0].mxu0
    %5207 = vdwg.mxu0
    %5208 = vmatprep.subr.bf16.mxu0 %v4346
    %5209 = vmatpush1.bf16.msra.mxu0 %v4345
    %5210 = vmatprep.subr.bf16.mxu0 %v4378
    %5211 = vmatpush1.bf16.msra.mxu0 %v4377
    %5212 = vmatprep.subr.bf16.mxu0 %v4410
    %5213 = vmatpush1.bf16.msra.mxu0 %v4409
    %5214 = vmatprep.subr.bf16.mxu0 %v4442
    %5215 = vmatpush1.bf16.msra.mxu0 %v4441
    %5216 = vmatprep.subr.bf16.mxu0 %v4474
    %5217 = vmatpush1.bf16.msra.mxu0 %v4473
    %5218 = vmatprep.subr.bf16.mxu0 %v4506
    %5219 = vmatpush1.bf16.msra.mxu0 %v4505
    %5220 = vmatprep.subr.bf16.mxu0 %v4538
    %5221 = vmatpush1.bf16.msra.mxu0 %v4537
    %5222 = vmatprep.subr.bf16.mxu0 %v4570
    %5223 = vmatpush1.bf16.msra.mxu0 %v4569
    %5224 = vmatprep.subr.bf16.mxu0 0
    %5225 = vmatpush1.bf16.msra.mxu0 0
    %5226 = vmatprep.subr.bf16.mxu0 0
    %5227 = vmatpush1.bf16.msra.mxu0 0
    %5228 = vmatprep.subr.bf16.mxu0 0
    %5229 = vmatpush1.bf16.msra.mxu0 0
    %5230 = vmatprep.subr.bf16.mxu0 0
    %5231 = vmatpush1.bf16.msra.mxu0 0
    %5232 = vmatprep.subr.bf16.mxu0 0
    %5233 = vmatpush1.bf16.msra.mxu0 0
    %5234 = vmatprep.subr.bf16.mxu0 0
    %5235 = vmatpush1.bf16.msra.mxu0 0
    %5236 = vmatprep.subr.bf16.mxu0 0
    %5237 = vmatpush1.bf16.msra.mxu0 0
    %5238 = vmatprep.subr.bf16.mxu0 0
    %5239 = vmatpush1.bf16.msra.mxu0 0
    %5240 = vmatprep.mubr.bf16.mxu0 0
    %5241 = vmatmul.mubr.bf16.gmra.mrb[0].mxu0 %v3134
    %v5242 = vpop.f32.mrb[0].mxu0
    %v5243 = vadd.f32 %v3474, %v5242
    %v5244 = vpop.f32.mrb[0].mxu0
    %v5245 = vadd.f32 %v3478, %v5244
    %v5246 = vpop.f32.mrb[0].mxu0
    %v5247 = vpop.f32.mrb[0].mxu0
    %5248 = vdwg.mxu0
    %5249 = vmatprep.subr.bf16.mxu0 %v4348
    %5250 = vmatpush1.bf16.msra.mxu0 %v4347
    %5251 = vmatprep.subr.bf16.mxu0 %v4380
    %5252 = vmatpush1.bf16.msra.mxu0 %v4379
    %5253 = vmatprep.subr.bf16.mxu0 %v4412
    %5254 = vmatpush1.bf16.msra.mxu0 %v4411
    %5255 = vmatprep.subr.bf16.mxu0 %v4444
    %5256 = vmatpush1.bf16.msra.mxu0 %v4443
    %5257 = vmatprep.subr.bf16.mxu0 %v4476
    %5258 = vmatpush1.bf16.msra.mxu0 %v4475
    %5259 = vmatprep.subr.bf16.mxu0 %v4508
    %5260 = vmatpush1.bf16.msra.mxu0 %v4507
    %5261 = vmatprep.subr.bf16.mxu0 %v4540
    %5262 = vmatpush1.bf16.msra.mxu0 %v4539
    %5263 = vmatprep.subr.bf16.mxu0 %v4572
    %5264 = vmatpush1.bf16.msra.mxu0 %v4571
    %5265 = vmatprep.subr.bf16.mxu0 0
    %5266 = vmatpush1.bf16.msra.mxu0 0
    %5267 = vmatprep.subr.bf16.mxu0 0
    %5268 = vmatpush1.bf16.msra.mxu0 0
    %5269 = vmatprep.subr.bf16.mxu0 0
    %5270 = vmatpush1.bf16.msra.mxu0 0
    %5271 = vmatprep.subr.bf16.mxu0 0
    %5272 = vmatpush1.bf16.msra.mxu0 0
    %5273 = vmatprep.subr.bf16.mxu0 0
    %5274 = vmatpush1.bf16.msra.mxu0 0
    %5275 = vmatprep.subr.bf16.mxu0 0
    %5276 = vmatpush1.bf16.msra.mxu0 0
    %5277 = vmatprep.subr.bf16.mxu0 0
    %5278 = vmatpush1.bf16.msra.mxu0 0
    %5279 = vmatprep.subr.bf16.mxu0 0
    %5280 = vmatpush1.bf16.msra.mxu0 0
    %5281 = vmatprep.mubr.bf16.mxu0 0
    %5282 = vmatmul.mubr.bf16.gmra.mrb[0].mxu0 %v3134
    %v5283 = vpop.f32.mrb[0].mxu0
    %v5284 = vadd.f32 %v3482, %v5283
    %v5285 = vpop.f32.mrb[0].mxu0
    %v5286 = vadd.f32 %v3486, %v5285
    %v5287 = vpop.f32.mrb[0].mxu0
    %v5288 = vpop.f32.mrb[0].mxu0
    %5289 = vdwg.mxu0
    %5290 = vmatprep.subr.bf16.mxu0 %v4350
    %5291 = vmatpush1.bf16.msra.mxu0 %v4349
    %5292 = vmatprep.subr.bf16.mxu0 %v4382
    %5293 = vmatpush1.bf16.msra.mxu0 %v4381
    %5294 = vmatprep.subr.bf16.mxu0 %v4414
    %5295 = vmatpush1.bf16.msra.mxu0 %v4413
    %5296 = vmatprep.subr.bf16.mxu0 %v4446
    %5297 = vmatpush1.bf16.msra.mxu0 %v4445
    %5298 = vmatprep.subr.bf16.mxu0 %v4478
    %5299 = vmatpush1.bf16.msra.mxu0 %v4477
    %5300 = vmatprep.subr.bf16.mxu0 %v4510
    %5301 = vmatpush1.bf16.msra.mxu0 %v4509
    %5302 = vmatprep.subr.bf16.mxu0 %v4542
    %5303 = vmatpush1.bf16.msra.mxu0 %v4541
    %5304 = vmatprep.subr.bf16.mxu0 %v4574
    %5305 = vmatpush1.bf16.msra.mxu0 %v4573
    %5306 = vmatprep.subr.bf16.mxu0 0
    %5307 = vmatpush1.bf16.msra.mxu0 0
    %5308 = vmatprep.subr.bf16.mxu0 0
    %5309 = vmatpush1.bf16.msra.mxu0 0
    %5310 = vmatprep.subr.bf16.mxu0 0
    %5311 = vmatpush1.bf16.msra.mxu0 0
    %5312 = vmatprep.subr.bf16.mxu0 0
    %5313 = vmatpush1.bf16.msra.mxu0 0
    %5314 = vmatprep.subr.bf16.mxu0 0
    %5315 = vmatpush1.bf16.msra.mxu0 0
    %5316 = vmatprep.subr.bf16.mxu0 0
    %5317 = vmatpush1.bf16.msra.mxu0 0
    %5318 = vmatprep.subr.bf16.mxu0 0
    %5319 = vmatpush1.bf16.msra.mxu0 0
    %5320 = vmatprep.subr.bf16.mxu0 0
    %5321 = vmatpush1.bf16.msra.mxu0 0
    %5322 = vmatprep.mubr.bf16.mxu0 0
    %5323 = vmatmul.mubr.bf16.gmra.mrb[0].mxu0 %v3134
    %v5324 = vpop.f32.mrb[0].mxu0
    %v5325 = vadd.f32 %v3490, %v5324
    %v5326 = vpop.f32.mrb[0].mxu0
    %v5327 = vadd.f32 %v3494, %v5326
    %v5328 = vpop.f32.mrb[0].mxu0
    %v5329 = vpop.f32.mrb[0].mxu0
    %5330 = vdwg.mxu0
    %5331 = vmatprep.subr.bf16.mxu0 %v4352
    %5332 = vmatpush1.bf16.msra.mxu0 %v4351
    %5333 = vmatprep.subr.bf16.mxu0 %v4384
    %5334 = vmatpush1.bf16.msra.mxu0 %v4383
    %5335 = vmatprep.subr.bf16.mxu0 %v4416
    %5336 = vmatpush1.bf16.msra.mxu0 %v4415
    %5337 = vmatprep.subr.bf16.mxu0 %v4448
    %5338 = vmatpush1.bf16.msra.mxu0 %v4447
    %5339 = vmatprep.subr.bf16.mxu0 %v4480
    %5340 = vmatpush1.bf16.msra.mxu0 %v4479
    %5341 = vmatprep.subr.bf16.mxu0 %v4512
    %5342 = vmatpush1.bf16.msra.mxu0 %v4511
    %5343 = vmatprep.subr.bf16.mxu0 %v4544
    %5344 = vmatpush1.bf16.msra.mxu0 %v4543
    %5345 = vmatprep.subr.bf16.mxu0 %v4576
    %5346 = vmatpush1.bf16.msra.mxu0 %v4575
    %5347 = vmatprep.subr.bf16.mxu0 0
    %5348 = vmatpush1.bf16.msra.mxu0 0
    %5349 = vmatprep.subr.bf16.mxu0 0
    %5350 = vmatpush1.bf16.msra.mxu0 0
    %5351 = vmatprep.subr.bf16.mxu0 0
    %5352 = vmatpush1.bf16.msra.mxu0 0
    %5353 = vmatprep.subr.bf16.mxu0 0
    %5354 = vmatpush1.bf16.msra.mxu0 0
    %5355 = vmatprep.subr.bf16.mxu0 0
    %5356 = vmatpush1.bf16.msra.mxu0 0
    %5357 = vmatprep.subr.bf16.mxu0 0
    %5358 = vmatpush1.bf16.msra.mxu0 0
    %5359 = vmatprep.subr.bf16.mxu0 0
    %5360 = vmatpush1.bf16.msra.mxu0 0
    %5361 = vmatprep.subr.bf16.mxu0 0
    %5362 = vmatpush1.bf16.msra.mxu0 0
    %5363 = vmatprep.mubr.bf16.mxu0 0
    %5364 = vmatmul.mubr.bf16.gmra.mrb[0].mxu0 %v3134
    %v5365 = vpop.f32.mrb[0].mxu0
    %v5366 = vadd.f32 %v3498, %v5365
    %v5367 = vpop.f32.mrb[0].mxu0
    %v5368 = vadd.f32 %v3502, %v5367
    %v5369 = vpop.f32.mrb[0].mxu0
    %v5370 = vpop.f32.mrb[0].mxu0
    %5371 = vdwg.mxu0
    %5372 = vmatprep.subr.bf16.mxu0 %v4354
    %5373 = vmatpush1.bf16.msra.mxu0 %v4353
    %5374 = vmatprep.subr.bf16.mxu0 %v4386
    %5375 = vmatpush1.bf16.msra.mxu0 %v4385
    %5376 = vmatprep.subr.bf16.mxu0 %v4418
    %5377 = vmatpush1.bf16.msra.mxu0 %v4417
    %5378 = vmatprep.subr.bf16.mxu0 %v4450
    %5379 = vmatpush1.bf16.msra.mxu0 %v4449
    %5380 = vmatprep.subr.bf16.mxu0 %v4482
    %5381 = vmatpush1.bf16.msra.mxu0 %v4481
    %5382 = vmatprep.subr.bf16.mxu0 %v4514
    %5383 = vmatpush1.bf16.msra.mxu0 %v4513
    %5384 = vmatprep.subr.bf16.mxu0 %v4546
    %5385 = vmatpush1.bf16.msra.mxu0 %v4545
    %5386 = vmatprep.subr.bf16.mxu0 %v4578
    %5387 = vmatpush1.bf16.msra.mxu0 %v4577
    %5388 = vmatprep.subr.bf16.mxu0 0
    %5389 = vmatpush1.bf16.msra.mxu0 0
    %5390 = vmatprep.subr.bf16.mxu0 0
    %5391 = vmatpush1.bf16.msra.mxu0 0
    %5392 = vmatprep.subr.bf16.mxu0 0
    %5393 = vmatpush1.bf16.msra.mxu0 0
    %5394 = vmatprep.subr.bf16.mxu0 0
    %5395 = vmatpush1.bf16.msra.mxu0 0
    %5396 = vmatprep.subr.bf16.mxu0 0
    %5397 = vmatpush1.bf16.msra.mxu0 0
    %5398 = vmatprep.subr.bf16.mxu0 0
    %5399 = vmatpush1.bf16.msra.mxu0 0
    %5400 = vmatprep.subr.bf16.mxu0 0
    %5401 = vmatpush1.bf16.msra.mxu0 0
    %5402 = vmatprep.subr.bf16.mxu0 0
    %5403 = vmatpush1.bf16.msra.mxu0 0
    %5404 = vmatprep.mubr.bf16.mxu0 0
    %5405 = vmatmul.mubr.bf16.gmra.mrb[0].mxu0 %v3134
    %v5406 = vpop.f32.mrb[0].mxu0
    %v5407 = vadd.f32 %v3506, %v5406
    %v5408 = vpop.f32.mrb[0].mxu0
    %v5409 = vadd.f32 %v3510, %v5408
    %v5410 = vpop.f32.mrb[0].mxu0
    %v5411 = vpop.f32.mrb[0].mxu0
    %5412 = vdwg.mxu0
    %5413 = vmatprep.subr.bf16.mxu0 %v4356
    %5414 = vmatpush1.bf16.msra.mxu0 %v4355
    %5415 = vmatprep.subr.bf16.mxu0 %v4388
    %5416 = vmatpush1.bf16.msra.mxu0 %v4387
    %5417 = vmatprep.subr.bf16.mxu0 %v4420
    %5418 = vmatpush1.bf16.msra.mxu0 %v4419
    %5419 = vmatprep.subr.bf16.mxu0 %v4452
    %5420 = vmatpush1.bf16.msra.mxu0 %v4451
    %5421 = vmatprep.subr.bf16.mxu0 %v4484
    %5422 = vmatpush1.bf16.msra.mxu0 %v4483
    %5423 = vmatprep.subr.bf16.mxu0 %v4516
    %5424 = vmatpush1.bf16.msra.mxu0 %v4515
    %5425 = vmatprep.subr.bf16.mxu0 %v4548
    %5426 = vmatpush1.bf16.msra.mxu0 %v4547
    %5427 = vmatprep.subr.bf16.mxu0 %v4580
    %5428 = vmatpush1.bf16.msra.mxu0 %v4579
    %5429 = vmatprep.subr.bf16.mxu0 0
    %5430 = vmatpush1.bf16.msra.mxu0 0
    %5431 = vmatprep.subr.bf16.mxu0 0
    %5432 = vmatpush1.bf16.msra.mxu0 0
    %5433 = vmatprep.subr.bf16.mxu0 0
    %5434 = vmatpush1.bf16.msra.mxu0 0
    %5435 = vmatprep.subr.bf16.mxu0 0
    %5436 = vmatpush1.bf16.msra.mxu0 0
    %5437 = vmatprep.subr.bf16.mxu0 0
    %5438 = vmatpush1.bf16.msra.mxu0 0
    %5439 = vmatprep.subr.bf16.mxu0 0
    %5440 = vmatpush1.bf16.msra.mxu0 0
    %5441 = vmatprep.subr.bf16.mxu0 0
    %5442 = vmatpush1.bf16.msra.mxu0 0
    %5443 = vmatprep.subr.bf16.mxu0 0
    %5444 = vmatpush1.bf16.msra.mxu0 0
    %5445 = vmatprep.mubr.bf16.mxu0 0
    %5446 = vmatmul.mubr.bf16.gmra.mrb[0].mxu0 %v3134
    %v5447 = vpop.f32.mrb[0].mxu0
    %v5448 = vadd.f32 %v3514, %v5447
    %v5449 = vpop.f32.mrb[0].mxu0
    %v5450 = vadd.f32 %v3518, %v5449
    %v5451 = vpop.f32.mrb[0].mxu0
    %v5452 = vpop.f32.mrb[0].mxu0
    %5453 = vdwg.mxu0
    %5454 = vmatprep.subr.bf16.mxu0 %v4358
    %5455 = vmatpush1.bf16.msra.mxu0 %v4357
    %5456 = vmatprep.subr.bf16.mxu0 %v4390
    %5457 = vmatpush1.bf16.msra.mxu0 %v4389
    %5458 = vmatprep.subr.bf16.mxu0 %v4422
    %5459 = vmatpush1.bf16.msra.mxu0 %v4421
    %5460 = vmatprep.subr.bf16.mxu0 %v4454
    %5461 = vmatpush1.bf16.msra.mxu0 %v4453
    %5462 = vmatprep.subr.bf16.mxu0 %v4486
    %5463 = vmatpush1.bf16.msra.mxu0 %v4485
    %5464 = vmatprep.subr.bf16.mxu0 %v4518
    %5465 = vmatpush1.bf16.msra.mxu0 %v4517
    %5466 = vmatprep.subr.bf16.mxu0 %v4550
    %5467 = vmatpush1.bf16.msra.mxu0 %v4549
    %5468 = vmatprep.subr.bf16.mxu0 %v4582
    %5469 = vmatpush1.bf16.msra.mxu0 %v4581
    %5470 = vmatprep.subr.bf16.mxu0 0
    %5471 = vmatpush1.bf16.msra.mxu0 0
    %5472 = vmatprep.subr.bf16.mxu0 0
    %5473 = vmatpush1.bf16.msra.mxu0 0
    %5474 = vmatprep.subr.bf16.mxu0 0
    %5475 = vmatpush1.bf16.msra.mxu0 0
    %5476 = vmatprep.subr.bf16.mxu0 0
    %5477 = vmatpush1.bf16.msra.mxu0 0
    %5478 = vmatprep.subr.bf16.mxu0 0
    %5479 = vmatpush1.bf16.msra.mxu0 0
    %5480 = vmatprep.subr.bf16.mxu0 0
    %5481 = vmatpush1.bf16.msra.mxu0 0
    %5482 = vmatprep.subr.bf16.mxu0 0
    %5483 = vmatpush1.bf16.msra.mxu0 0
    %5484 = vmatprep.subr.bf16.mxu0 0
    %5485 = vmatpush1.bf16.msra.mxu0 0
    %5486 = vmatprep.mubr.bf16.mxu0 0
    %5487 = vmatmul.mubr.bf16.gmra.mrb[0].mxu0 %v3134
    %v5488 = vpop.f32.mrb[0].mxu0
    %v5489 = vadd.f32 %v3522, %v5488
    %v5490 = vpop.f32.mrb[0].mxu0
    %v5491 = vadd.f32 %v3526, %v5490
    %v5492 = vpop.f32.mrb[0].mxu0
    %v5493 = vpop.f32.mrb[0].mxu0
    %5494 = vdwg.mxu0
    %v5527 = vcombine.low %v4874, %v4876
    %v5528 = vcombine.high %v4874, %v4876
    %v5529 = vcombine.low %v4915, %v4917
    %v5530 = vcombine.high %v4915, %v4917
    %v5532 = vunpack.c.l.s4 1983009808
    %v5533 = vunpack.c.0.s8 %v5532
    %v5534 = vlaneseq
    %v5535 = vshrl.u32 %v5534, 7
    %v5536 = vsub.s32 %v5533, %v5535
    %v5537 = vrot.slane %v5527, %v5536
    %v5539 = vunpack.c.l.s4 1983009808
    %v5540 = vunpack.c.0.s8 %v5539
    %v5541 = vlaneseq
    %v5542 = vshrl.u32 %v5541, 7
    %v5543 = vsub.s32 %v5540, %v5542
    %v5544 = vrot.slane %v5528, %v5543
    %v5546 = vunpack.c.l.s4 1983009808
    %v5547 = vunpack.c.0.s8 %v5546
    %v5548 = vlaneseq
    %v5549 = vshrl.u32 %v5548, 7
    %v5550 = vsub.s32 %v5547, %v5549
    %v5551 = vrot.slane %v5529, %v5550
    %v5553 = vunpack.c.l.s4 1983009808
    %v5554 = vunpack.c.0.s8 %v5553
    %v5555 = vlaneseq
    %v5556 = vshrl.u32 %v5555, 7
    %v5557 = vsub.s32 %v5554, %v5556
    %v5558 = vrot.slane %v5530, %v5557
    %v5559 = vcombine.low %v5537, %v5551
    %v5560 = vcombine.high %v5537, %v5551
    %v5561 = vcombine.low %v5544, %v5558
    %v5562 = vcombine.high %v5544, %v5558
    %v5563 = vcombine.low %v4956, %v4958
    %v5564 = vcombine.high %v4956, %v4958
    %v5565 = vcombine.low %v4997, %v4999
    %v5566 = vcombine.high %v4997, %v4999
    %v5568 = vunpack.c.l.s4 1983009808
    %v5569 = vunpack.c.0.s8 %v5568
    %v5570 = vlaneseq
    %v5571 = vshrl.u32 %v5570, 7
    %v5572 = vsub.s32 %v5569, %v5571
    %v5573 = vrot.slane %v5563, %v5572
    %v5575 = vunpack.c.l.s4 1983009808
    %v5576 = vunpack.c.0.s8 %v5575
    %v5577 = vlaneseq
    %v5578 = vshrl.u32 %v5577, 7
    %v5579 = vsub.s32 %v5576, %v5578
    %v5580 = vrot.slane %v5564, %v5579
    %v5582 = vunpack.c.l.s4 1983009808
    %v5583 = vunpack.c.0.s8 %v5582
    %v5584 = vlaneseq
    %v5585 = vshrl.u32 %v5584, 7
    %v5586 = vsub.s32 %v5583, %v5585
    %v5587 = vrot.slane %v5565, %v5586
    %v5589 = vunpack.c.l.s4 1983009808
    %v5590 = vunpack.c.0.s8 %v5589
    %v5591 = vlaneseq
    %v5592 = vshrl.u32 %v5591, 7
    %v5593 = vsub.s32 %v5590, %v5592
    %v5594 = vrot.slane %v5566, %v5593
    %v5595 = vcombine.low %v5573, %v5587
    %v5596 = vcombine.high %v5573, %v5587
    %v5597 = vcombine.low %v5580, %v5594
    %v5598 = vcombine.high %v5580, %v5594
    %v5599 = vcombine.low %v5038, %v5040
    %v5600 = vcombine.high %v5038, %v5040
    %v5601 = vcombine.low %v5079, %v5081
    %v5602 = vcombine.high %v5079, %v5081
    %v5604 = vunpack.c.l.s4 1983009808
    %v5605 = vunpack.c.0.s8 %v5604
    %v5606 = vlaneseq
    %v5607 = vshrl.u32 %v5606, 7
    %v5608 = vsub.s32 %v5605, %v5607
    %v5609 = vrot.slane %v5599, %v5608
    %v5611 = vunpack.c.l.s4 1983009808
    %v5612 = vunpack.c.0.s8 %v5611
    %v5613 = vlaneseq
    %v5614 = vshrl.u32 %v5613, 7
    %v5615 = vsub.s32 %v5612, %v5614
    %v5616 = vrot.slane %v5600, %v5615
    %v5618 = vunpack.c.l.s4 1983009808
    %v5619 = vunpack.c.0.s8 %v5618
    %v5620 = vlaneseq
    %v5621 = vshrl.u32 %v5620, 7
    %v5622 = vsub.s32 %v5619, %v5621
    %v5623 = vrot.slane %v5601, %v5622
    %v5625 = vunpack.c.l.s4 1983009808
    %v5626 = vunpack.c.0.s8 %v5625
    %v5627 = vlaneseq
    %v5628 = vshrl.u32 %v5627, 7
    %v5629 = vsub.s32 %v5626, %v5628
    %v5630 = vrot.slane %v5602, %v5629
    %v5631 = vcombine.low %v5609, %v5623
    %v5632 = vcombine.high %v5609, %v5623
    %v5633 = vcombine.low %v5616, %v5630
    %v5634 = vcombine.high %v5616, %v5630
    %v5635 = vcombine.low %v5120, %v5122
    %v5636 = vcombine.high %v5120, %v5122
    %v5637 = vcombine.low %v5161, %v5163
    %v5638 = vcombine.high %v5161, %v5163
    %v5640 = vunpack.c.l.s4 1983009808
    %v5641 = vunpack.c.0.s8 %v5640
    %v5642 = vlaneseq
    %v5643 = vshrl.u32 %v5642, 7
    %v5644 = vsub.s32 %v5641, %v5643
    %v5645 = vrot.slane %v5635, %v5644
    %v5647 = vunpack.c.l.s4 1983009808
    %v5648 = vunpack.c.0.s8 %v5647
    %v5649 = vlaneseq
    %v5650 = vshrl.u32 %v5649, 7
    %v5651 = vsub.s32 %v5648, %v5650
    %v5652 = vrot.slane %v5636, %v5651
    %v5654 = vunpack.c.l.s4 1983009808
    %v5655 = vunpack.c.0.s8 %v5654
    %v5656 = vlaneseq
    %v5657 = vshrl.u32 %v5656, 7
    %v5658 = vsub.s32 %v5655, %v5657
    %v5659 = vrot.slane %v5637, %v5658
    %v5661 = vunpack.c.l.s4 1983009808
    %v5662 = vunpack.c.0.s8 %v5661
    %v5663 = vlaneseq
    %v5664 = vshrl.u32 %v5663, 7
    %v5665 = vsub.s32 %v5662, %v5664
    %v5666 = vrot.slane %v5638, %v5665
    %v5667 = vcombine.low %v5645, %v5659
    %v5668 = vcombine.high %v5645, %v5659
    %v5669 = vcombine.low %v5652, %v5666
    %v5670 = vcombine.high %v5652, %v5666
    %v5671 = vcombine.low %v5202, %v5204
    %v5672 = vcombine.high %v5202, %v5204
    %v5673 = vcombine.low %v5243, %v5245
    %v5674 = vcombine.high %v5243, %v5245
    %v5676 = vunpack.c.l.s4 1983009808
    %v5677 = vunpack.c.0.s8 %v5676
    %v5678 = vlaneseq
    %v5679 = vshrl.u32 %v5678, 7
    %v5680 = vsub.s32 %v5677, %v5679
    %v5681 = vrot.slane %v5671, %v5680
    %v5683 = vunpack.c.l.s4 1983009808
    %v5684 = vunpack.c.0.s8 %v5683
    %v5685 = vlaneseq
    %v5686 = vshrl.u32 %v5685, 7
    %v5687 = vsub.s32 %v5684, %v5686
    %v5688 = vrot.slane %v5672, %v5687
    %v5690 = vunpack.c.l.s4 1983009808
    %v5691 = vunpack.c.0.s8 %v5690
    %v5692 = vlaneseq
    %v5693 = vshrl.u32 %v5692, 7
    %v5694 = vsub.s32 %v5691, %v5693
    %v5695 = vrot.slane %v5673, %v5694
    %v5697 = vunpack.c.l.s4 1983009808
    %v5698 = vunpack.c.0.s8 %v5697
    %v5699 = vlaneseq
    %v5700 = vshrl.u32 %v5699, 7
    %v5701 = vsub.s32 %v5698, %v5700
    %v5702 = vrot.slane %v5674, %v5701
    %v5703 = vcombine.low %v5681, %v5695
    %v5704 = vcombine.high %v5681, %v5695
    %v5705 = vcombine.low %v5688, %v5702
    %v5706 = vcombine.high %v5688, %v5702
    %v5707 = vcombine.low %v5284, %v5286
    %v5708 = vcombine.high %v5284, %v5286
    %v5709 = vcombine.low %v5325, %v5327
    %v5710 = vcombine.high %v5325, %v5327
    %v5712 = vunpack.c.l.s4 1983009808
    %v5713 = vunpack.c.0.s8 %v5712
    %v5714 = vlaneseq
    %v5715 = vshrl.u32 %v5714, 7
    %v5716 = vsub.s32 %v5713, %v5715
    %v5717 = vrot.slane %v5707, %v5716
    %v5719 = vunpack.c.l.s4 1983009808
    %v5720 = vunpack.c.0.s8 %v5719
    %v5721 = vlaneseq
    %v5722 = vshrl.u32 %v5721, 7
    %v5723 = vsub.s32 %v5720, %v5722
    %v5724 = vrot.slane %v5708, %v5723
    %v5726 = vunpack.c.l.s4 1983009808
    %v5727 = vunpack.c.0.s8 %v5726
    %v5728 = vlaneseq
    %v5729 = vshrl.u32 %v5728, 7
    %v5730 = vsub.s32 %v5727, %v5729
    %v5731 = vrot.slane %v5709, %v5730
    %v5733 = vunpack.c.l.s4 1983009808
    %v5734 = vunpack.c.0.s8 %v5733
    %v5735 = vlaneseq
    %v5736 = vshrl.u32 %v5735, 7
    %v5737 = vsub.s32 %v5734, %v5736
    %v5738 = vrot.slane %v5710, %v5737
    %v5739 = vcombine.low %v5717, %v5731
    %v5740 = vcombine.high %v5717, %v5731
    %v5741 = vcombine.low %v5724, %v5738
    %v5742 = vcombine.high %v5724, %v5738
    %v5743 = vcombine.low %v5366, %v5368
    %v5744 = vcombine.high %v5366, %v5368
    %v5745 = vcombine.low %v5407, %v5409
    %v5746 = vcombine.high %v5407, %v5409
    %v5748 = vunpack.c.l.s4 1983009808
    %v5749 = vunpack.c.0.s8 %v5748
    %v5750 = vlaneseq
    %v5751 = vshrl.u32 %v5750, 7
    %v5752 = vsub.s32 %v5749, %v5751
    %v5753 = vrot.slane %v5743, %v5752
    %v5755 = vunpack.c.l.s4 1983009808
    %v5756 = vunpack.c.0.s8 %v5755
    %v5757 = vlaneseq
    %v5758 = vshrl.u32 %v5757, 7
    %v5759 = vsub.s32 %v5756, %v5758
    %v5760 = vrot.slane %v5744, %v5759
    %v5762 = vunpack.c.l.s4 1983009808
    %v5763 = vunpack.c.0.s8 %v5762
    %v5764 = vlaneseq
    %v5765 = vshrl.u32 %v5764, 7
    %v5766 = vsub.s32 %v5763, %v5765
    %v5767 = vrot.slane %v5745, %v5766
    %v5769 = vunpack.c.l.s4 1983009808
    %v5770 = vunpack.c.0.s8 %v5769
    %v5771 = vlaneseq
    %v5772 = vshrl.u32 %v5771, 7
    %v5773 = vsub.s32 %v5770, %v5772
    %v5774 = vrot.slane %v5746, %v5773
    %v5775 = vcombine.low %v5753, %v5767
    %v5776 = vcombine.high %v5753, %v5767
    %v5777 = vcombine.low %v5760, %v5774
    %v5778 = vcombine.high %v5760, %v5774
    %v5779 = vcombine.low %v5448, %v5450
    %v5780 = vcombine.high %v5448, %v5450
    %v5781 = vcombine.low %v5489, %v5491
    %v5782 = vcombine.high %v5489, %v5491
    %v5784 = vunpack.c.l.s4 1983009808
    %v5785 = vunpack.c.0.s8 %v5784
    %v5786 = vlaneseq
    %v5787 = vshrl.u32 %v5786, 7
    %v5788 = vsub.s32 %v5785, %v5787
    %v5789 = vrot.slane %v5779, %v5788
    %v5791 = vunpack.c.l.s4 1983009808
    %v5792 = vunpack.c.0.s8 %v5791
    %v5793 = vlaneseq
    %v5794 = vshrl.u32 %v5793, 7
    %v5795 = vsub.s32 %v5792, %v5794
    %v5796 = vrot.slane %v5780, %v5795
    %v5798 = vunpack.c.l.s4 1983009808
    %v5799 = vunpack.c.0.s8 %v5798
    %v5800 = vlaneseq
    %v5801 = vshrl.u32 %v5800, 7
    %v5802 = vsub.s32 %v5799, %v5801
    %v5803 = vrot.slane %v5781, %v5802
    %v5805 = vunpack.c.l.s4 1983009808
    %v5806 = vunpack.c.0.s8 %v5805
    %v5807 = vlaneseq
    %v5808 = vshrl.u32 %v5807, 7
    %v5809 = vsub.s32 %v5806, %v5808
    %v5810 = vrot.slane %v5782, %v5809
    %v5811 = vcombine.low %v5789, %v5803
    %v5812 = vcombine.high %v5789, %v5803
    %v5813 = vcombine.low %v5796, %v5810
    %v5814 = vcombine.high %v5796, %v5810
    %5847 = vst [vmem:[#allocation2] sm:$0xff] %v5559
    %5848 = vst [vmem:[#allocation2 + $0x8] sm:$0xff] %v5595
    %5849 = vst [vmem:[#allocation2 + $0x10] sm:$0xff] %v5631
    %5850 = vst [vmem:[#allocation2 + $0x18] sm:$0xff] %v5667
    %5851 = vst [vmem:[#allocation2 + $0x20] sm:$0xff] %v5703
    %5852 = vst [vmem:[#allocation2 + $0x28] sm:$0xff] %v5739
    %5853 = vst [vmem:[#allocation2 + $0x30] sm:$0xff] %v5775
    %5854 = vst [vmem:[#allocation2 + $0x38] sm:$0xff] %v5811
    %5855 = vst [vmem:[#allocation2 + $0x40] sm:$0xff] %v5560
    %5856 = vst [vmem:[#allocation2 + $0x48] sm:$0xff] %v5596
    %5857 = vst [vmem:[#allocation2 + $0x50] sm:$0xff] %v5632
    %5858 = vst [vmem:[#allocation2 + $0x58] sm:$0xff] %v5668
    %5859 = vst [vmem:[#allocation2 + $0x60] sm:$0xff] %v5704
    %5860 = vst [vmem:[#allocation2 + $0x68] sm:$0xff] %v5740
    %5861 = vst [vmem:[#allocation2 + $0x70] sm:$0xff] %v5776
    %5862 = vst [vmem:[#allocation2 + $0x78] sm:$0xff] %v5812
    %5863 = vst [vmem:[#allocation2 + $0x80] sm:$0xff] %v5561
    %5864 = vst [vmem:[#allocation2 + $0x88] sm:$0xff] %v5597
    %5865 = vst [vmem:[#allocation2 + $0x90] sm:$0xff] %v5633
    %5866 = vst [vmem:[#allocation2 + $0x98] sm:$0xff] %v5669
    %5867 = vst [vmem:[#allocation2 + $0xa0] sm:$0xff] %v5705
    %5868 = vst [vmem:[#allocation2 + $0xa8] sm:$0xff] %v5741
    %5869 = vst [vmem:[#allocation2 + $0xb0] sm:$0xff] %v5777
    %5870 = vst [vmem:[#allocation2 + $0xb8] sm:$0xff] %v5813
    %5871 = vst [vmem:[#allocation2 + $0xc0] sm:$0xff] %v5562
    %5872 = vst [vmem:[#allocation2 + $0xc8] sm:$0xff] %v5598
    %5873 = vst [vmem:[#allocation2 + $0xd0] sm:$0xff] %v5634
    %5874 = vst [vmem:[#allocation2 + $0xd8] sm:$0xff] %v5670
    %5875 = vst [vmem:[#allocation2 + $0xe0] sm:$0xff] %v5706
    %5876 = vst [vmem:[#allocation2 + $0xe8] sm:$0xff] %v5742
    %5877 = vst [vmem:[#allocation2 + $0xf0] sm:$0xff] %v5778
    %5878 = vst [vmem:[#allocation2 + $0xf8] sm:$0xff] %v5814
    // Predicated region
    $region22: #{autoencoder_forward.1} parent=1 // pred_check
      _
    $region23: #{autoencoder_forward.1} parent=1 // pred_check_branch
      %5880 = sbr.rel (0) target = $region25
    $region24: #{autoencoder_forward.1} parent=1 // pred_region
      %s5882 = ssub.s32 4096, 1024
      %5883 = vsyncadd [#allocation3], %s5882
      %s5884 = sshll.u32 [#allocation2], 4
      %s5885 = int_to_ptr.vmem [resolvable:$true] %s5884
      %5890 = dma.vmem_to_hbm [thread:$0]  %s5885, 1024, %s5, [#allocation3], 1024, 1024, 64
    $region25: #{autoencoder_forward.1} parent=1 // pred_fallthru
      _
    // Predicated region
    $region26: #{autoencoder_forward.1} parent=1 // pred_check
      _
    $region27: #{autoencoder_forward.1} parent=1 // pred_check_branch
      %5892 = sbr.rel (0) target = $region29
    $region28: #{autoencoder_forward.1} parent=1 // pred_region
      %5893 = dma.done [#allocation3], 4096
    $region29: #{autoencoder_forward.1} parent=1 // pred_fallthru
      _
    %5894 = vsyncpa [#allocation3], 1

</llo_original>
